<compile_context>
chip_gen: v7x
topology: tpu7x:2x2x1
jax: 0.10.0
libtpu: 0.0.40
codegen_flags: <defaults>
</compile_context>

<pallas_src>
import numpy as np
import jax
import jax.numpy as jnp
from jax import lax
from jax.experimental import pallas as pl
from jax.experimental.pallas import tpu as pltpu

# ---------------- EEGNet static geometry (fixed by the PyTorch module) -------
B = 2               # batch
H = 2               # EEG electrode rows (depthwise kernel (2,1) requires H == 2)
W = 750             # time samples
WPAD = 768          # time padded to a lane multiple (zeros excluded by pool)
K1, PAD1 = 51, 25   # firstConv kernel / padding along time
K3, PAD3 = 15, 7    # separableConv kernel / padding along time
C1, C2 = 16, 32
KPAD = 128          # im2col depth 2*K1 = 102 padded to 128
W2 = (W - 4) // 4 + 1      # 187 after AvgPool(1,4)
POOLW = 256                # W2 + 2*PAD3 = 201 padded to a lane multiple
W2P = 192                  # separable-conv output width padded from 187
W3 = (W2 - 8) // 8 + 1     # 23 after AvgPool(1,8)
NFEAT = C2 * W3            # 736 (== Linear in_features)
NOUT = 2
EPS = 1e-5


# ------------------------------- Pallas kernel -------------------------------
def eegnet_kernel(xs_ref, wfd_ref, bfd_ref, p1_ref, w3s_ref, bsep_ref,
                  wcls_ref, bcls_ref, out_ref):
    # Stage A: firstConv + BN1 + depthwise + BN2 fused -> one MXU matmul + ReLU
    #   (32, 128) @ (128, 768) -> (32, 768)
    y2 = jnp.dot(wfd_ref[...], xs_ref[...], preferred_element_type=jnp.float32)
    y2 = jnp.maximum(y2 + bfd_ref[...], 0.0)

    # Stage B: AvgPool(1,4) with the separable-conv zero padding folded into
    # the constant pooling matrix: (32, 768) @ (768, 256) -> (32, 256)
    y2p = jnp.dot(y2.astype(jnp.bfloat16), p1_ref[...],
                  preferred_element_type=jnp.float32)
    y2p = y2p.astype(jnp.bfloat16)

    # Stage C: separableConv -- 15 taps, unrolled accumulation into an f32
    # accumulator with a batch-invariant (32, 32) per-tap weight (BN3 scale
    # folded in).  No shifted-stack temp is materialized.
    w3 = w3s_ref[...]
    acc = jnp.zeros((C2, W2P), jnp.float32)
    for k in range(K3):
        acc = acc + jnp.dot(w3[k], y2p[:, k:k + W2P],
                            preferred_element_type=jnp.float32)
    y3 = jnp.maximum(acc + bsep_ref[...], 0.0)                   # (32, 192)

    # Stage D: AvgPool(1,8) + flatten + Linear fused into wcls (pool folded
    # into the classifier weight in the wrapper): VPU multiply + reductions.
    cols = [jnp.sum(y3 * wcls_ref[j], axis=1, keepdims=True)     # (32, 1)
            for j in range(NOUT)]
    sc = jnp.concatenate(cols, axis=1)                           # (32, NOUT)
    row = jnp.sum(sc, axis=0, keepdims=True)                     # (1, NOUT)
    out_ref[...] = (row + bcls_ref[...])[None]                   # (1, 1, NOUT)


# ------------------------------- glue / wrapper -------------------------------
def fold_bn(bn):
    gamma, beta, mean, var = bn
    scale = gamma / jnp.sqrt(var + EPS)
    shift = beta - mean * scale
    return scale, shift


def eegnet_forward(params, x):
    # x: (B, 1, 2, 750) float32, PyTorch NCHW layout
    bsz = x.shape[0]

    # ---- per-sample im2col: row (r*K1 + k), col t = xpad[b, r, t+k] ----
    xpad = jnp.pad(x[:, 0, :, :], ((0, 0), (0, 0), (PAD1, PAD1)))     # (B, 2, 800)
    idx = jnp.arange(K1)[:, None] + jnp.arange(W)[None, :]            # (K1, W)
    xs = xpad[:, :, idx].reshape(bsz, 2 * K1, W)                      # (B, 102, 750)
    xs = jnp.pad(xs, ((0, 0), (0, KPAD - 2 * K1), (0, WPAD - W)))     # (B, 128, 768)
    xs = xs.reshape(bsz * KPAD, WPAD).astype(jnp.bfloat16)

    # ---- stage-A fused weight: firstConv * BN1 * depthwise * BN2 (batch-inv) ----
    s1, b1 = fold_bn(params['bn1'])                 # (16,)
    s2, b2 = fold_bn(params['bn2'])                 # (32,)
    w1 = params['w1'][:, 0, 0, :]                   # (16, 51)
    w2 = params['w2'][:, 0, :, 0]                   # (32, 2)
    cidx = jnp.arange(C2) // 2                      # depthwise input channel per out chan
    wfd = (s2[:, None, None] * s1[cidx][:, None, None]
           * w2[:, :, None] * w1[cidx][:, None, :]).reshape(C2, 2 * K1)   # (32, 102)
    wfd = jnp.pad(wfd, ((0, 0), (0, KPAD - 2 * K1))).astype(jnp.bfloat16) # (32, 128)
    bfd = (s2 * b1[cidx] * (w2[:, 0] + w2[:, 1]) + b2).reshape(C2, 1)     # (32, 1)

    # ---- AvgPool(1,4) matrix with separableConv zero padding folded in ----
    p1 = np.zeros((WPAD, POOLW), np.float32)
    for t in range(W2):
        p1[4 * t:4 * t + 4, PAD3 + t] = 0.25        # floor mode: samples 748/749 dropped
    p1 = jnp.asarray(p1, jnp.bfloat16)                                     # (768, 256)

    # ---- separableConv: per-tap (32, 32) weights, BN3 scale folded ----
    s3, b3 = fold_bn(params['bn3'])
    w3 = params['w3'][:, :, 0, :] * s3[:, None, None]                      # (32, 32, 15)
    w3s = jnp.transpose(w3, (2, 0, 1)).astype(jnp.bfloat16)                # (15, 32, 32)
    bsep = b3.reshape(C2, 1)                                               # (32, 1)

    # ---- AvgPool(1,8) + flatten (channel-major) + Linear folded together ----
    p2 = np.zeros((W2P, W3), np.float32)
    for t in range(W3):
        p2[8 * t:8 * t + 8, t] = 0.125              # floor mode: samples 184..186 dropped
    wc3 = params['wc'].reshape(NOUT, C2, W3)                               # (2, 32, 23)
    wcls = jnp.matmul(wc3, jnp.asarray(p2).T).astype(jnp.bfloat16)         # (2, 32, 192)
    bcls = params['bc'].reshape(1, NOUT)

    flops = 2 * bsz * (C2 * KPAD * WPAD + C2 * WPAD * POOLW + K3 * C2 * C2 * W2P)
    bytes_accessed = int(xs.size * 2 + wfd.size * 2 + bfd.size * 4 + p1.size * 2
                         + w3s.size * 2 + bsep.size * 4 + wcls.size * 2
                         + bcls.size * 4 + bsz * NOUT * 4)

    out = pl.pallas_call(
        eegnet_kernel,
        out_shape=jax.ShapeDtypeStruct((bsz, 1, NOUT), jnp.float32),
        grid=(bsz,),                                 # one sample per grid step
        in_specs=[
            pl.BlockSpec((KPAD, WPAD), lambda i: (i, 0)),        # per-sample im2col block
            pl.BlockSpec((C2, KPAD), lambda i: (0, 0)),          # fused stage-A weight
            pl.BlockSpec((C2, 1), lambda i: (0, 0)),             # fused stage-A bias
            pl.BlockSpec((WPAD, POOLW), lambda i: (0, 0)),       # pool4 (+pad) matrix
            pl.BlockSpec((K3, C2, C2), lambda i: (0, 0, 0)),     # separable per-tap weights
            pl.BlockSpec((C2, 1), lambda i: (0, 0)),             # BN3 shift
            pl.BlockSpec((NOUT, C2, W2P), lambda i: (0, 0, 0)),  # pool8 + linear weight
            pl.BlockSpec((1, NOUT), lambda i: (0, 0)),           # linear bias
        ],
        out_specs=pl.BlockSpec((1, 1, NOUT), lambda i: (i, 0, 0)),
        compiler_params=pltpu.CompilerParams(dimension_semantics=("parallel",)),
        cost_estimate=pl.CostEstimate(flops=flops, transcendentals=0,
                                      bytes_accessed=bytes_accessed),
    )(xs, wfd, bfd, p1, w3s, bsep, wcls, bcls)
    return out.reshape(bsz, NOUT)


# ----------------------- deterministic parameter init ------------------------
def init_params(key):
    ks = jax.random.split(key, 20)
    p = {}
    p['w1'] = 0.1 * jax.random.normal(ks[0], (C1, 1, 1, K1), jnp.float32)
    p['w2'] = 0.2 * jax.random.normal(ks[1], (C2, 1, 2, 1), jnp.float32)
    p['w3'] = 0.1 * jax.random.normal(ks[2], (C2, C2, 1, K3), jnp.float32)
    p['wc'] = 0.05 * jax.random.normal(ks[3], (NOUT, NFEAT), jnp.float32)
    p['bc'] = 0.05 * jax.random.normal(ks[4], (NOUT,), jnp.float32)

    def bn(kg, kb, km, kv, c):
        gamma = 1.0 + 0.1 * jax.random.normal(kg, (c,), jnp.float32)
        beta = 0.1 * jax.random.normal(kb, (c,), jnp.float32)
        mean = 0.1 * jax.random.normal(km, (c,), jnp.float32)
        var = 0.5 + jax.random.uniform(kv, (c,), jnp.float32)
        return gamma, beta, mean, var

    p['bn1'] = bn(ks[5], ks[6], ks[7], ks[8], C1)
    p['bn2'] = bn(ks[9], ks[10], ks[11], ks[12], C2)
    p['bn3'] = bn(ks[13], ks[14], ks[15], ks[16], C2)
    return p


# --------------------------- pure-JAX reference -------------------------------
def eegnet_reference(params, x):
    bsz = x.shape[0]
    dn = ('NCHW', 'OIHW', 'NCHW')
    hp = lax.Precision.HIGHEST
    s1, b1 = fold_bn(params['bn1'])
    s2, b2 = fold_bn(params['bn2'])
    s3, b3 = fold_bn(params['bn3'])
    y = lax.conv_general_dilated(x, params['w1'], (1, 1), ((0, 0), (PAD1, PAD1)),
                                 dimension_numbers=dn, precision=hp)
    y = y * s1[None, :, None, None] + b1[None, :, None, None]
    y = lax.conv_general_dilated(y, params['w2'], (1, 1), ((0, 0), (0, 0)),
                                 dimension_numbers=dn, feature_group_count=C1,
                                 precision=hp)
    y = jnp.maximum(y * s2[None, :, None, None] + b2[None, :, None, None], 0.0)
    y = y[..., :W2 * 4].reshape(bsz, C2, 1, W2, 4).mean(-1)
    y = lax.conv_general_dilated(y, params['w3'], (1, 1), ((0, 0), (PAD3, PAD3)),
                                 dimension_numbers=dn, precision=hp)
    y = jnp.maximum(y * s3[None, :, None, None] + b3[None, :, None, None], 0.0)
    y = y[..., :W3 * 8].reshape(bsz, C2, 1, W3, 8).mean(-1)
    y = y.reshape(bsz, -1)
    return y @ params['wc'].T + params['bc'][None, :]


if __name__ == "__main__":
    key = jax.random.PRNGKey(0)
    kp, kx = jax.random.split(key)
    params = init_params(kp)
    # PyTorch NCHW input: (batch, 1 channel, 2 electrode rows, 750 time samples)
    x = jax.random.normal(kx, (B, 1, H, W), jnp.float32)

    out = jax.block_until_ready(eegnet_forward(params, x))
    ref = jax.block_until_ready(eegnet_reference(params, x))

    assert out.shape == (B, NOUT), out.shape
    # Tolerance accounts for bf16 MXU operands (f32 accumulation) vs. f32 reference.
    np.testing.assert_allclose(np.asarray(out), np.asarray(ref), rtol=5e-2, atol=1e-2)
    print("KERNEL_OK")
</pallas_src>

<mosaic_0001>
module attributes {stable_mosaic.version = 11 : i64} {
  func.func @eegnet_kernel(%arg0: i32, %arg1: memref<128x768xbf16, #tpu.memory_space<vmem>>, %arg2: memref<32x128xbf16, #tpu.memory_space<vmem>>, %arg3: memref<32x1xf32, #tpu.memory_space<vmem>>, %arg4: memref<768x256xbf16, #tpu.memory_space<vmem>>, %arg5: memref<15x32x32xbf16, #tpu.memory_space<vmem>>, %arg6: memref<32x1xf32, #tpu.memory_space<vmem>>, %arg7: memref<2x32x192xbf16, #tpu.memory_space<vmem>>, %arg8: memref<1x2xf32, #tpu.memory_space<vmem>>, %arg9: memref<1x1x2xf32, #tpu.memory_space<vmem>>) attributes {dimension_semantics = [#tpu.dimension_semantics<parallel>], iteration_bounds = array<i64: 2>, scalar_prefetch = 0 : i64, scratch_operands = 0 : i64, tpu.core_type = #tpu.core_type<tc>, window_params = [{transform_indices = @transform_0, window_bounds = array<i64: 128, 768>}, {pipeline_mode = #tpu.pipeline_mode<synchronous>, transform_indices = @transform_1, window_bounds = array<i64: 32, 128>}, {pipeline_mode = #tpu.pipeline_mode<synchronous>, transform_indices = @transform_2, window_bounds = array<i64: 32, 1>}, {pipeline_mode = #tpu.pipeline_mode<synchronous>, transform_indices = @transform_3, window_bounds = array<i64: 768, 256>}, {pipeline_mode = #tpu.pipeline_mode<synchronous>, transform_indices = @transform_4, window_bounds = array<i64: 15, 32, 32>}, {pipeline_mode = #tpu.pipeline_mode<synchronous>, transform_indices = @transform_5, window_bounds = array<i64: 32, 1>}, {pipeline_mode = #tpu.pipeline_mode<synchronous>, transform_indices = @transform_6, window_bounds = array<i64: 2, 32, 192>}, {pipeline_mode = #tpu.pipeline_mode<synchronous>, transform_indices = @transform_7, window_bounds = array<i64: 1, 2>}, {transform_indices = @transform_8, window_bounds = array<i64: 1, 1, 2>}]} {
    %c0 = arith.constant 0 : index
    %c0_0 = arith.constant 0 : index
    %0 = vector.load %arg2[%c0, %c0_0] : memref<32x128xbf16, #tpu.memory_space<vmem>>, vector<32x128xbf16>
    %c0_1 = arith.constant 0 : index
    %c0_2 = arith.constant 0 : index
    %1 = vector.load %arg1[%c0_1, %c0_2] : memref<128x768xbf16, #tpu.memory_space<vmem>>, vector<128x768xbf16>
    %cst = arith.constant dense<0.000000e+00> : vector<32x768xf32>
    %2 = tpu.matmul %0, %1, %cst {dimension_numbers = #tpu.dot_dimension_numbers<[1], [0], [0], [1], [0, 0, 1, 1], [], []>} : vector<32x128xbf16>, vector<128x768xbf16>, vector<32x768xf32> -> vector<32x768xf32>
    %c0_3 = arith.constant 0 : index
    %c0_4 = arith.constant 0 : index
    %3 = vector.load %arg3[%c0_3, %c0_4] : memref<32x1xf32, #tpu.memory_space<vmem>>, vector<32x1xf32>
    %4 = vector.broadcast %3 : vector<32x1xf32> to vector<32x768xf32>
    %5 = arith.addf %2, %4 : vector<32x768xf32>
    %cst_5 = arith.constant 0.000000e+00 : f32
    %6 = vector.broadcast %cst_5 : f32 to vector<32x768xf32>
    %7 = arith.maximumf %5, %6 : vector<32x768xf32>
    %8 = arith.truncf %7 : vector<32x768xf32> to vector<32x768xbf16>
    %c0_6 = arith.constant 0 : index
    %c0_7 = arith.constant 0 : index
    %9 = vector.load %arg4[%c0_6, %c0_7] : memref<768x256xbf16, #tpu.memory_space<vmem>>, vector<768x256xbf16>
    %cst_8 = arith.constant dense<0.000000e+00> : vector<32x256xf32>
    %10 = tpu.matmul %8, %9, %cst_8 {dimension_numbers = #tpu.dot_dimension_numbers<[1], [0], [0], [1], [0, 0, 1, 1], [], []>} : vector<32x768xbf16>, vector<768x256xbf16>, vector<32x256xf32> -> vector<32x256xf32>
    %11 = arith.truncf %10 : vector<32x256xf32> to vector<32x256xbf16>
    %c0_9 = arith.constant 0 : index
    %c0_10 = arith.constant 0 : index
    %c0_11 = arith.constant 0 : index
    %12 = vector.load %arg5[%c0_9, %c0_10, %c0_11] : memref<15x32x32xbf16, #tpu.memory_space<vmem>>, vector<15x32x32xbf16>
    %cst_12 = arith.constant 0.000000e+00 : f32
    %13 = vector.broadcast %cst_12 : f32 to vector<32x192xf32>
    %14 = vector.extract_strided_slice %12 {offsets = [0, 0, 0], sizes = [1, 32, 32], strides = [1, 1, 1]} : vector<15x32x32xbf16> to vector<1x32x32xbf16>
    %15 = vector.shape_cast %14 : vector<1x32x32xbf16> to vector<32x32xbf16>
    %16 = vector.extract_strided_slice %11 {offsets = [0, 0], sizes = [32, 192], strides = [1, 1]} : vector<32x256xbf16> to vector<32x192xbf16>
    %cst_13 = arith.constant dense<0.000000e+00> : vector<32x192xf32>
    %17 = tpu.matmul %15, %16, %cst_13 {dimension_numbers = #tpu.dot_dimension_numbers<[1], [0], [0], [1], [0, 0, 1, 1], [], []>} : vector<32x32xbf16>, vector<32x192xbf16>, vector<32x192xf32> -> vector<32x192xf32>
    %18 = arith.addf %13, %17 : vector<32x192xf32>
    %19 = vector.extract_strided_slice %12 {offsets = [1, 0, 0], sizes = [1, 32, 32], strides = [1, 1, 1]} : vector<15x32x32xbf16> to vector<1x32x32xbf16>
    %20 = vector.shape_cast %19 : vector<1x32x32xbf16> to vector<32x32xbf16>
    %21 = vector.extract_strided_slice %11 {offsets = [0, 1], sizes = [32, 192], strides = [1, 1]} : vector<32x256xbf16> to vector<32x192xbf16>
    %cst_14 = arith.constant dense<0.000000e+00> : vector<32x192xf32>
    %22 = tpu.matmul %20, %21, %cst_14 {dimension_numbers = #tpu.dot_dimension_numbers<[1], [0], [0], [1], [0, 0, 1, 1], [], []>} : vector<32x32xbf16>, vector<32x192xbf16>, vector<32x192xf32> -> vector<32x192xf32>
    %23 = arith.addf %18, %22 : vector<32x192xf32>
    %24 = vector.extract_strided_slice %12 {offsets = [2, 0, 0], sizes = [1, 32, 32], strides = [1, 1, 1]} : vector<15x32x32xbf16> to vector<1x32x32xbf16>
    %25 = vector.shape_cast %24 : vector<1x32x32xbf16> to vector<32x32xbf16>
    %26 = vector.extract_strided_slice %11 {offsets = [0, 2], sizes = [32, 192], strides = [1, 1]} : vector<32x256xbf16> to vector<32x192xbf16>
    %cst_15 = arith.constant dense<0.000000e+00> : vector<32x192xf32>
    %27 = tpu.matmul %25, %26, %cst_15 {dimension_numbers = #tpu.dot_dimension_numbers<[1], [0], [0], [1], [0, 0, 1, 1], [], []>} : vector<32x32xbf16>, vector<32x192xbf16>, vector<32x192xf32> -> vector<32x192xf32>
    %28 = arith.addf %23, %27 : vector<32x192xf32>
    %29 = vector.extract_strided_slice %12 {offsets = [3, 0, 0], sizes = [1, 32, 32], strides = [1, 1, 1]} : vector<15x32x32xbf16> to vector<1x32x32xbf16>
    %30 = vector.shape_cast %29 : vector<1x32x32xbf16> to vector<32x32xbf16>
    %31 = vector.extract_strided_slice %11 {offsets = [0, 3], sizes = [32, 192], strides = [1, 1]} : vector<32x256xbf16> to vector<32x192xbf16>
    %cst_16 = arith.constant dense<0.000000e+00> : vector<32x192xf32>
    %32 = tpu.matmul %30, %31, %cst_16 {dimension_numbers = #tpu.dot_dimension_numbers<[1], [0], [0], [1], [0, 0, 1, 1], [], []>} : vector<32x32xbf16>, vector<32x192xbf16>, vector<32x192xf32> -> vector<32x192xf32>
    %33 = arith.addf %28, %32 : vector<32x192xf32>
    %34 = vector.extract_strided_slice %12 {offsets = [4, 0, 0], sizes = [1, 32, 32], strides = [1, 1, 1]} : vector<15x32x32xbf16> to vector<1x32x32xbf16>
    %35 = vector.shape_cast %34 : vector<1x32x32xbf16> to vector<32x32xbf16>
    %36 = vector.extract_strided_slice %11 {offsets = [0, 4], sizes = [32, 192], strides = [1, 1]} : vector<32x256xbf16> to vector<32x192xbf16>
    %cst_17 = arith.constant dense<0.000000e+00> : vector<32x192xf32>
    %37 = tpu.matmul %35, %36, %cst_17 {dimension_numbers = #tpu.dot_dimension_numbers<[1], [0], [0], [1], [0, 0, 1, 1], [], []>} : vector<32x32xbf16>, vector<32x192xbf16>, vector<32x192xf32> -> vector<32x192xf32>
    %38 = arith.addf %33, %37 : vector<32x192xf32>
    %39 = vector.extract_strided_slice %12 {offsets = [5, 0, 0], sizes = [1, 32, 32], strides = [1, 1, 1]} : vector<15x32x32xbf16> to vector<1x32x32xbf16>
    %40 = vector.shape_cast %39 : vector<1x32x32xbf16> to vector<32x32xbf16>
    %41 = vector.extract_strided_slice %11 {offsets = [0, 5], sizes = [32, 192], strides = [1, 1]} : vector<32x256xbf16> to vector<32x192xbf16>
    %cst_18 = arith.constant dense<0.000000e+00> : vector<32x192xf32>
    %42 = tpu.matmul %40, %41, %cst_18 {dimension_numbers = #tpu.dot_dimension_numbers<[1], [0], [0], [1], [0, 0, 1, 1], [], []>} : vector<32x32xbf16>, vector<32x192xbf16>, vector<32x192xf32> -> vector<32x192xf32>
    %43 = arith.addf %38, %42 : vector<32x192xf32>
    %44 = vector.extract_strided_slice %12 {offsets = [6, 0, 0], sizes = [1, 32, 32], strides = [1, 1, 1]} : vector<15x32x32xbf16> to vector<1x32x32xbf16>
    %45 = vector.shape_cast %44 : vector<1x32x32xbf16> to vector<32x32xbf16>
    %46 = vector.extract_strided_slice %11 {offsets = [0, 6], sizes = [32, 192], strides = [1, 1]} : vector<32x256xbf16> to vector<32x192xbf16>
    %cst_19 = arith.constant dense<0.000000e+00> : vector<32x192xf32>
    %47 = tpu.matmul %45, %46, %cst_19 {dimension_numbers = #tpu.dot_dimension_numbers<[1], [0], [0], [1], [0, 0, 1, 1], [], []>} : vector<32x32xbf16>, vector<32x192xbf16>, vector<32x192xf32> -> vector<32x192xf32>
    %48 = arith.addf %43, %47 : vector<32x192xf32>
    %49 = vector.extract_strided_slice %12 {offsets = [7, 0, 0], sizes = [1, 32, 32], strides = [1, 1, 1]} : vector<15x32x32xbf16> to vector<1x32x32xbf16>
    %50 = vector.shape_cast %49 : vector<1x32x32xbf16> to vector<32x32xbf16>
    %51 = vector.extract_strided_slice %11 {offsets = [0, 7], sizes = [32, 192], strides = [1, 1]} : vector<32x256xbf16> to vector<32x192xbf16>
    %cst_20 = arith.constant dense<0.000000e+00> : vector<32x192xf32>
    %52 = tpu.matmul %50, %51, %cst_20 {dimension_numbers = #tpu.dot_dimension_numbers<[1], [0], [0], [1], [0, 0, 1, 1], [], []>} : vector<32x32xbf16>, vector<32x192xbf16>, vector<32x192xf32> -> vector<32x192xf32>
    %53 = arith.addf %48, %52 : vector<32x192xf32>
    %54 = vector.extract_strided_slice %12 {offsets = [8, 0, 0], sizes = [1, 32, 32], strides = [1, 1, 1]} : vector<15x32x32xbf16> to vector<1x32x32xbf16>
    %55 = vector.shape_cast %54 : vector<1x32x32xbf16> to vector<32x32xbf16>
    %56 = vector.extract_strided_slice %11 {offsets = [0, 8], sizes = [32, 192], strides = [1, 1]} : vector<32x256xbf16> to vector<32x192xbf16>
    %cst_21 = arith.constant dense<0.000000e+00> : vector<32x192xf32>
    %57 = tpu.matmul %55, %56, %cst_21 {dimension_numbers = #tpu.dot_dimension_numbers<[1], [0], [0], [1], [0, 0, 1, 1], [], []>} : vector<32x32xbf16>, vector<32x192xbf16>, vector<32x192xf32> -> vector<32x192xf32>
    %58 = arith.addf %53, %57 : vector<32x192xf32>
    %59 = vector.extract_strided_slice %12 {offsets = [9, 0, 0], sizes = [1, 32, 32], strides = [1, 1, 1]} : vector<15x32x32xbf16> to vector<1x32x32xbf16>
    %60 = vector.shape_cast %59 : vector<1x32x32xbf16> to vector<32x32xbf16>
    %61 = vector.extract_strided_slice %11 {offsets = [0, 9], sizes = [32, 192], strides = [1, 1]} : vector<32x256xbf16> to vector<32x192xbf16>
    %cst_22 = arith.constant dense<0.000000e+00> : vector<32x192xf32>
    %62 = tpu.matmul %60, %61, %cst_22 {dimension_numbers = #tpu.dot_dimension_numbers<[1], [0], [0], [1], [0, 0, 1, 1], [], []>} : vector<32x32xbf16>, vector<32x192xbf16>, vector<32x192xf32> -> vector<32x192xf32>
    %63 = arith.addf %58, %62 : vector<32x192xf32>
    %64 = vector.extract_strided_slice %12 {offsets = [10, 0, 0], sizes = [1, 32, 32], strides = [1, 1, 1]} : vector<15x32x32xbf16> to vector<1x32x32xbf16>
    %65 = vector.shape_cast %64 : vector<1x32x32xbf16> to vector<32x32xbf16>
    %66 = vector.extract_strided_slice %11 {offsets = [0, 10], sizes = [32, 192], strides = [1, 1]} : vector<32x256xbf16> to vector<32x192xbf16>
    %cst_23 = arith.constant dense<0.000000e+00> : vector<32x192xf32>
    %67 = tpu.matmul %65, %66, %cst_23 {dimension_numbers = #tpu.dot_dimension_numbers<[1], [0], [0], [1], [0, 0, 1, 1], [], []>} : vector<32x32xbf16>, vector<32x192xbf16>, vector<32x192xf32> -> vector<32x192xf32>
    %68 = arith.addf %63, %67 : vector<32x192xf32>
    %69 = vector.extract_strided_slice %12 {offsets = [11, 0, 0], sizes = [1, 32, 32], strides = [1, 1, 1]} : vector<15x32x32xbf16> to vector<1x32x32xbf16>
    %70 = vector.shape_cast %69 : vector<1x32x32xbf16> to vector<32x32xbf16>
    %71 = vector.extract_strided_slice %11 {offsets = [0, 11], sizes = [32, 192], strides = [1, 1]} : vector<32x256xbf16> to vector<32x192xbf16>
    %cst_24 = arith.constant dense<0.000000e+00> : vector<32x192xf32>
    %72 = tpu.matmul %70, %71, %cst_24 {dimension_numbers = #tpu.dot_dimension_numbers<[1], [0], [0], [1], [0, 0, 1, 1], [], []>} : vector<32x32xbf16>, vector<32x192xbf16>, vector<32x192xf32> -> vector<32x192xf32>
    %73 = arith.addf %68, %72 : vector<32x192xf32>
    %74 = vector.extract_strided_slice %12 {offsets = [12, 0, 0], sizes = [1, 32, 32], strides = [1, 1, 1]} : vector<15x32x32xbf16> to vector<1x32x32xbf16>
    %75 = vector.shape_cast %74 : vector<1x32x32xbf16> to vector<32x32xbf16>
    %76 = vector.extract_strided_slice %11 {offsets = [0, 12], sizes = [32, 192], strides = [1, 1]} : vector<32x256xbf16> to vector<32x192xbf16>
    %cst_25 = arith.constant dense<0.000000e+00> : vector<32x192xf32>
    %77 = tpu.matmul %75, %76, %cst_25 {dimension_numbers = #tpu.dot_dimension_numbers<[1], [0], [0], [1], [0, 0, 1, 1], [], []>} : vector<32x32xbf16>, vector<32x192xbf16>, vector<32x192xf32> -> vector<32x192xf32>
    %78 = arith.addf %73, %77 : vector<32x192xf32>
    %79 = vector.extract_strided_slice %12 {offsets = [13, 0, 0], sizes = [1, 32, 32], strides = [1, 1, 1]} : vector<15x32x32xbf16> to vector<1x32x32xbf16>
    %80 = vector.shape_cast %79 : vector<1x32x32xbf16> to vector<32x32xbf16>
    %81 = vector.extract_strided_slice %11 {offsets = [0, 13], sizes = [32, 192], strides = [1, 1]} : vector<32x256xbf16> to vector<32x192xbf16>
    %cst_26 = arith.constant dense<0.000000e+00> : vector<32x192xf32>
    %82 = tpu.matmul %80, %81, %cst_26 {dimension_numbers = #tpu.dot_dimension_numbers<[1], [0], [0], [1], [0, 0, 1, 1], [], []>} : vector<32x32xbf16>, vector<32x192xbf16>, vector<32x192xf32> -> vector<32x192xf32>
    %83 = arith.addf %78, %82 : vector<32x192xf32>
    %84 = vector.extract_strided_slice %12 {offsets = [14, 0, 0], sizes = [1, 32, 32], strides = [1, 1, 1]} : vector<15x32x32xbf16> to vector<1x32x32xbf16>
    %85 = vector.shape_cast %84 : vector<1x32x32xbf16> to vector<32x32xbf16>
    %86 = vector.extract_strided_slice %11 {offsets = [0, 14], sizes = [32, 192], strides = [1, 1]} : vector<32x256xbf16> to vector<32x192xbf16>
    %cst_27 = arith.constant dense<0.000000e+00> : vector<32x192xf32>
    %87 = tpu.matmul %85, %86, %cst_27 {dimension_numbers = #tpu.dot_dimension_numbers<[1], [0], [0], [1], [0, 0, 1, 1], [], []>} : vector<32x32xbf16>, vector<32x192xbf16>, vector<32x192xf32> -> vector<32x192xf32>
    %88 = arith.addf %83, %87 : vector<32x192xf32>
    %c0_28 = arith.constant 0 : index
    %c0_29 = arith.constant 0 : index
    %89 = vector.load %arg6[%c0_28, %c0_29] : memref<32x1xf32, #tpu.memory_space<vmem>>, vector<32x1xf32>
    %90 = vector.broadcast %89 : vector<32x1xf32> to vector<32x192xf32>
    %91 = arith.addf %88, %90 : vector<32x192xf32>
    %cst_30 = arith.constant 0.000000e+00 : f32
    %92 = vector.broadcast %cst_30 : f32 to vector<32x192xf32>
    %93 = arith.maximumf %91, %92 : vector<32x192xf32>
    %c0_31 = arith.constant 0 : index
    %c0_32 = arith.constant 0 : index
    %c0_33 = arith.constant 0 : index
    %94 = vector.load %arg7[%c0_31, %c0_32, %c0_33] : memref<2x32x192xbf16, #tpu.memory_space<vmem>>, vector<1x32x192xbf16>
    %95 = vector.shape_cast %94 : vector<1x32x192xbf16> to vector<32x192xbf16>
    %96 = arith.extf %95 : vector<32x192xbf16> to vector<32x192xf32>
    %97 = arith.mulf %93, %96 : vector<32x192xf32>
    %cst_34 = arith.constant dense<0.000000e+00> : vector<32xf32>
    %98 = vector.multi_reduction <add>, %97, %cst_34 [1] : vector<32x192xf32> to vector<32xf32>
    %99 = vector.shape_cast %98 : vector<32xf32> to vector<32x1xf32>
    %c1 = arith.constant 1 : index
    %c0_35 = arith.constant 0 : index
    %c0_36 = arith.constant 0 : index
    %100 = vector.load %arg7[%c1, %c0_35, %c0_36] : memref<2x32x192xbf16, #tpu.memory_space<vmem>>, vector<1x32x192xbf16>
    %101 = vector.shape_cast %100 : vector<1x32x192xbf16> to vector<32x192xbf16>
    %102 = arith.extf %101 : vector<32x192xbf16> to vector<32x192xf32>
    %103 = arith.mulf %93, %102 : vector<32x192xf32>
    %cst_37 = arith.constant dense<0.000000e+00> : vector<32xf32>
    %104 = vector.multi_reduction <add>, %103, %cst_37 [1] : vector<32x192xf32> to vector<32xf32>
    %105 = vector.shape_cast %104 : vector<32xf32> to vector<32x1xf32>
    %106 = tpu.concatenate %99, %105 in 1 : vector<32x1xf32>, vector<32x1xf32> -> vector<32x2xf32>
    %cst_38 = arith.constant dense<0.000000e+00> : vector<2xf32>
    %107 = vector.multi_reduction <add>, %106, %cst_38 [0] : vector<32x2xf32> to vector<2xf32>
    %108 = vector.shape_cast %107 : vector<2xf32> to vector<1x2xf32>
    %c0_39 = arith.constant 0 : index
    %c0_40 = arith.constant 0 : index
    %109 = vector.load %arg8[%c0_39, %c0_40] : memref<1x2xf32, #tpu.memory_space<vmem>>, vector<1x2xf32>
    %110 = arith.addf %108, %109 : vector<1x2xf32>
    %111 = vector.shape_cast %110 : vector<1x2xf32> to vector<1x1x2xf32>
    %c0_41 = arith.constant 0 : index
    %c0_42 = arith.constant 0 : index
    %c0_43 = arith.constant 0 : index
    %112 = vector.load %arg9[%c0_41, %c0_42, %c0_43] : memref<1x1x2xf32, #tpu.memory_space<vmem>>, vector<1x1x2xf32>
    tpu.vector_store %arg9[%c0_41, %c0_42, %c0_43], %111 {strides = array<i32>} : memref<1x1x2xf32, #tpu.memory_space<vmem>>, vector<1x1x2xf32>,
    return
  }
  func.func @transform_0(%arg0: i32) -> (i32, i32) {
    %c0_i32 = arith.constant 0 : i32
    %c0_i32_0 = arith.constant 0 : i32
    return %arg0, %c0_i32 : i32, i32
  }
  func.func @transform_1(%arg0: i32) -> (i32, i32) {
    %c0_i32 = arith.constant 0 : i32
    %c0_i32_0 = arith.constant 0 : i32
    %c0_i32_1 = arith.constant 0 : i32
    return %c0_i32, %c0_i32_0 : i32, i32
  }
  func.func @transform_2(%arg0: i32) -> (i32, i32) {
    %c0_i32 = arith.constant 0 : i32
    %c0_i32_0 = arith.constant 0 : i32
    %c0_i32_1 = arith.constant 0 : i32
    return %c0_i32, %c0_i32_0 : i32, i32
  }
  func.func @transform_3(%arg0: i32) -> (i32, i32) {
    %c0_i32 = arith.constant 0 : i32
    %c0_i32_0 = arith.constant 0 : i32
    %c0_i32_1 = arith.constant 0 : i32
    return %c0_i32, %c0_i32_0 : i32, i32
  }
  func.func @transform_4(%arg0: i32) -> (i32, i32, i32) {
    %c0_i32 = arith.constant 0 : i32
    %c0_i32_0 = arith.constant 0 : i32
    %c0_i32_1 = arith.constant 0 : i32
    %c0_i32_2 = arith.constant 0 : i32
    return %c0_i32, %c0_i32_0, %c0_i32_1 : i32, i32, i32
  }
  func.func @transform_5(%arg0: i32) -> (i32, i32) {
    %c0_i32 = arith.constant 0 : i32
    %c0_i32_0 = arith.constant 0 : i32
    %c0_i32_1 = arith.constant 0 : i32
    return %c0_i32, %c0_i32_0 : i32, i32
  }
  func.func @transform_6(%arg0: i32) -> (i32, i32, i32) {
    %c0_i32 = arith.constant 0 : i32
    %c0_i32_0 = arith.constant 0 : i32
    %c0_i32_1 = arith.constant 0 : i32
    %c0_i32_2 = arith.constant 0 : i32
    return %c0_i32, %c0_i32_0, %c0_i32_1 : i32, i32, i32
  }
  func.func @transform_7(%arg0: i32) -> (i32, i32) {
    %c0_i32 = arith.constant 0 : i32
    %c0_i32_0 = arith.constant 0 : i32
    %c0_i32_1 = arith.constant 0 : i32
    return %c0_i32, %c0_i32_0 : i32, i32
  }
  func.func @transform_8(%arg0: i32) -> (i32, i32, i32) {
    %c0_i32 = arith.constant 0 : i32
    %c0_i32_0 = arith.constant 0 : i32
    %c0_i32_1 = arith.constant 0 : i32
    return %arg0, %c0_i32, %c0_i32_0 : i32, i32, i32
  }
}

</mosaic_0001>

<llo_original>
// kernel: tpu_custom_call.1
$region0: #{tpu_custom_call.1}
  #allocation0 [shape = 'u32[]', space=smem, size = 0x4, offset = 0x4, fixed_abs, tag = 'smem constant byte address 0x4 - core index']
  #allocation1 [shape = 'u32[144,128]{1,0:T(1,128)}', space=vmem, size = 0x12000, scoped, tag = 'internal scratch']
  %s0 = inlined_call_operand.hbm [shape: bf16[256,768], index: 0, kind: input, shape index: {}]
  %s1 = inlined_call_operand.vmem [shape: bf16[32,128], index: 1, kind: input, shape index: {}]
  %s2 = inlined_call_operand.vmem [shape: f32[32,1], index: 2, kind: input, shape index: {}]
  %s3 = inlined_call_operand.hbm [shape: bf16[768,256], index: 3, kind: input, shape index: {}]
  %s4 = inlined_call_operand.hbm [shape: bf16[15,32,32], index: 4, kind: input, shape index: {}]
  %s5 = inlined_call_operand.vmem [shape: f32[32,1], index: 5, kind: input, shape index: {}]
  %s6 = inlined_call_operand.vmem [shape: bf16[2,32,192], index: 6, kind: input, shape index: {}]
  %s7 = inlined_call_operand.vmem [shape: f32[1,2], index: 7, kind: input, shape index: {}]
  %s8 = inlined_call_operand.hbm [shape: f32[2,1,2], index: 8, kind: output, shape index: {}]
  %s9 = sld [smem:[#allocation0]]
  $region77: #{tpu_custom_call.1} parent=0
    _
  %s11 = ssub.s32 1, %s9
  %s12 = scalar_select 0, %s11, %s9
  $region1: #{tpu_custom_call.1} parent=0
    #allocation2 [shape = 'u8[393216]{0}', space=vmem, size = 0x60000, scoped, tag = 'input window, operand 0']
    #allocation3 [shape = 's32[2]{0}', space=sflag, size = 0x8, scoped, tag = 'scoped memory for tpu_custom_call.1']
    #allocation4 [shape = 's32[2]{0}', space=sflag, size = 0x8, scoped, tag = 'scoped memory for tpu_custom_call.1']
    #allocation5 [shape = 'u8[393216]{0}', space=vmem, size = 0x60000, scoped, tag = 'input window, operand 3, single buffered']
    #allocation6 [shape = 's32[1]{0}', space=sflag, size = 0x4, scoped, tag = 'scoped memory for tpu_custom_call.1']
    #allocation7 [shape = 'u8[122880]{0}', space=vmem, size = 0x1e000, scoped, tag = 'input window, operand 4, single buffered']
    #allocation8 [shape = 'u8[1024]{0}', space=vmem, size = 0x400, scoped, tag = 'output window, operand 0']
    %13 = vsyncpa [#allocation3], 0
    %s14 = scalar_lea.sflag [#allocation3], 1
    %15 = vsyncpa %s14, 0
    %16 = vsyncpa [#allocation6], 0
    %17 = vsyncpa [#allocation4], 0
    %s18 = scalar_lea.sflag [#allocation4], 1
    %19 = vsyncpa %s18, 0
    loop: start=0, step=1, limit=4
    $region2: #{tpu_custom_call.1} parent=1 // loop_pre_header
      _
    $region3: #{tpu_custom_call.1} parent=1 // loop_header
      %s21 = sphi 0, %s25
      %p22 = scmp.ge.s32.totalorder %s21, 4
      %s31 = sphi 0, %s33
      %s34 = sphi 0, %s31
      %s35 = sphi 0, %s34
      %s51 = sphi 0, %s35
      %s55 = sphi 0, %s55
      %s57 = sphi 0, %s55
      %s58 = sphi 0, %s57
      %s72 = sphi 0, %s58
      %s76 = sphi 0, %s76
      %s78 = sphi 0, %s76
      %s79 = sphi 0, %s78
      %s93 = sphi 0, %s79
      %s97 = sphi 0, %s97
      %s99 = sphi 0, %s97
      %s100 = sphi 0, %s99
      %s114 = sphi 0, %s100
      %s118 = sphi 0, %s118
      %s120 = sphi 0, %s118
      %s121 = sphi 0, %s120
      %s135 = sphi 0, %s121
      %s139 = sphi 0, %s139
      %s141 = sphi 0, %s139
      %s142 = sphi 0, %s141
      %s156 = sphi 0, %s142
      %s160 = sphi 0, %s160
      %s162 = sphi 0, %s160
      %s163 = sphi 0, %s162
      %s177 = sphi 0, %s163
      %s181 = sphi 0, %s181
      %s183 = sphi 0, %s181
      %s184 = sphi 0, %s183
      %s198 = sphi 0, %s184
      %s204 = sphi 0, %s206
      %s207 = sphi 0, %s204
      %s208 = sphi 0, %s207
      %s224 = sphi 0, %s208
    $region4: #{tpu_custom_call.1} parent=1 // loop_header_branch
      %24 = sbr.rel (%p22) target = $region8
    $region5: #{tpu_custom_call.1} parent=1 // loop_body
      %s26 = ssub.s32 %s21, 1
      %s27 = ssub.s32 %s21, 2
      %s28 = sadd.s32 %s21, 1
      %s29 = ssub.s32 %s21, %s28
      %p30 = scmp.eq.s32.totalorder %s29, 0
      %s32 = sadd.s32 %s31, 1
      %s33 = scalar_select %p30, %s31, %s32
      %p36 = pneg %p30
      %p37 = scmp.eq.s32.totalorder %s21, 1
      %p38 = por %p36, %p37
      %p39 = scmp.ne.s32.totalorder %s31, %s34
      %p40 = scmp.eq.s32.totalorder %s21, 0
      %p41 = por %p39, %p40
      %p42 = scmp.ne.s32.totalorder %s31, %s34
      %p43 = scmp.eq.s32.totalorder %s26, 1
      %p44 = por %p42, %p43
      %p45 = scmp.ne.s32.totalorder %s34, %s35
      %p46 = scmp.eq.s32.totalorder %s26, 0
      %p47 = por %p45, %p46
      %p48 = scmp.ne.s32.totalorder %s34, %s35
      %p49 = scmp.eq.s32.totalorder %s27, 1
      %p50 = por %p48, %p49
      %p52 = scmp.ne.s32.totalorder %s35, %s51
      %p53 = scmp.eq.s32.totalorder %s27, 0
      %p54 = por %p52, %p53
      %s56 = sadd.s32 %s55, 1
      %p59 = scmp.eq.s32.totalorder %s21, 1
      %p60 = scmp.ne.s32.totalorder %s55, %s57
      %p61 = scmp.eq.s32.totalorder %s21, 0
      %p62 = por %p60, %p61
      %p63 = scmp.ne.s32.totalorder %s55, %s57
      %p64 = scmp.eq.s32.totalorder %s26, 1
      %p65 = por %p63, %p64
      %p66 = scmp.ne.s32.totalorder %s57, %s58
      %p67 = scmp.eq.s32.totalorder %s26, 0
      %p68 = por %p66, %p67
      %p69 = scmp.ne.s32.totalorder %s57, %s58
      %p70 = scmp.eq.s32.totalorder %s27, 1
      %p71 = por %p69, %p70
      %p73 = scmp.ne.s32.totalorder %s58, %s72
      %p74 = scmp.eq.s32.totalorder %s27, 0
      %p75 = por %p73, %p74
      %s77 = sadd.s32 %s76, 1
      %p80 = scmp.eq.s32.totalorder %s21, 1
      %p81 = scmp.ne.s32.totalorder %s76, %s78
      %p82 = scmp.eq.s32.totalorder %s21, 0
      %p83 = por %p81, %p82
      %p84 = scmp.ne.s32.totalorder %s76, %s78
      %p85 = scmp.eq.s32.totalorder %s26, 1
      %p86 = por %p84, %p85
      %p87 = scmp.ne.s32.totalorder %s78, %s79
      %p88 = scmp.eq.s32.totalorder %s26, 0
      %p89 = por %p87, %p88
      %p90 = scmp.ne.s32.totalorder %s78, %s79
      %p91 = scmp.eq.s32.totalorder %s27, 1
      %p92 = por %p90, %p91
      %p94 = scmp.ne.s32.totalorder %s79, %s93
      %p95 = scmp.eq.s32.totalorder %s27, 0
      %p96 = por %p94, %p95
      %s98 = sadd.s32 %s97, 1
      %p101 = scmp.eq.s32.totalorder %s21, 1
      %p102 = scmp.ne.s32.totalorder %s97, %s99
      %p103 = scmp.eq.s32.totalorder %s21, 0
      %p104 = por %p102, %p103
      %p105 = scmp.ne.s32.totalorder %s97, %s99
      %p106 = scmp.eq.s32.totalorder %s26, 1
      %p107 = por %p105, %p106
      %p108 = scmp.ne.s32.totalorder %s99, %s100
      %p109 = scmp.eq.s32.totalorder %s26, 0
      %p110 = por %p108, %p109
      %p111 = scmp.ne.s32.totalorder %s99, %s100
      %p112 = scmp.eq.s32.totalorder %s27, 1
      %p113 = por %p111, %p112
      %p115 = scmp.ne.s32.totalorder %s100, %s114
      %p116 = scmp.eq.s32.totalorder %s27, 0
      %p117 = por %p115, %p116
      %s119 = sadd.s32 %s118, 1
      %p122 = scmp.eq.s32.totalorder %s21, 1
      %p123 = scmp.ne.s32.totalorder %s118, %s120
      %p124 = scmp.eq.s32.totalorder %s21, 0
      %p125 = por %p123, %p124
      %p126 = scmp.ne.s32.totalorder %s118, %s120
      %p127 = scmp.eq.s32.totalorder %s26, 1
      %p128 = por %p126, %p127
      %p129 = scmp.ne.s32.totalorder %s120, %s121
      %p130 = scmp.eq.s32.totalorder %s26, 0
      %p131 = por %p129, %p130
      %p132 = scmp.ne.s32.totalorder %s120, %s121
      %p133 = scmp.eq.s32.totalorder %s27, 1
      %p134 = por %p132, %p133
      %p136 = scmp.ne.s32.totalorder %s121, %s135
      %p137 = scmp.eq.s32.totalorder %s27, 0
      %p138 = por %p136, %p137
      %s140 = sadd.s32 %s139, 1
      %p143 = scmp.eq.s32.totalorder %s21, 1
      %p144 = scmp.ne.s32.totalorder %s139, %s141
      %p145 = scmp.eq.s32.totalorder %s21, 0
      %p146 = por %p144, %p145
      %p147 = scmp.ne.s32.totalorder %s139, %s141
      %p148 = scmp.eq.s32.totalorder %s26, 1
      %p149 = por %p147, %p148
      %p150 = scmp.ne.s32.totalorder %s141, %s142
      %p151 = scmp.eq.s32.totalorder %s26, 0
      %p152 = por %p150, %p151
      %p153 = scmp.ne.s32.totalorder %s141, %s142
      %p154 = scmp.eq.s32.totalorder %s27, 1
      %p155 = por %p153, %p154
      %p157 = scmp.ne.s32.totalorder %s142, %s156
      %p158 = scmp.eq.s32.totalorder %s27, 0
      %p159 = por %p157, %p158
      %s161 = sadd.s32 %s160, 1
      %p164 = scmp.eq.s32.totalorder %s21, 1
      %p165 = scmp.ne.s32.totalorder %s160, %s162
      %p166 = scmp.eq.s32.totalorder %s21, 0
      %p167 = por %p165, %p166
      %p168 = scmp.ne.s32.totalorder %s160, %s162
      %p169 = scmp.eq.s32.totalorder %s26, 1
      %p170 = por %p168, %p169
      %p171 = scmp.ne.s32.totalorder %s162, %s163
      %p172 = scmp.eq.s32.totalorder %s26, 0
      %p173 = por %p171, %p172
      %p174 = scmp.ne.s32.totalorder %s162, %s163
      %p175 = scmp.eq.s32.totalorder %s27, 1
      %p176 = por %p174, %p175
      %p178 = scmp.ne.s32.totalorder %s163, %s177
      %p179 = scmp.eq.s32.totalorder %s27, 0
      %p180 = por %p178, %p179
      %s182 = sadd.s32 %s181, 1
      %p185 = scmp.eq.s32.totalorder %s21, 1
      %p186 = scmp.ne.s32.totalorder %s181, %s183
      %p187 = scmp.eq.s32.totalorder %s21, 0
      %p188 = por %p186, %p187
      %p189 = scmp.ne.s32.totalorder %s181, %s183
      %p190 = scmp.eq.s32.totalorder %s26, 1
      %p191 = por %p189, %p190
      %p192 = scmp.ne.s32.totalorder %s183, %s184
      %p193 = scmp.eq.s32.totalorder %s26, 0
      %p194 = por %p192, %p193
      %p195 = scmp.ne.s32.totalorder %s183, %s184
      %p196 = scmp.eq.s32.totalorder %s27, 1
      %p197 = por %p195, %p196
      %p199 = scmp.ne.s32.totalorder %s184, %s198
      %p200 = scmp.eq.s32.totalorder %s27, 0
      %p201 = por %p199, %p200
      %s202 = ssub.s32 %s21, %s28
      %p203 = scmp.eq.s32.totalorder %s202, 0
      %s205 = sadd.s32 %s204, 1
      %s206 = scalar_select %p203, %s204, %s205
      %p209 = pneg %p203
      %p210 = scmp.eq.s32.totalorder %s21, 1
      %p211 = por %p209, %p210
      %p212 = scmp.ne.s32.totalorder %s204, %s207
      %p213 = scmp.eq.s32.totalorder %s21, 0
      %p214 = por %p212, %p213
      %p215 = scmp.ne.s32.totalorder %s204, %s207
      %p216 = scmp.eq.s32.totalorder %s26, 1
      %p217 = por %p215, %p216
      %p218 = scmp.ne.s32.totalorder %s207, %s208
      %p219 = scmp.eq.s32.totalorder %s26, 0
      %p220 = por %p218, %p219
      %p221 = scmp.ne.s32.totalorder %s207, %s208
      %p222 = scmp.eq.s32.totalorder %s27, 1
      %p223 = por %p221, %p222
      %p225 = scmp.ne.s32.totalorder %s208, %s224
      %p226 = scmp.eq.s32.totalorder %s27, 0
      %p227 = por %p225, %p226
      %p228 = scmp.le.s32.totalorder 1, %s21
      %p229 = scmp.lt.s32.totalorder %s21, 3
      %p230 = pnand %p228, %p229
      %p231 = pneg %p230
      // Predicated region
      $region9: #{tpu_custom_call.1} parent=5 // pred_check
        _
      $region10: #{tpu_custom_call.1} parent=5 // pred_check_branch
        %233 = sbr.rel (%p230) target = $region12
      $region11: #{tpu_custom_call.1} parent=5 // pred_region
        %s234 = ssub.s32 %s21, 1
        // Predicated region
        $region13: #{tpu_custom_call.1} parent=11 // pred_check
          %p235 = pneg %p68
        $region14: #{tpu_custom_call.1} parent=11 // pred_check_branch
          %237 = sbr.rel (%p235) target = $region16
        $region15: #{tpu_custom_call.1} parent=11 // pred_region
          _
        $region16: #{tpu_custom_call.1} parent=11 // pred_fallthru
          _
        // Predicated region
        $region17: #{tpu_custom_call.1} parent=11 // pred_check
          %p238 = pneg %p89
        $region18: #{tpu_custom_call.1} parent=11 // pred_check_branch
          %240 = sbr.rel (%p238) target = $region20
        $region19: #{tpu_custom_call.1} parent=11 // pred_region
          _
        $region20: #{tpu_custom_call.1} parent=11 // pred_fallthru
          _
        // Predicated region
        $region21: #{tpu_custom_call.1} parent=11 // pred_check
          %p241 = pneg %p110
        $region22: #{tpu_custom_call.1} parent=11 // pred_check_branch
          %243 = sbr.rel (%p241) target = $region24
        $region23: #{tpu_custom_call.1} parent=11 // pred_region
          %s245 = ssub.s32 12288, 12288
          %246 = vsyncadd [#allocation6], %s245
          %s247 = sshll.u32 [#allocation5], 4
          %s248 = int_to_ptr.vmem [resolvable:$true] %s247
          %253 = dma.hbm_to_vmem [thread:$0]  %s3, 12288, %s248, [#allocation6], 128, 128, 8
        $region24: #{tpu_custom_call.1} parent=11 // pred_fallthru
          _
        // Predicated region
        $region25: #{tpu_custom_call.1} parent=11 // pred_check
          %p254 = pneg %p131
        $region26: #{tpu_custom_call.1} parent=11 // pred_check_branch
          %256 = sbr.rel (%p254) target = $region28
        $region27: #{tpu_custom_call.1} parent=11 // pred_region
          %s258 = ssub.s32 3840, 3840
          %259 = vsyncadd [#allocation6], %s258
          %s260 = sshll.u32 [#allocation7], 4
          %s261 = int_to_ptr.vmem [resolvable:$true] %s260
          %266 = dma.hbm_to_vmem [thread:$0]  %s4, 3840, %s261, [#allocation6], 64, 64, 4
        $region28: #{tpu_custom_call.1} parent=11 // pred_fallthru
          _
        // Predicated region
        $region29: #{tpu_custom_call.1} parent=11 // pred_check
          %p267 = pneg %p152
        $region30: #{tpu_custom_call.1} parent=11 // pred_check_branch
          %269 = sbr.rel (%p267) target = $region32
        $region31: #{tpu_custom_call.1} parent=11 // pred_region
          _
        $region32: #{tpu_custom_call.1} parent=11 // pred_fallthru
          _
        // Predicated region
        $region33: #{tpu_custom_call.1} parent=11 // pred_check
          %p270 = pneg %p173
        $region34: #{tpu_custom_call.1} parent=11 // pred_check_branch
          %272 = sbr.rel (%p270) target = $region36
        $region35: #{tpu_custom_call.1} parent=11 // pred_region
          _
        $region36: #{tpu_custom_call.1} parent=11 // pred_fallthru
          _
        // Predicated region
        $region37: #{tpu_custom_call.1} parent=11 // pred_check
          %p273 = pneg %p194
        $region38: #{tpu_custom_call.1} parent=11 // pred_check_branch
          %275 = sbr.rel (%p273) target = $region40
        $region39: #{tpu_custom_call.1} parent=11 // pred_region
          _
        $region40: #{tpu_custom_call.1} parent=11 // pred_fallthru
          _
      $region12: #{tpu_custom_call.1} parent=5 // pred_fallthru
        _
      %p276 = scmp.lt.s32.totalorder %s21, 2
      // Predicated region
      $region41: #{tpu_custom_call.1} parent=5 // pred_check
        %p277 = pneg %p276
      $region42: #{tpu_custom_call.1} parent=5 // pred_check_branch
        %279 = sbr.rel (%p277) target = $region44
      $region43: #{tpu_custom_call.1} parent=5 // pred_region
        // Predicated region
        $region45: #{tpu_custom_call.1} parent=43 // pred_check
          %p280 = pneg %p41
        $region46: #{tpu_custom_call.1} parent=43 // pred_check_branch
          %282 = sbr.rel (%p280) target = $region48
        $region47: #{tpu_custom_call.1} parent=43 // pred_region
          %s283 = sand.u32 %s31, 1
          %s284 = scalar_lea.sflag [#allocation3], %s283
          %s285 = sand.u32 %s31, 1
          %s286 = smul.addr %s285, 384
          %s287 = scalar_lea.vmem [#allocation2], %s286
          %s288 = smul.u32 16, %s21
          %s290 = ssub.s32 6144, 6144
          %291 = vsyncadd %s284, %s290
          %s292 = smul.addr %s288, 6
          %s293 = smul.addr %s292, 64
          %s294 = scalar_lea.hbm %s0, %s293
          %s295 = sshll.u32 %s287, 4
          %s296 = int_to_ptr.vmem [resolvable:$true] %s295
          %301 = dma.hbm_to_vmem [thread:$0]  %s294, 6144, %s296, %s284, 384, 384, 24
        $region48: #{tpu_custom_call.1} parent=43 // pred_fallthru
          _
      $region44: #{tpu_custom_call.1} parent=5 // pred_fallthru
        _
      %p302 = scmp.le.s32.totalorder 1, %s21
      %p303 = scmp.lt.s32.totalorder %s21, 3
      %p304 = pnand %p302, %p303
      %p305 = pneg %p304
      // Predicated region
      $region49: #{tpu_custom_call.1} parent=5 // pred_check
        _
      $region50: #{tpu_custom_call.1} parent=5 // pred_check_branch
        %307 = sbr.rel (%p304) target = $region52
      $region51: #{tpu_custom_call.1} parent=5 // pred_region
        %s308 = ssub.s32 %s21, 1
        %s309 = sand.u32 %s34, 1
        %s310 = scalar_lea.sflag [#allocation3], %s309
        %s311 = sand.u32 %s34, 1
        %s312 = smul.addr %s311, 384
        %s313 = scalar_lea.vmem [#allocation2], %s312
        // Predicated region
        $region53: #{tpu_custom_call.1} parent=51 // pred_check
          %p314 = pneg %p47
        $region54: #{tpu_custom_call.1} parent=51 // pred_check_branch
          %316 = sbr.rel (%p314) target = $region56
        $region55: #{tpu_custom_call.1} parent=51 // pred_region
          %317 = dma.done %s310, 6144
        $region56: #{tpu_custom_call.1} parent=51 // pred_fallthru
          _
        // Predicated region
        $region57: #{tpu_custom_call.1} parent=51 // pred_check
          %p318 = pneg %p110
        $region58: #{tpu_custom_call.1} parent=51 // pred_check_branch
          %320 = sbr.rel (%p318) target = $region60
        $region59: #{tpu_custom_call.1} parent=51 // pred_region
          %321 = dma.done [#allocation6], 12288
        $region60: #{tpu_custom_call.1} parent=51 // pred_fallthru
          _
        // Predicated region
        $region61: #{tpu_custom_call.1} parent=51 // pred_check
          %p322 = pneg %p131
        $region62: #{tpu_custom_call.1} parent=51 // pred_check_branch
          %324 = sbr.rel (%p322) target = $region64
        $region63: #{tpu_custom_call.1} parent=51 // pred_region
          %325 = dma.done [#allocation6], 3840
        $region64: #{tpu_custom_call.1} parent=51 // pred_fallthru
          _
        %s326 = sand.u32 %s34, 1
        %s327 = scalar_lea.sflag [#allocation3], %s326
        %s328 = sand.u32 %s34, 1
        %s329 = smul.addr %s328, 384
        %s330 = scalar_lea.vmem [#allocation2], %s329
        %p331 = pneg %p47
        %p332 = pneg %p44
        %p333 = pneg %p68
        %p334 = pneg %p65
        %p335 = pneg %p89
        %p336 = pneg %p86
        %p337 = pneg %p110
        %p338 = pneg %p107
        %p339 = pneg %p131
        %p340 = pneg %p128
        %p341 = pneg %p152
        %p342 = pneg %p149
        %p343 = pneg %p173
        %p344 = pneg %p170
        %p345 = pneg %p194
        %p346 = pneg %p191
        %p347 = pneg %p220
        %p348 = pneg %p217
        %s349 = sand.u32 %s207, 1
        %s350 = scalar_lea.sflag [#allocation4], %s349
        %s351 = sand.u32 %s207, 1
        %s352 = scalar_lea.vmem [#allocation8], %s351
        %s353 = smul.u32 16, %s26
        %v355 = vld [vmem:[%s1] sm:$0xf]
        %v356 = vld [vmem:[%s1 + $0x4] sm:$0xf]
        %v357 = vld [vmem:[%s1 + $0x8] sm:$0xf]
        %v358 = vld [vmem:[%s1 + $0xc] sm:$0xf]
        %v359 = vld [vmem:[%s313] sm:$0xff]
        %v360 = vld [vmem:[%s313 + $0x8] sm:$0xff]
        %v361 = vld [vmem:[%s313 + $0x10] sm:$0xff]
        %v362 = vld [vmem:[%s313 + $0x18] sm:$0xff]
        %v363 = vld [vmem:[%s313 + $0x20] sm:$0xff]
        %v364 = vld [vmem:[%s313 + $0x28] sm:$0xff]
        %v365 = vld [vmem:[%s313 + $0x30] sm:$0xff]
        %v366 = vld [vmem:[%s313 + $0x38] sm:$0xff]
        %v367 = vld [vmem:[%s313 + $0x40] sm:$0xff]
        %v368 = vld [vmem:[%s313 + $0x48] sm:$0xff]
        %v369 = vld [vmem:[%s313 + $0x50] sm:$0xff]
        %v370 = vld [vmem:[%s313 + $0x58] sm:$0xff]
        %v371 = vld [vmem:[%s313 + $0x60] sm:$0xff]
        %v372 = vld [vmem:[%s313 + $0x68] sm:$0xff]
        %v373 = vld [vmem:[%s313 + $0x70] sm:$0xff]
        %v374 = vld [vmem:[%s313 + $0x78] sm:$0xff]
        %v375 = vld [vmem:[%s313 + $0x80] sm:$0xff]
        %v376 = vld [vmem:[%s313 + $0x88] sm:$0xff]
        %v377 = vld [vmem:[%s313 + $0x90] sm:$0xff]
        %v378 = vld [vmem:[%s313 + $0x98] sm:$0xff]
        %v379 = vld [vmem:[%s313 + $0xa0] sm:$0xff]
        %v380 = vld [vmem:[%s313 + $0xa8] sm:$0xff]
        %v381 = vld [vmem:[%s313 + $0xb0] sm:$0xff]
        %v382 = vld [vmem:[%s313 + $0xb8] sm:$0xff]
        %v383 = vld [vmem:[%s313 + $0xc0] sm:$0xff]
        %v384 = vld [vmem:[%s313 + $0xc8] sm:$0xff]
        %v385 = vld [vmem:[%s313 + $0xd0] sm:$0xff]
        %v386 = vld [vmem:[%s313 + $0xd8] sm:$0xff]
        %v387 = vld [vmem:[%s313 + $0xe0] sm:$0xff]
        %v388 = vld [vmem:[%s313 + $0xe8] sm:$0xff]
        %v389 = vld [vmem:[%s313 + $0xf0] sm:$0xff]
        %v390 = vld [vmem:[%s313 + $0xf8] sm:$0xff]
        %v391 = vld [vmem:[%s313 + $0x100] sm:$0xff]
        %v392 = vld [vmem:[%s313 + $0x108] sm:$0xff]
        %v393 = vld [vmem:[%s313 + $0x110] sm:$0xff]
        %v394 = vld [vmem:[%s313 + $0x118] sm:$0xff]
        %v395 = vld [vmem:[%s313 + $0x120] sm:$0xff]
        %v396 = vld [vmem:[%s313 + $0x128] sm:$0xff]
        %v397 = vld [vmem:[%s313 + $0x130] sm:$0xff]
        %v398 = vld [vmem:[%s313 + $0x138] sm:$0xff]
        %v399 = vld [vmem:[%s313 + $0x140] sm:$0xff]
        %v400 = vld [vmem:[%s313 + $0x148] sm:$0xff]
        %v401 = vld [vmem:[%s313 + $0x150] sm:$0xff]
        %v402 = vld [vmem:[%s313 + $0x158] sm:$0xff]
        %v403 = vld [vmem:[%s313 + $0x160] sm:$0xff]
        %v404 = vld [vmem:[%s313 + $0x168] sm:$0xff]
        %v405 = vld [vmem:[%s313 + $0x170] sm:$0xff]
        %v406 = vld [vmem:[%s313 + $0x178] sm:$0xff]
        %v407 = vld [vmem:[%s2] sm:$0xff]
        %v408 = vld [vmem:[%s2 + $0x8] sm:$0xff]
        %v409 = vld [vmem:[%s2 + $0x10] sm:$0xff]
        %v410 = vld [vmem:[%s2 + $0x18] sm:$0xff]
        %412 = vset.pattern.permute.xlu0 0
        %413 = vperm.xlu0 %412, %v407
        %v414 = vpop.permute.xlu0 %413
        %417 = vset.pattern.permute.xlu0 0
        %418 = vperm.xlu0 %417, %v408
        %v419 = vpop.permute.xlu0 %418
        %422 = vset.pattern.permute.xlu0 0
        %423 = vperm.xlu0 %422, %v409
        %v424 = vpop.permute.xlu0 %423
        %427 = vset.pattern.permute.xlu0 0
        %428 = vperm.xlu0 %427, %v410
        %v429 = vpop.permute.xlu0 %428
        %v435 = vunpack.c.l.b16 %v355
        %v436 = vunpack.c.l.b16 %v356
        %v437 = vunpack.c.l.b16 %v357
        %v438 = vunpack.c.l.b16 %v358
        %v439 = vpack.c.b16 %v436, %v435
        %v440 = vpack.c.b16 %v438, %v437
        %v491 = vunpack.c.l.b16 %v359
        %v492 = vunpack.c.h.b16 %v359
        %v493 = vunpack.c.l.b16 %v360
        %v494 = vunpack.c.h.b16 %v360
        %v495 = vunpack.c.l.b16 %v361
        %v496 = vunpack.c.h.b16 %v361
        %v497 = vunpack.c.l.b16 %v362
        %v498 = vunpack.c.h.b16 %v362
        %v499 = vunpack.c.l.b16 %v363
        %v500 = vunpack.c.h.b16 %v363
        %v501 = vunpack.c.l.b16 %v364
        %v502 = vunpack.c.h.b16 %v364
        %v503 = vunpack.c.l.b16 %v365
        %v504 = vunpack.c.h.b16 %v365
        %v505 = vunpack.c.l.b16 %v366
        %v506 = vunpack.c.h.b16 %v366
        %v507 = vunpack.c.l.b16 %v367
        %v508 = vunpack.c.h.b16 %v367
        %v509 = vunpack.c.l.b16 %v368
        %v510 = vunpack.c.h.b16 %v368
        %v511 = vunpack.c.l.b16 %v369
        %v512 = vunpack.c.h.b16 %v369
        %v513 = vunpack.c.l.b16 %v370
        %v514 = vunpack.c.h.b16 %v370
        %v515 = vunpack.c.l.b16 %v371
        %v516 = vunpack.c.h.b16 %v371
        %v517 = vunpack.c.l.b16 %v372
        %v518 = vunpack.c.h.b16 %v372
        %v519 = vunpack.c.l.b16 %v373
        %v520 = vunpack.c.h.b16 %v373
        %v521 = vunpack.c.l.b16 %v374
        %v522 = vunpack.c.h.b16 %v374
        %v523 = vunpack.c.l.b16 %v375
        %v524 = vunpack.c.h.b16 %v375
        %v525 = vunpack.c.l.b16 %v376
        %v526 = vunpack.c.h.b16 %v376
        %v527 = vunpack.c.l.b16 %v377
        %v528 = vunpack.c.h.b16 %v377
        %v529 = vunpack.c.l.b16 %v378
        %v530 = vunpack.c.h.b16 %v378
        %v531 = vunpack.c.l.b16 %v379
        %v532 = vunpack.c.h.b16 %v379
        %v533 = vunpack.c.l.b16 %v380
        %v534 = vunpack.c.h.b16 %v380
        %v535 = vunpack.c.l.b16 %v381
        %v536 = vunpack.c.h.b16 %v381
        %v537 = vunpack.c.l.b16 %v382
        %v538 = vunpack.c.h.b16 %v382
        %v539 = vunpack.c.l.b16 %v383
        %v540 = vunpack.c.h.b16 %v383
        %v541 = vunpack.c.l.b16 %v384
        %v542 = vunpack.c.h.b16 %v384
        %v543 = vunpack.c.l.b16 %v385
        %v544 = vunpack.c.h.b16 %v385
        %v545 = vunpack.c.l.b16 %v386
        %v546 = vunpack.c.h.b16 %v386
        %v547 = vunpack.c.l.b16 %v387
        %v548 = vunpack.c.h.b16 %v387
        %v549 = vunpack.c.l.b16 %v388
        %v550 = vunpack.c.h.b16 %v388
        %v551 = vunpack.c.l.b16 %v389
        %v552 = vunpack.c.h.b16 %v389
        %v553 = vunpack.c.l.b16 %v390
        %v554 = vunpack.c.h.b16 %v390
        %v555 = vunpack.c.l.b16 %v391
        %v556 = vunpack.c.h.b16 %v391
        %v557 = vunpack.c.l.b16 %v392
        %v558 = vunpack.c.h.b16 %v392
        %v559 = vunpack.c.l.b16 %v393
        %v560 = vunpack.c.h.b16 %v393
        %v561 = vunpack.c.l.b16 %v394
        %v562 = vunpack.c.h.b16 %v394
        %v563 = vunpack.c.l.b16 %v395
        %v564 = vunpack.c.h.b16 %v395
        %v565 = vunpack.c.l.b16 %v396
        %v566 = vunpack.c.h.b16 %v396
        %v567 = vunpack.c.l.b16 %v397
        %v568 = vunpack.c.h.b16 %v397
        %v569 = vunpack.c.l.b16 %v398
        %v570 = vunpack.c.h.b16 %v398
        %v571 = vunpack.c.l.b16 %v399
        %v572 = vunpack.c.h.b16 %v399
        %v573 = vunpack.c.l.b16 %v400
        %v574 = vunpack.c.h.b16 %v400
        %v575 = vunpack.c.l.b16 %v401
        %v576 = vunpack.c.h.b16 %v401
        %v577 = vunpack.c.l.b16 %v402
        %v578 = vunpack.c.h.b16 %v402
        %v579 = vunpack.c.l.b16 %v403
        %v580 = vunpack.c.h.b16 %v403
        %v581 = vunpack.c.l.b16 %v404
        %v582 = vunpack.c.h.b16 %v404
        %v583 = vunpack.c.l.b16 %v405
        %v584 = vunpack.c.h.b16 %v405
        %v585 = vunpack.c.l.b16 %v406
        %v586 = vunpack.c.h.b16 %v406
        %v587 = vpack.c.b16 %v497, %v491
        %v588 = vpack.c.b16 %v498, %v492
        %v589 = vpack.c.b16 %v499, %v493
        %v590 = vpack.c.b16 %v500, %v494
        %v591 = vpack.c.b16 %v501, %v495
        %v592 = vpack.c.b16 %v502, %v496
        %v593 = vpack.c.b16 %v509, %v503
        %v594 = vpack.c.b16 %v510, %v504
        %v595 = vpack.c.b16 %v511, %v505
        %v596 = vpack.c.b16 %v512, %v506
        %v597 = vpack.c.b16 %v513, %v507
        %v598 = vpack.c.b16 %v514, %v508
        %v599 = vpack.c.b16 %v521, %v515
        %v600 = vpack.c.b16 %v522, %v516
        %v601 = vpack.c.b16 %v523, %v517
        %v602 = vpack.c.b16 %v524, %v518
        %v603 = vpack.c.b16 %v525, %v519
        %v604 = vpack.c.b16 %v526, %v520
        %v605 = vpack.c.b16 %v533, %v527
        %v606 = vpack.c.b16 %v534, %v528
        %v607 = vpack.c.b16 %v535, %v529
        %v608 = vpack.c.b16 %v536, %v530
        %v609 = vpack.c.b16 %v537, %v531
        %v610 = vpack.c.b16 %v538, %v532
        %v611 = vpack.c.b16 %v545, %v539
        %v612 = vpack.c.b16 %v546, %v540
        %v613 = vpack.c.b16 %v547, %v541
        %v614 = vpack.c.b16 %v548, %v542
        %v615 = vpack.c.b16 %v549, %v543
        %v616 = vpack.c.b16 %v550, %v544
        %v617 = vpack.c.b16 %v557, %v551
        %v618 = vpack.c.b16 %v558, %v552
        %v619 = vpack.c.b16 %v559, %v553
        %v620 = vpack.c.b16 %v560, %v554
        %v621 = vpack.c.b16 %v561, %v555
        %v622 = vpack.c.b16 %v562, %v556
        %v623 = vpack.c.b16 %v569, %v563
        %v624 = vpack.c.b16 %v570, %v564
        %v625 = vpack.c.b16 %v571, %v565
        %v626 = vpack.c.b16 %v572, %v566
        %v627 = vpack.c.b16 %v573, %v567
        %v628 = vpack.c.b16 %v574, %v568
        %v629 = vpack.c.b16 %v581, %v575
        %v630 = vpack.c.b16 %v582, %v576
        %v631 = vpack.c.b16 %v583, %v577
        %v632 = vpack.c.b16 %v584, %v578
        %v633 = vpack.c.b16 %v585, %v579
        %v634 = vpack.c.b16 %v586, %v580
        %683 = vmatprep.subr.bf16.mxu0 %v588
        %684 = vmatpush1.bf16.msra.mxu0 %v587
        %685 = vmatprep.subr.bf16.mxu0 %v594
        %686 = vmatpush1.bf16.msra.mxu0 %v593
        %687 = vmatprep.subr.bf16.mxu0 %v600
        %688 = vmatpush1.bf16.msra.mxu0 %v599
        %689 = vmatprep.subr.bf16.mxu0 %v606
        %690 = vmatpush1.bf16.msra.mxu0 %v605
        %691 = vmatprep.subr.bf16.mxu0 %v612
        %692 = vmatpush1.bf16.msra.mxu0 %v611
        %693 = vmatprep.subr.bf16.mxu0 %v618
        %694 = vmatpush1.bf16.msra.mxu0 %v617
        %695 = vmatprep.subr.bf16.mxu0 %v624
        %696 = vmatpush1.bf16.msra.mxu0 %v623
        %697 = vmatprep.subr.bf16.mxu0 %v630
        %698 = vmatpush1.bf16.msra.mxu0 %v629
        %699 = vmatprep.subr.bf16.mxu0 0
        %700 = vmatpush1.bf16.msra.mxu0 0
        %701 = vmatprep.subr.bf16.mxu0 0
        %702 = vmatpush1.bf16.msra.mxu0 0
        %703 = vmatprep.subr.bf16.mxu0 0
        %704 = vmatpush1.bf16.msra.mxu0 0
        %705 = vmatprep.subr.bf16.mxu0 0
        %706 = vmatpush1.bf16.msra.mxu0 0
        %707 = vmatprep.subr.bf16.mxu0 0
        %708 = vmatpush1.bf16.msra.mxu0 0
        %709 = vmatprep.subr.bf16.mxu0 0
        %710 = vmatpush1.bf16.msra.mxu0 0
        %711 = vmatprep.subr.bf16.mxu0 0
        %712 = vmatpush1.bf16.msra.mxu0 0
        %713 = vmatprep.subr.bf16.mxu0 0
        %714 = vmatpush1.bf16.msra.mxu0 0
        %715 = vmatprep.mubr.bf16.mxu0 0
        %716 = vmatmul.mubr.bf16.gmra.mrb[0].mxu0 %v439
        %v717 = vpop.f32.mrb[0].mxu0
        %v718 = vadd.f32 %v414, %v717
        %v719 = vpop.f32.mrb[0].mxu0
        %v720 = vadd.f32 %v414, %v719
        %v721 = vpop.f32.mrb[0].mxu0
        %v722 = vadd.f32 %v419, %v721
        %v723 = vpop.f32.mrb[0].mxu0
        %v724 = vadd.f32 %v419, %v723
        %725 = vmatprep.mubr.bf16.mxu0 0
        %726 = vmatmul.mubr.bf16.gmra.mrb[0].mxu0 %v440
        %v727 = vpop.f32.mrb[0].mxu0
        %v728 = vadd.f32 %v424, %v727
        %v729 = vpop.f32.mrb[0].mxu0
        %v730 = vadd.f32 %v424, %v729
        %v731 = vpop.f32.mrb[0].mxu0
        %v732 = vadd.f32 %v429, %v731
        %v733 = vpop.f32.mrb[0].mxu0
        %v734 = vadd.f32 %v429, %v733
        %735 = vdwg.mxu0
        %736 = vmatprep.subr.bf16.mxu0 %v590
        %737 = vmatpush1.bf16.msra.mxu0 %v589
        %738 = vmatprep.subr.bf16.mxu0 %v596
        %739 = vmatpush1.bf16.msra.mxu0 %v595
        %740 = vmatprep.subr.bf16.mxu0 %v602
        %741 = vmatpush1.bf16.msra.mxu0 %v601
        %742 = vmatprep.subr.bf16.mxu0 %v608
        %743 = vmatpush1.bf16.msra.mxu0 %v607
        %744 = vmatprep.subr.bf16.mxu0 %v614
        %745 = vmatpush1.bf16.msra.mxu0 %v613
        %746 = vmatprep.subr.bf16.mxu0 %v620
        %747 = vmatpush1.bf16.msra.mxu0 %v619
        %748 = vmatprep.subr.bf16.mxu0 %v626
        %749 = vmatpush1.bf16.msra.mxu0 %v625
        %750 = vmatprep.subr.bf16.mxu0 %v632
        %751 = vmatpush1.bf16.msra.mxu0 %v631
        %752 = vmatprep.subr.bf16.mxu0 0
        %753 = vmatpush1.bf16.msra.mxu0 0
        %754 = vmatprep.subr.bf16.mxu0 0
        %755 = vmatpush1.bf16.msra.mxu0 0
        %756 = vmatprep.subr.bf16.mxu0 0
        %757 = vmatpush1.bf16.msra.mxu0 0
        %758 = vmatprep.subr.bf16.mxu0 0
        %759 = vmatpush1.bf16.msra.mxu0 0
        %760 = vmatprep.subr.bf16.mxu0 0
        %761 = vmatpush1.bf16.msra.mxu0 0
        %762 = vmatprep.subr.bf16.mxu0 0
        %763 = vmatpush1.bf16.msra.mxu0 0
        %764 = vmatprep.subr.bf16.mxu0 0
        %765 = vmatpush1.bf16.msra.mxu0 0
        %766 = vmatprep.subr.bf16.mxu0 0
        %767 = vmatpush1.bf16.msra.mxu0 0
        %768 = vmatprep.mubr.bf16.mxu0 0
        %769 = vmatmul.mubr.bf16.gmra.mrb[0].mxu0 %v439
        %v770 = vpop.f32.mrb[0].mxu0
        %v771 = vadd.f32 %v414, %v770
        %v772 = vpop.f32.mrb[0].mxu0
        %v773 = vadd.f32 %v414, %v772
        %v774 = vpop.f32.mrb[0].mxu0
        %v775 = vadd.f32 %v419, %v774
        %v776 = vpop.f32.mrb[0].mxu0
        %v777 = vadd.f32 %v419, %v776
        %778 = vmatprep.mubr.bf16.mxu0 0
        %779 = vmatmul.mubr.bf16.gmra.mrb[0].mxu0 %v440
        %v780 = vpop.f32.mrb[0].mxu0
        %v781 = vadd.f32 %v424, %v780
        %v782 = vpop.f32.mrb[0].mxu0
        %v783 = vadd.f32 %v424, %v782
        %v784 = vpop.f32.mrb[0].mxu0
        %v785 = vadd.f32 %v429, %v784
        %v786 = vpop.f32.mrb[0].mxu0
        %v787 = vadd.f32 %v429, %v786
        %788 = vdwg.mxu0
        %789 = vmatprep.subr.bf16.mxu0 %v592
        %790 = vmatpush1.bf16.msra.mxu0 %v591
        %791 = vmatprep.subr.bf16.mxu0 %v598
        %792 = vmatpush1.bf16.msra.mxu0 %v597
        %793 = vmatprep.subr.bf16.mxu0 %v604
        %794 = vmatpush1.bf16.msra.mxu0 %v603
        %795 = vmatprep.subr.bf16.mxu0 %v610
        %796 = vmatpush1.bf16.msra.mxu0 %v609
        %797 = vmatprep.subr.bf16.mxu0 %v616
        %798 = vmatpush1.bf16.msra.mxu0 %v615
        %799 = vmatprep.subr.bf16.mxu0 %v622
        %800 = vmatpush1.bf16.msra.mxu0 %v621
        %801 = vmatprep.subr.bf16.mxu0 %v628
        %802 = vmatpush1.bf16.msra.mxu0 %v627
        %803 = vmatprep.subr.bf16.mxu0 %v634
        %804 = vmatpush1.bf16.msra.mxu0 %v633
        %805 = vmatprep.subr.bf16.mxu0 0
        %806 = vmatpush1.bf16.msra.mxu0 0
        %807 = vmatprep.subr.bf16.mxu0 0
        %808 = vmatpush1.bf16.msra.mxu0 0
        %809 = vmatprep.subr.bf16.mxu0 0
        %810 = vmatpush1.bf16.msra.mxu0 0
        %811 = vmatprep.subr.bf16.mxu0 0
        %812 = vmatpush1.bf16.msra.mxu0 0
        %813 = vmatprep.subr.bf16.mxu0 0
        %814 = vmatpush1.bf16.msra.mxu0 0
        %815 = vmatprep.subr.bf16.mxu0 0
        %816 = vmatpush1.bf16.msra.mxu0 0
        %817 = vmatprep.subr.bf16.mxu0 0
        %818 = vmatpush1.bf16.msra.mxu0 0
        %819 = vmatprep.subr.bf16.mxu0 0
        %820 = vmatpush1.bf16.msra.mxu0 0
        %821 = vmatprep.mubr.bf16.mxu0 0
        %822 = vmatmul.mubr.bf16.gmra.mrb[0].mxu0 %v439
        %v823 = vpop.f32.mrb[0].mxu0
        %v824 = vadd.f32 %v414, %v823
        %v825 = vpop.f32.mrb[0].mxu0
        %v826 = vadd.f32 %v414, %v825
        %v827 = vpop.f32.mrb[0].mxu0
        %v828 = vadd.f32 %v419, %v827
        %v829 = vpop.f32.mrb[0].mxu0
        %v830 = vadd.f32 %v419, %v829
        %831 = vmatprep.mubr.bf16.mxu0 0
        %832 = vmatmul.mubr.bf16.gmra.mrb[0].mxu0 %v440
        %v833 = vpop.f32.mrb[0].mxu0
        %v834 = vadd.f32 %v424, %v833
        %v835 = vpop.f32.mrb[0].mxu0
        %v836 = vadd.f32 %v424, %v835
        %v837 = vpop.f32.mrb[0].mxu0
        %v838 = vadd.f32 %v429, %v837
        %v839 = vpop.f32.mrb[0].mxu0
        %v840 = vadd.f32 %v429, %v839
        %841 = vdwg.mxu0
        %v842 = vmax.f32 %v718, 0.0
        %v843 = vmax.f32 %v720, 0.0
        %v844 = vmax.f32 %v771, 0.0
        %v845 = vmax.f32 %v773, 0.0
        %v846 = vmax.f32 %v824, 0.0
        %v847 = vmax.f32 %v826, 0.0
        %v848 = vmax.f32 %v722, 0.0
        %v849 = vmax.f32 %v724, 0.0
        %v850 = vmax.f32 %v775, 0.0
        %v851 = vmax.f32 %v777, 0.0
        %v852 = vmax.f32 %v828, 0.0
        %v853 = vmax.f32 %v830, 0.0
        %v854 = vmax.f32 %v728, 0.0
        %v855 = vmax.f32 %v730, 0.0
        %v856 = vmax.f32 %v781, 0.0
        %v857 = vmax.f32 %v783, 0.0
        %v858 = vmax.f32 %v834, 0.0
        %v859 = vmax.f32 %v836, 0.0
        %v860 = vmax.f32 %v732, 0.0
        %v861 = vmax.f32 %v734, 0.0
        %v862 = vmax.f32 %v785, 0.0
        %v863 = vmax.f32 %v787, 0.0
        %v864 = vmax.f32 %v838, 0.0
        %v865 = vmax.f32 %v840, 0.0
        %v866 = vpack.c.bf16 %v848, %v842
        %v867 = vpack.c.bf16 %v849, %v843
        %v868 = vpack.c.bf16 %v850, %v844
        %v869 = vpack.c.bf16 %v851, %v845
        %v870 = vpack.c.bf16 %v852, %v846
        %v871 = vpack.c.bf16 %v853, %v847
        %v872 = vpack.c.bf16 %v860, %v854
        %v873 = vpack.c.bf16 %v861, %v855
        %v874 = vpack.c.bf16 %v862, %v856
        %v875 = vpack.c.bf16 %v863, %v857
        %v876 = vpack.c.bf16 %v864, %v858
        %v877 = vpack.c.bf16 %v865, %v859
        %v878 = vld [vmem:[#allocation5] sm:$0xff]
        %v879 = vld [vmem:[#allocation5 + $0x8] sm:$0xff]
        %v880 = vld [vmem:[#allocation5 + $0x10] sm:$0xff]
        %v881 = vld [vmem:[#allocation5 + $0x18] sm:$0xff]
        %v882 = vld [vmem:[#allocation5 + $0x20] sm:$0xff]
        %v883 = vld [vmem:[#allocation5 + $0x28] sm:$0xff]
        %v884 = vld [vmem:[#allocation5 + $0x30] sm:$0xff]
        %v885 = vld [vmem:[#allocation5 + $0x38] sm:$0xff]
        %v886 = vld [vmem:[#allocation5 + $0x40] sm:$0xff]
        %v887 = vld [vmem:[#allocation5 + $0x48] sm:$0xff]
        %v888 = vld [vmem:[#allocation5 + $0x50] sm:$0xff]
        %v889 = vld [vmem:[#allocation5 + $0x58] sm:$0xff]
        %v890 = vld [vmem:[#allocation5 + $0x60] sm:$0xff]
        %v891 = vld [vmem:[#allocation5 + $0x68] sm:$0xff]
        %v892 = vld [vmem:[#allocation5 + $0x70] sm:$0xff]
        %v893 = vld [vmem:[#allocation5 + $0x78] sm:$0xff]
        %v894 = vld [vmem:[#allocation5 + $0x80] sm:$0xff]
        %v895 = vld [vmem:[#allocation5 + $0x88] sm:$0xff]
        %v896 = vld [vmem:[#allocation5 + $0x90] sm:$0xff]
        %v897 = vld [vmem:[#allocation5 + $0x98] sm:$0xff]
        %v898 = vld [vmem:[#allocation5 + $0xa0] sm:$0xff]
        %v899 = vld [vmem:[#allocation5 + $0xa8] sm:$0xff]
        %v900 = vld [vmem:[#allocation5 + $0xb0] sm:$0xff]
        %v901 = vld [vmem:[#allocation5 + $0xb8] sm:$0xff]
        %v902 = vld [vmem:[#allocation5 + $0xc0] sm:$0xff]
        %v903 = vld [vmem:[#allocation5 + $0xc8] sm:$0xff]
        %v904 = vld [vmem:[#allocation5 + $0xd0] sm:$0xff]
        %v905 = vld [vmem:[#allocation5 + $0xd8] sm:$0xff]
        %v906 = vld [vmem:[#allocation5 + $0xe0] sm:$0xff]
        %v907 = vld [vmem:[#allocation5 + $0xe8] sm:$0xff]
        %v908 = vld [vmem:[#allocation5 + $0xf0] sm:$0xff]
        %v909 = vld [vmem:[#allocation5 + $0xf8] sm:$0xff]
        %v910 = vld [vmem:[#allocation5 + $0x100] sm:$0xff]
        %v911 = vld [vmem:[#allocation5 + $0x108] sm:$0xff]
        %v912 = vld [vmem:[#allocation5 + $0x110] sm:$0xff]
        %v913 = vld [vmem:[#allocation5 + $0x118] sm:$0xff]
        %v914 = vld [vmem:[#allocation5 + $0x120] sm:$0xff]
        %v915 = vld [vmem:[#allocation5 + $0x128] sm:$0xff]
        %v916 = vld [vmem:[#allocation5 + $0x130] sm:$0xff]
        %v917 = vld [vmem:[#allocation5 + $0x138] sm:$0xff]
        %v918 = vld [vmem:[#allocation5 + $0x140] sm:$0xff]
        %v919 = vld [vmem:[#allocation5 + $0x148] sm:$0xff]
        %v920 = vld [vmem:[#allocation5 + $0x150] sm:$0xff]
        %v921 = vld [vmem:[#allocation5 + $0x158] sm:$0xff]
        %v922 = vld [vmem:[#allocation5 + $0x160] sm:$0xff]
        %v923 = vld [vmem:[#allocation5 + $0x168] sm:$0xff]
        %v924 = vld [vmem:[#allocation5 + $0x170] sm:$0xff]
        %v925 = vld [vmem:[#allocation5 + $0x178] sm:$0xff]
        %v926 = vld [vmem:[#allocation5 + $0x180] sm:$0xff]
        %v927 = vld [vmem:[#allocation5 + $0x188] sm:$0xff]
        %v928 = vld [vmem:[#allocation5 + $0x190] sm:$0xff]
        %v929 = vld [vmem:[#allocation5 + $0x198] sm:$0xff]
        %v930 = vld [vmem:[#allocation5 + $0x1a0] sm:$0xff]
        %v931 = vld [vmem:[#allocation5 + $0x1a8] sm:$0xff]
        %v932 = vld [vmem:[#allocation5 + $0x1b0] sm:$0xff]
        %v933 = vld [vmem:[#allocation5 + $0x1b8] sm:$0xff]
        %v934 = vld [vmem:[#allocation5 + $0x1c0] sm:$0xff]
        %v935 = vld [vmem:[#allocation5 + $0x1c8] sm:$0xff]
        %v936 = vld [vmem:[#allocation5 + $0x1d0] sm:$0xff]
        %v937 = vld [vmem:[#allocation5 + $0x1d8] sm:$0xff]
        %v938 = vld [vmem:[#allocation5 + $0x1e0] sm:$0xff]
        %v939 = vld [vmem:[#allocation5 + $0x1e8] sm:$0xff]
        %v940 = vld [vmem:[#allocation5 + $0x1f0] sm:$0xff]
        %v941 = vld [vmem:[#allocation5 + $0x1f8] sm:$0xff]
        %v942 = vld [vmem:[#allocation5 + $0x200] sm:$0xff]
        %v943 = vld [vmem:[#allocation5 + $0x208] sm:$0xff]
        %v944 = vld [vmem:[#allocation5 + $0x210] sm:$0xff]
        %v945 = vld [vmem:[#allocation5 + $0x218] sm:$0xff]
        %v946 = vld [vmem:[#allocation5 + $0x220] sm:$0xff]
        %v947 = vld [vmem:[#allocation5 + $0x228] sm:$0xff]
        %v948 = vld [vmem:[#allocation5 + $0x230] sm:$0xff]
        %v949 = vld [vmem:[#allocation5 + $0x238] sm:$0xff]
        %v950 = vld [vmem:[#allocation5 + $0x240] sm:$0xff]
        %v951 = vld [vmem:[#allocation5 + $0x248] sm:$0xff]
        %v952 = vld [vmem:[#allocation5 + $0x250] sm:$0xff]
        %v953 = vld [vmem:[#allocation5 + $0x258] sm:$0xff]
        %v954 = vld [vmem:[#allocation5 + $0x260] sm:$0xff]
        %v955 = vld [vmem:[#allocation5 + $0x268] sm:$0xff]
        %v956 = vld [vmem:[#allocation5 + $0x270] sm:$0xff]
        %v957 = vld [vmem:[#allocation5 + $0x278] sm:$0xff]
        %v958 = vld [vmem:[#allocation5 + $0x280] sm:$0xff]
        %v959 = vld [vmem:[#allocation5 + $0x288] sm:$0xff]
        %v960 = vld [vmem:[#allocation5 + $0x290] sm:$0xff]
        %v961 = vld [vmem:[#allocation5 + $0x298] sm:$0xff]
        %v962 = vld [vmem:[#allocation5 + $0x2a0] sm:$0xff]
        %v963 = vld [vmem:[#allocation5 + $0x2a8] sm:$0xff]
        %v964 = vld [vmem:[#allocation5 + $0x2b0] sm:$0xff]
        %v965 = vld [vmem:[#allocation5 + $0x2b8] sm:$0xff]
        %v966 = vld [vmem:[#allocation5 + $0x2c0] sm:$0xff]
        %v967 = vld [vmem:[#allocation5 + $0x2c8] sm:$0xff]
        %v968 = vld [vmem:[#allocation5 + $0x2d0] sm:$0xff]
        %v969 = vld [vmem:[#allocation5 + $0x2d8] sm:$0xff]
        %v970 = vld [vmem:[#allocation5 + $0x2e0] sm:$0xff]
        %v971 = vld [vmem:[#allocation5 + $0x2e8] sm:$0xff]
        %v972 = vld [vmem:[#allocation5 + $0x2f0] sm:$0xff]
        %v973 = vld [vmem:[#allocation5 + $0x2f8] sm:$0xff]
        %v1070 = vunpack.c.l.b16 %v878
        %v1071 = vunpack.c.h.b16 %v878
        %v1072 = vunpack.c.l.b16 %v879
        %v1073 = vunpack.c.h.b16 %v879
        %v1074 = vunpack.c.l.b16 %v880
        %v1075 = vunpack.c.h.b16 %v880
        %v1076 = vunpack.c.l.b16 %v881
        %v1077 = vunpack.c.h.b16 %v881
        %v1078 = vunpack.c.l.b16 %v882
        %v1079 = vunpack.c.h.b16 %v882
        %v1080 = vunpack.c.l.b16 %v883
        %v1081 = vunpack.c.h.b16 %v883
        %v1082 = vunpack.c.l.b16 %v884
        %v1083 = vunpack.c.h.b16 %v884
        %v1084 = vunpack.c.l.b16 %v885
        %v1085 = vunpack.c.h.b16 %v885
        %v1086 = vunpack.c.l.b16 %v886
        %v1087 = vunpack.c.h.b16 %v886
        %v1088 = vunpack.c.l.b16 %v887
        %v1089 = vunpack.c.h.b16 %v887
        %v1090 = vunpack.c.l.b16 %v888
        %v1091 = vunpack.c.h.b16 %v888
        %v1092 = vunpack.c.l.b16 %v889
        %v1093 = vunpack.c.h.b16 %v889
        %v1094 = vunpack.c.l.b16 %v890
        %v1095 = vunpack.c.h.b16 %v890
        %v1096 = vunpack.c.l.b16 %v891
        %v1097 = vunpack.c.h.b16 %v891
        %v1098 = vunpack.c.l.b16 %v892
        %v1099 = vunpack.c.h.b16 %v892
        %v1100 = vunpack.c.l.b16 %v893
        %v1101 = vunpack.c.h.b16 %v893
        %v1102 = vunpack.c.l.b16 %v894
        %v1103 = vunpack.c.h.b16 %v894
        %v1104 = vunpack.c.l.b16 %v895
        %v1105 = vunpack.c.h.b16 %v895
        %v1106 = vunpack.c.l.b16 %v896
        %v1107 = vunpack.c.h.b16 %v896
        %v1108 = vunpack.c.l.b16 %v897
        %v1109 = vunpack.c.h.b16 %v897
        %v1110 = vunpack.c.l.b16 %v898
        %v1111 = vunpack.c.h.b16 %v898
        %v1112 = vunpack.c.l.b16 %v899
        %v1113 = vunpack.c.h.b16 %v899
        %v1114 = vunpack.c.l.b16 %v900
        %v1115 = vunpack.c.h.b16 %v900
        %v1116 = vunpack.c.l.b16 %v901
        %v1117 = vunpack.c.h.b16 %v901
        %v1118 = vunpack.c.l.b16 %v902
        %v1119 = vunpack.c.h.b16 %v902
        %v1120 = vunpack.c.l.b16 %v903
        %v1121 = vunpack.c.h.b16 %v903
        %v1122 = vunpack.c.l.b16 %v904
        %v1123 = vunpack.c.h.b16 %v904
        %v1124 = vunpack.c.l.b16 %v905
        %v1125 = vunpack.c.h.b16 %v905
        %v1126 = vunpack.c.l.b16 %v906
        %v1127 = vunpack.c.h.b16 %v906
        %v1128 = vunpack.c.l.b16 %v907
        %v1129 = vunpack.c.h.b16 %v907
        %v1130 = vunpack.c.l.b16 %v908
        %v1131 = vunpack.c.h.b16 %v908
        %v1132 = vunpack.c.l.b16 %v909
        %v1133 = vunpack.c.h.b16 %v909
        %v1134 = vunpack.c.l.b16 %v910
        %v1135 = vunpack.c.h.b16 %v910
        %v1136 = vunpack.c.l.b16 %v911
        %v1137 = vunpack.c.h.b16 %v911
        %v1138 = vunpack.c.l.b16 %v912
        %v1139 = vunpack.c.h.b16 %v912
        %v1140 = vunpack.c.l.b16 %v913
        %v1141 = vunpack.c.h.b16 %v913
        %v1142 = vunpack.c.l.b16 %v914
        %v1143 = vunpack.c.h.b16 %v914
        %v1144 = vunpack.c.l.b16 %v915
        %v1145 = vunpack.c.h.b16 %v915
        %v1146 = vunpack.c.l.b16 %v916
        %v1147 = vunpack.c.h.b16 %v916
        %v1148 = vunpack.c.l.b16 %v917
        %v1149 = vunpack.c.h.b16 %v917
        %v1150 = vunpack.c.l.b16 %v918
        %v1151 = vunpack.c.h.b16 %v918
        %v1152 = vunpack.c.l.b16 %v919
        %v1153 = vunpack.c.h.b16 %v919
        %v1154 = vunpack.c.l.b16 %v920
        %v1155 = vunpack.c.h.b16 %v920
        %v1156 = vunpack.c.l.b16 %v921
        %v1157 = vunpack.c.h.b16 %v921
        %v1158 = vunpack.c.l.b16 %v922
        %v1159 = vunpack.c.h.b16 %v922
        %v1160 = vunpack.c.l.b16 %v923
        %v1161 = vunpack.c.h.b16 %v923
        %v1162 = vunpack.c.l.b16 %v924
        %v1163 = vunpack.c.h.b16 %v924
        %v1164 = vunpack.c.l.b16 %v925
        %v1165 = vunpack.c.h.b16 %v925
        %v1166 = vunpack.c.l.b16 %v926
        %v1167 = vunpack.c.h.b16 %v926
        %v1168 = vunpack.c.l.b16 %v927
        %v1169 = vunpack.c.h.b16 %v927
        %v1170 = vunpack.c.l.b16 %v928
        %v1171 = vunpack.c.h.b16 %v928
        %v1172 = vunpack.c.l.b16 %v929
        %v1173 = vunpack.c.h.b16 %v929
        %v1174 = vunpack.c.l.b16 %v930
        %v1175 = vunpack.c.h.b16 %v930
        %v1176 = vunpack.c.l.b16 %v931
        %v1177 = vunpack.c.h.b16 %v931
        %v1178 = vunpack.c.l.b16 %v932
        %v1179 = vunpack.c.h.b16 %v932
        %v1180 = vunpack.c.l.b16 %v933
        %v1181 = vunpack.c.h.b16 %v933
        %v1182 = vunpack.c.l.b16 %v934
        %v1183 = vunpack.c.h.b16 %v934
        %v1184 = vunpack.c.l.b16 %v935
        %v1185 = vunpack.c.h.b16 %v935
        %v1186 = vunpack.c.l.b16 %v936
        %v1187 = vunpack.c.h.b16 %v936
        %v1188 = vunpack.c.l.b16 %v937
        %v1189 = vunpack.c.h.b16 %v937
        %v1190 = vunpack.c.l.b16 %v938
        %v1191 = vunpack.c.h.b16 %v938
        %v1192 = vunpack.c.l.b16 %v939
        %v1193 = vunpack.c.h.b16 %v939
        %v1194 = vunpack.c.l.b16 %v940
        %v1195 = vunpack.c.h.b16 %v940
        %v1196 = vunpack.c.l.b16 %v941
        %v1197 = vunpack.c.h.b16 %v941
        %v1198 = vunpack.c.l.b16 %v942
        %v1199 = vunpack.c.h.b16 %v942
        %v1200 = vunpack.c.l.b16 %v943
        %v1201 = vunpack.c.h.b16 %v943
        %v1202 = vunpack.c.l.b16 %v944
        %v1203 = vunpack.c.h.b16 %v944
        %v1204 = vunpack.c.l.b16 %v945
        %v1205 = vunpack.c.h.b16 %v945
        %v1206 = vunpack.c.l.b16 %v946
        %v1207 = vunpack.c.h.b16 %v946
        %v1208 = vunpack.c.l.b16 %v947
        %v1209 = vunpack.c.h.b16 %v947
        %v1210 = vunpack.c.l.b16 %v948
        %v1211 = vunpack.c.h.b16 %v948
        %v1212 = vunpack.c.l.b16 %v949
        %v1213 = vunpack.c.h.b16 %v949
        %v1214 = vunpack.c.l.b16 %v950
        %v1215 = vunpack.c.h.b16 %v950
        %v1216 = vunpack.c.l.b16 %v951
        %v1217 = vunpack.c.h.b16 %v951
        %v1218 = vunpack.c.l.b16 %v952
        %v1219 = vunpack.c.h.b16 %v952
        %v1220 = vunpack.c.l.b16 %v953
        %v1221 = vunpack.c.h.b16 %v953
        %v1222 = vunpack.c.l.b16 %v954
        %v1223 = vunpack.c.h.b16 %v954
        %v1224 = vunpack.c.l.b16 %v955
        %v1225 = vunpack.c.h.b16 %v955
        %v1226 = vunpack.c.l.b16 %v956
        %v1227 = vunpack.c.h.b16 %v956
        %v1228 = vunpack.c.l.b16 %v957
        %v1229 = vunpack.c.h.b16 %v957
        %v1230 = vunpack.c.l.b16 %v958
        %v1231 = vunpack.c.h.b16 %v958
        %v1232 = vunpack.c.l.b16 %v959
        %v1233 = vunpack.c.h.b16 %v959
        %v1234 = vunpack.c.l.b16 %v960
        %v1235 = vunpack.c.h.b16 %v960
        %v1236 = vunpack.c.l.b16 %v961
        %v1237 = vunpack.c.h.b16 %v961
        %v1238 = vunpack.c.l.b16 %v962
        %v1239 = vunpack.c.h.b16 %v962
        %v1240 = vunpack.c.l.b16 %v963
        %v1241 = vunpack.c.h.b16 %v963
        %v1242 = vunpack.c.l.b16 %v964
        %v1243 = vunpack.c.h.b16 %v964
        %v1244 = vunpack.c.l.b16 %v965
        %v1245 = vunpack.c.h.b16 %v965
        %v1246 = vunpack.c.l.b16 %v966
        %v1247 = vunpack.c.h.b16 %v966
        %v1248 = vunpack.c.l.b16 %v967
        %v1249 = vunpack.c.h.b16 %v967
        %v1250 = vunpack.c.l.b16 %v968
        %v1251 = vunpack.c.h.b16 %v968
        %v1252 = vunpack.c.l.b16 %v969
        %v1253 = vunpack.c.h.b16 %v969
        %v1254 = vunpack.c.l.b16 %v970
        %v1255 = vunpack.c.h.b16 %v970
        %v1256 = vunpack.c.l.b16 %v971
        %v1257 = vunpack.c.h.b16 %v971
        %v1258 = vunpack.c.l.b16 %v972
        %v1259 = vunpack.c.h.b16 %v972
        %v1260 = vunpack.c.l.b16 %v973
        %v1261 = vunpack.c.h.b16 %v973
        %v1262 = vpack.c.b16 %v1072, %v1070
        %v1263 = vpack.c.b16 %v1073, %v1071
        %v1264 = vpack.c.b16 %v1076, %v1074
        %v1265 = vpack.c.b16 %v1077, %v1075
        %v1266 = vpack.c.b16 %v1080, %v1078
        %v1267 = vpack.c.b16 %v1081, %v1079
        %v1268 = vpack.c.b16 %v1084, %v1082
        %v1269 = vpack.c.b16 %v1085, %v1083
        %v1270 = vpack.c.b16 %v1088, %v1086
        %v1271 = vpack.c.b16 %v1089, %v1087
        %v1272 = vpack.c.b16 %v1092, %v1090
        %v1273 = vpack.c.b16 %v1093, %v1091
        %v1274 = vpack.c.b16 %v1096, %v1094
        %v1275 = vpack.c.b16 %v1097, %v1095
        %v1276 = vpack.c.b16 %v1100, %v1098
        %v1277 = vpack.c.b16 %v1101, %v1099
        %v1278 = vpack.c.b16 %v1104, %v1102
        %v1279 = vpack.c.b16 %v1105, %v1103
        %v1280 = vpack.c.b16 %v1108, %v1106
        %v1281 = vpack.c.b16 %v1109, %v1107
        %v1282 = vpack.c.b16 %v1112, %v1110
        %v1283 = vpack.c.b16 %v1113, %v1111
        %v1284 = vpack.c.b16 %v1116, %v1114
        %v1285 = vpack.c.b16 %v1117, %v1115
        %v1286 = vpack.c.b16 %v1120, %v1118
        %v1287 = vpack.c.b16 %v1121, %v1119
        %v1288 = vpack.c.b16 %v1124, %v1122
        %v1289 = vpack.c.b16 %v1125, %v1123
        %v1290 = vpack.c.b16 %v1128, %v1126
        %v1291 = vpack.c.b16 %v1129, %v1127
        %v1292 = vpack.c.b16 %v1132, %v1130
        %v1293 = vpack.c.b16 %v1133, %v1131
        %v1294 = vpack.c.b16 %v1136, %v1134
        %v1295 = vpack.c.b16 %v1137, %v1135
        %v1296 = vpack.c.b16 %v1140, %v1138
        %v1297 = vpack.c.b16 %v1141, %v1139
        %v1298 = vpack.c.b16 %v1144, %v1142
        %v1299 = vpack.c.b16 %v1145, %v1143
        %v1300 = vpack.c.b16 %v1148, %v1146
        %v1301 = vpack.c.b16 %v1149, %v1147
        %v1302 = vpack.c.b16 %v1152, %v1150
        %v1303 = vpack.c.b16 %v1153, %v1151
        %v1304 = vpack.c.b16 %v1156, %v1154
        %v1305 = vpack.c.b16 %v1157, %v1155
        %v1306 = vpack.c.b16 %v1160, %v1158
        %v1307 = vpack.c.b16 %v1161, %v1159
        %v1308 = vpack.c.b16 %v1164, %v1162
        %v1309 = vpack.c.b16 %v1165, %v1163
        %v1310 = vpack.c.b16 %v1168, %v1166
        %v1311 = vpack.c.b16 %v1169, %v1167
        %v1312 = vpack.c.b16 %v1172, %v1170
        %v1313 = vpack.c.b16 %v1173, %v1171
        %v1314 = vpack.c.b16 %v1176, %v1174
        %v1315 = vpack.c.b16 %v1177, %v1175
        %v1316 = vpack.c.b16 %v1180, %v1178
        %v1317 = vpack.c.b16 %v1181, %v1179
        %v1318 = vpack.c.b16 %v1184, %v1182
        %v1319 = vpack.c.b16 %v1185, %v1183
        %v1320 = vpack.c.b16 %v1188, %v1186
        %v1321 = vpack.c.b16 %v1189, %v1187
        %v1322 = vpack.c.b16 %v1192, %v1190
        %v1323 = vpack.c.b16 %v1193, %v1191
        %v1324 = vpack.c.b16 %v1196, %v1194
        %v1325 = vpack.c.b16 %v1197, %v1195
        %v1326 = vpack.c.b16 %v1200, %v1198
        %v1327 = vpack.c.b16 %v1201, %v1199
        %v1328 = vpack.c.b16 %v1204, %v1202
        %v1329 = vpack.c.b16 %v1205, %v1203
        %v1330 = vpack.c.b16 %v1208, %v1206
        %v1331 = vpack.c.b16 %v1209, %v1207
        %v1332 = vpack.c.b16 %v1212, %v1210
        %v1333 = vpack.c.b16 %v1213, %v1211
        %v1334 = vpack.c.b16 %v1216, %v1214
        %v1335 = vpack.c.b16 %v1217, %v1215
        %v1336 = vpack.c.b16 %v1220, %v1218
        %v1337 = vpack.c.b16 %v1221, %v1219
        %v1338 = vpack.c.b16 %v1224, %v1222
        %v1339 = vpack.c.b16 %v1225, %v1223
        %v1340 = vpack.c.b16 %v1228, %v1226
        %v1341 = vpack.c.b16 %v1229, %v1227
        %v1342 = vpack.c.b16 %v1232, %v1230
        %v1343 = vpack.c.b16 %v1233, %v1231
        %v1344 = vpack.c.b16 %v1236, %v1234
        %v1345 = vpack.c.b16 %v1237, %v1235
        %v1346 = vpack.c.b16 %v1240, %v1238
        %v1347 = vpack.c.b16 %v1241, %v1239
        %v1348 = vpack.c.b16 %v1244, %v1242
        %v1349 = vpack.c.b16 %v1245, %v1243
        %v1350 = vpack.c.b16 %v1248, %v1246
        %v1351 = vpack.c.b16 %v1249, %v1247
        %v1352 = vpack.c.b16 %v1252, %v1250
        %v1353 = vpack.c.b16 %v1253, %v1251
        %v1354 = vpack.c.b16 %v1256, %v1254
        %v1355 = vpack.c.b16 %v1257, %v1255
        %v1356 = vpack.c.b16 %v1260, %v1258
        %v1357 = vpack.c.b16 %v1261, %v1259
        %1454 = vmatprep.subr.bf16.mxu0 %v1263
        %1455 = vmatpush1.bf16.msra.mxu0 %v1262
        %1456 = vmatprep.subr.bf16.mxu0 %v1265
        %1457 = vmatpush1.bf16.msra.mxu0 %v1264
        %1458 = vmatprep.subr.bf16.mxu0 %v1267
        %1459 = vmatpush1.bf16.msra.mxu0 %v1266
        %1460 = vmatprep.subr.bf16.mxu0 %v1269
        %1461 = vmatpush1.bf16.msra.mxu0 %v1268
        %1462 = vmatprep.subr.bf16.mxu0 %v1271
        %1463 = vmatpush1.bf16.msra.mxu0 %v1270
        %1464 = vmatprep.subr.bf16.mxu0 %v1273
        %1465 = vmatpush1.bf16.msra.mxu0 %v1272
        %1466 = vmatprep.subr.bf16.mxu0 %v1275
        %1467 = vmatpush1.bf16.msra.mxu0 %v1274
        %1468 = vmatprep.subr.bf16.mxu0 %v1277
        %1469 = vmatpush1.bf16.msra.mxu0 %v1276
        %1470 = vmatprep.subr.bf16.mxu0 %v1279
        %1471 = vmatpush1.bf16.msra.mxu0 %v1278
        %1472 = vmatprep.subr.bf16.mxu0 %v1281
        %1473 = vmatpush1.bf16.msra.mxu0 %v1280
        %1474 = vmatprep.subr.bf16.mxu0 %v1283
        %1475 = vmatpush1.bf16.msra.mxu0 %v1282
        %1476 = vmatprep.subr.bf16.mxu0 %v1285
        %1477 = vmatpush1.bf16.msra.mxu0 %v1284
        %1478 = vmatprep.subr.bf16.mxu0 %v1287
        %1479 = vmatpush1.bf16.msra.mxu0 %v1286
        %1480 = vmatprep.subr.bf16.mxu0 %v1289
        %1481 = vmatpush1.bf16.msra.mxu0 %v1288
        %1482 = vmatprep.subr.bf16.mxu0 %v1291
        %1483 = vmatpush1.bf16.msra.mxu0 %v1290
        %1484 = vmatprep.subr.bf16.mxu0 %v1293
        %1485 = vmatpush1.bf16.msra.mxu0 %v1292
        %1486 = vmatprep.mubr.bf16.mxu0 %v867
        %1487 = vmatmul.mubr.bf16.gmra.mrb[0].mxu0 %v866
        %v1488 = vpop.f32.mrb[0].mxu0
        %v1489 = vadd.f32 0.0, %v1488
        %v1490 = vpop.f32.mrb[0].mxu0
        %v1491 = vadd.f32 0.0, %v1490
        %v1492 = vpop.f32.mrb[0].mxu0
        %v1493 = vadd.f32 0.0, %v1492
        %v1494 = vpop.f32.mrb[0].mxu0
        %v1495 = vadd.f32 0.0, %v1494
        %1496 = vmatprep.mubr.bf16.mxu0 %v873
        %1497 = vmatmul.mubr.bf16.gmra.mrb[0].mxu0 %v872
        %v1498 = vpop.f32.mrb[0].mxu0
        %v1499 = vadd.f32 0.0, %v1498
        %v1500 = vpop.f32.mrb[0].mxu0
        %v1501 = vadd.f32 0.0, %v1500
        %v1502 = vpop.f32.mrb[0].mxu0
        %v1503 = vadd.f32 0.0, %v1502
        %v1504 = vpop.f32.mrb[0].mxu0
        %v1505 = vadd.f32 0.0, %v1504
        %1506 = vdwg.mxu0
        %1507 = vmatprep.subr.bf16.mxu0 %v1295
        %1508 = vmatpush1.bf16.msra.mxu0 %v1294
        %1509 = vmatprep.subr.bf16.mxu0 %v1297
        %1510 = vmatpush1.bf16.msra.mxu0 %v1296
        %1511 = vmatprep.subr.bf16.mxu0 %v1299
        %1512 = vmatpush1.bf16.msra.mxu0 %v1298
        %1513 = vmatprep.subr.bf16.mxu0 %v1301
        %1514 = vmatpush1.bf16.msra.mxu0 %v1300
        %1515 = vmatprep.subr.bf16.mxu0 %v1303
        %1516 = vmatpush1.bf16.msra.mxu0 %v1302
        %1517 = vmatprep.subr.bf16.mxu0 %v1305
        %1518 = vmatpush1.bf16.msra.mxu0 %v1304
        %1519 = vmatprep.subr.bf16.mxu0 %v1307
        %1520 = vmatpush1.bf16.msra.mxu0 %v1306
        %1521 = vmatprep.subr.bf16.mxu0 %v1309
        %1522 = vmatpush1.bf16.msra.mxu0 %v1308
        %1523 = vmatprep.subr.bf16.mxu0 %v1311
        %1524 = vmatpush1.bf16.msra.mxu0 %v1310
        %1525 = vmatprep.subr.bf16.mxu0 %v1313
        %1526 = vmatpush1.bf16.msra.mxu0 %v1312
        %1527 = vmatprep.subr.bf16.mxu0 %v1315
        %1528 = vmatpush1.bf16.msra.mxu0 %v1314
        %1529 = vmatprep.subr.bf16.mxu0 %v1317
        %1530 = vmatpush1.bf16.msra.mxu0 %v1316
        %1531 = vmatprep.subr.bf16.mxu0 %v1319
        %1532 = vmatpush1.bf16.msra.mxu0 %v1318
        %1533 = vmatprep.subr.bf16.mxu0 %v1321
        %1534 = vmatpush1.bf16.msra.mxu0 %v1320
        %1535 = vmatprep.subr.bf16.mxu0 %v1323
        %1536 = vmatpush1.bf16.msra.mxu0 %v1322
        %1537 = vmatprep.subr.bf16.mxu0 %v1325
        %1538 = vmatpush1.bf16.msra.mxu0 %v1324
        %1539 = vmatprep.mubr.bf16.mxu0 %v869
        %1540 = vmatmul.mubr.bf16.gmra.mrb[0].mxu0 %v868
        %v1541 = vpop.f32.mrb[0].mxu0
        %v1542 = vadd.f32 %v1489, %v1541
        %v1543 = vpop.f32.mrb[0].mxu0
        %v1544 = vadd.f32 %v1491, %v1543
        %v1545 = vpop.f32.mrb[0].mxu0
        %v1546 = vadd.f32 %v1493, %v1545
        %v1547 = vpop.f32.mrb[0].mxu0
        %v1548 = vadd.f32 %v1495, %v1547
        %1549 = vmatprep.mubr.bf16.mxu0 %v875
        %1550 = vmatmul.mubr.bf16.gmra.mrb[0].mxu0 %v874
        %v1551 = vpop.f32.mrb[0].mxu0
        %v1552 = vadd.f32 %v1499, %v1551
        %v1553 = vpop.f32.mrb[0].mxu0
        %v1554 = vadd.f32 %v1501, %v1553
        %v1555 = vpop.f32.mrb[0].mxu0
        %v1556 = vadd.f32 %v1503, %v1555
        %v1557 = vpop.f32.mrb[0].mxu0
        %v1558 = vadd.f32 %v1505, %v1557
        %1559 = vdwg.mxu0
        %1560 = vmatprep.subr.bf16.mxu0 %v1327
        %1561 = vmatpush1.bf16.msra.mxu0 %v1326
        %1562 = vmatprep.subr.bf16.mxu0 %v1329
        %1563 = vmatpush1.bf16.msra.mxu0 %v1328
        %1564 = vmatprep.subr.bf16.mxu0 %v1331
        %1565 = vmatpush1.bf16.msra.mxu0 %v1330
        %1566 = vmatprep.subr.bf16.mxu0 %v1333
        %1567 = vmatpush1.bf16.msra.mxu0 %v1332
        %1568 = vmatprep.subr.bf16.mxu0 %v1335
        %1569 = vmatpush1.bf16.msra.mxu0 %v1334
        %1570 = vmatprep.subr.bf16.mxu0 %v1337
        %1571 = vmatpush1.bf16.msra.mxu0 %v1336
        %1572 = vmatprep.subr.bf16.mxu0 %v1339
        %1573 = vmatpush1.bf16.msra.mxu0 %v1338
        %1574 = vmatprep.subr.bf16.mxu0 %v1341
        %1575 = vmatpush1.bf16.msra.mxu0 %v1340
        %1576 = vmatprep.subr.bf16.mxu0 %v1343
        %1577 = vmatpush1.bf16.msra.mxu0 %v1342
        %1578 = vmatprep.subr.bf16.mxu0 %v1345
        %1579 = vmatpush1.bf16.msra.mxu0 %v1344
        %1580 = vmatprep.subr.bf16.mxu0 %v1347
        %1581 = vmatpush1.bf16.msra.mxu0 %v1346
        %1582 = vmatprep.subr.bf16.mxu0 %v1349
        %1583 = vmatpush1.bf16.msra.mxu0 %v1348
        %1584 = vmatprep.subr.bf16.mxu0 %v1351
        %1585 = vmatpush1.bf16.msra.mxu0 %v1350
        %1586 = vmatprep.subr.bf16.mxu0 %v1353
        %1587 = vmatpush1.bf16.msra.mxu0 %v1352
        %1588 = vmatprep.subr.bf16.mxu0 %v1355
        %1589 = vmatpush1.bf16.msra.mxu0 %v1354
        %1590 = vmatprep.subr.bf16.mxu0 %v1357
        %1591 = vmatpush1.bf16.msra.mxu0 %v1356
        %1592 = vmatprep.mubr.bf16.mxu0 %v871
        %1593 = vmatmul.mubr.bf16.gmra.mrb[0].mxu0 %v870
        %v1594 = vpop.f32.mrb[0].mxu0
        %v1595 = vadd.f32 %v1542, %v1594
        %v1596 = vpop.f32.mrb[0].mxu0
        %v1597 = vadd.f32 %v1544, %v1596
        %v1598 = vpop.f32.mrb[0].mxu0
        %v1599 = vadd.f32 %v1546, %v1598
        %v1600 = vpop.f32.mrb[0].mxu0
        %v1601 = vadd.f32 %v1548, %v1600
        %1602 = vmatprep.mubr.bf16.mxu0 %v877
        %1603 = vmatmul.mubr.bf16.gmra.mrb[0].mxu0 %v876
        %v1604 = vpop.f32.mrb[0].mxu0
        %v1605 = vadd.f32 %v1552, %v1604
        %v1606 = vpop.f32.mrb[0].mxu0
        %v1607 = vadd.f32 %v1554, %v1606
        %v1608 = vpop.f32.mrb[0].mxu0
        %v1609 = vadd.f32 %v1556, %v1608
        %v1610 = vpop.f32.mrb[0].mxu0
        %v1611 = vadd.f32 %v1558, %v1610
        %1612 = vdwg.mxu0
        %v1613 = vpack.c.bf16 %v1599, %v1595
        %v1614 = vpack.c.bf16 %v1601, %v1597
        %v1615 = vpack.c.bf16 %v1609, %v1605
        %v1616 = vpack.c.bf16 %v1611, %v1607
        %v1617 = vld [vmem:[#allocation7] sm:$0xf]
        %v1618 = vld [vmem:[#allocation7 + $0x4] sm:$0xf]
        %v1619 = vld [vmem:[#allocation7 + $0x8] sm:$0xf]
        %v1620 = vld [vmem:[#allocation7 + $0xc] sm:$0xf]
        %v1621 = vld [vmem:[#allocation7 + $0x10] sm:$0xf]
        %v1622 = vld [vmem:[#allocation7 + $0x14] sm:$0xf]
        %v1623 = vld [vmem:[#allocation7 + $0x18] sm:$0xf]
        %v1624 = vld [vmem:[#allocation7 + $0x1c] sm:$0xf]
        %v1625 = vld [vmem:[#allocation7 + $0x20] sm:$0xf]
        %v1626 = vld [vmem:[#allocation7 + $0x24] sm:$0xf]
        %v1627 = vld [vmem:[#allocation7 + $0x28] sm:$0xf]
        %v1628 = vld [vmem:[#allocation7 + $0x2c] sm:$0xf]
        %v1629 = vld [vmem:[#allocation7 + $0x30] sm:$0xf]
        %v1630 = vld [vmem:[#allocation7 + $0x34] sm:$0xf]
        %v1631 = vld [vmem:[#allocation7 + $0x38] sm:$0xf]
        %v1632 = vld [vmem:[#allocation7 + $0x3c] sm:$0xf]
        %v1633 = vld [vmem:[#allocation7 + $0x40] sm:$0xf]
        %v1634 = vld [vmem:[#allocation7 + $0x44] sm:$0xf]
        %v1635 = vld [vmem:[#allocation7 + $0x48] sm:$0xf]
        %v1636 = vld [vmem:[#allocation7 + $0x4c] sm:$0xf]
        %v1637 = vld [vmem:[#allocation7 + $0x50] sm:$0xf]
        %v1638 = vld [vmem:[#allocation7 + $0x54] sm:$0xf]
        %v1639 = vld [vmem:[#allocation7 + $0x58] sm:$0xf]
        %v1640 = vld [vmem:[#allocation7 + $0x5c] sm:$0xf]
        %v1641 = vld [vmem:[#allocation7 + $0x60] sm:$0xf]
        %v1642 = vld [vmem:[#allocation7 + $0x64] sm:$0xf]
        %v1643 = vld [vmem:[#allocation7 + $0x68] sm:$0xf]
        %v1644 = vld [vmem:[#allocation7 + $0x6c] sm:$0xf]
        %v1645 = vld [vmem:[#allocation7 + $0x70] sm:$0xf]
        %v1646 = vld [vmem:[#allocation7 + $0x74] sm:$0xf]
        %v1647 = vld [vmem:[#allocation7 + $0x78] sm:$0xf]
        %v1648 = vld [vmem:[#allocation7 + $0x7c] sm:$0xf]
        %v1649 = vld [vmem:[#allocation7 + $0x80] sm:$0xf]
        %v1650 = vld [vmem:[#allocation7 + $0x84] sm:$0xf]
        %v1651 = vld [vmem:[#allocation7 + $0x88] sm:$0xf]
        %v1652 = vld [vmem:[#allocation7 + $0x8c] sm:$0xf]
        %v1653 = vld [vmem:[#allocation7 + $0x90] sm:$0xf]
        %v1654 = vld [vmem:[#allocation7 + $0x94] sm:$0xf]
        %v1655 = vld [vmem:[#allocation7 + $0x98] sm:$0xf]
        %v1656 = vld [vmem:[#allocation7 + $0x9c] sm:$0xf]
        %v1657 = vld [vmem:[#allocation7 + $0xa0] sm:$0xf]
        %v1658 = vld [vmem:[#allocation7 + $0xa4] sm:$0xf]
        %v1659 = vld [vmem:[#allocation7 + $0xa8] sm:$0xf]
        %v1660 = vld [vmem:[#allocation7 + $0xac] sm:$0xf]
        %v1661 = vld [vmem:[#allocation7 + $0xb0] sm:$0xf]
        %v1662 = vld [vmem:[#allocation7 + $0xb4] sm:$0xf]
        %v1663 = vld [vmem:[#allocation7 + $0xb8] sm:$0xf]
        %v1664 = vld [vmem:[#allocation7 + $0xbc] sm:$0xf]
        %v1665 = vld [vmem:[#allocation7 + $0xc0] sm:$0xf]
        %v1666 = vld [vmem:[#allocation7 + $0xc4] sm:$0xf]
        %v1667 = vld [vmem:[#allocation7 + $0xc8] sm:$0xf]
        %v1668 = vld [vmem:[#allocation7 + $0xcc] sm:$0xf]
        %v1669 = vld [vmem:[#allocation7 + $0xd0] sm:$0xf]
        %v1670 = vld [vmem:[#allocation7 + $0xd4] sm:$0xf]
        %v1671 = vld [vmem:[#allocation7 + $0xd8] sm:$0xf]
        %v1672 = vld [vmem:[#allocation7 + $0xdc] sm:$0xf]
        %v1673 = vld [vmem:[#allocation7 + $0xe0] sm:$0xf]
        %v1674 = vld [vmem:[#allocation7 + $0xe4] sm:$0xf]
        %v1675 = vld [vmem:[#allocation7 + $0xe8] sm:$0xf]
        %v1676 = vld [vmem:[#allocation7 + $0xec] sm:$0xf]
        %v1681 = vunpack.c.l.b16 %v1621
        %v1682 = vunpack.c.l.b16 %v1622
        %v1683 = vunpack.c.l.b16 %v1623
        %v1684 = vunpack.c.l.b16 %v1624
        %v1685 = vpack.c.b16 %v1682, %v1681
        %v1686 = vpack.c.b16 %v1684, %v1683
        %1691 = vrot.lane.b32.xlu0 %v1613, 127
        %v1692 = vpop.permute.xlu0 %1691
        %1693 = vrot.lane.b32.xlu0 %v1614, 127
        %v1694 = vpop.permute.xlu0 %1693
        %1695 = vrot.lane.b32.xlu0 %v1615, 127
        %v1696 = vpop.permute.xlu0 %1695
        %1697 = vrot.lane.b32.xlu0 %v1616, 127
        %v1698 = vpop.permute.xlu0 %1697
        %vm1699 = vcmask 1039360
        %v1700 = vsel %vm1699, %v1692, %v1694
        %v1701 = vsel %vm1699, %v1696, %v1698
        %vm1706 = vcmask 261120
        %v1708 = vsel %vm1706, %v1685, 0
        %v1711 = vsel %vm1706, %v1686, 0
        %1713 = vmatprep.subr.bf16.mxu0 %v1694
        %1714 = vmatpush1.bf16.msra.mxu0 %v1700
        %1715 = vmatprep.subr.bf16.mxu0 %v1698
        %1716 = vmatpush1.bf16.msra.mxu0 %v1701
        %1717 = vmatprep.subr.bf16.mxu0 0
        %1718 = vmatpush1.bf16.msra.mxu0 0
        %1719 = vmatprep.subr.bf16.mxu0 0
        %1720 = vmatpush1.bf16.msra.mxu0 0
        %1721 = vmatprep.subr.bf16.mxu0 0
        %1722 = vmatpush1.bf16.msra.mxu0 0
        %1723 = vmatprep.subr.bf16.mxu0 0
        %1724 = vmatpush1.bf16.msra.mxu0 0
        %1725 = vmatprep.subr.bf16.mxu0 0
        %1726 = vmatpush1.bf16.msra.mxu0 0
        %1727 = vmatprep.subr.bf16.mxu0 0
        %1728 = vmatpush1.bf16.msra.mxu0 0
        %1729 = vmatprep.subr.bf16.mxu0 0
        %1730 = vmatpush1.bf16.msra.mxu0 0
        %1731 = vmatprep.subr.bf16.mxu0 0
        %1732 = vmatpush1.bf16.msra.mxu0 0
        %1733 = vmatprep.subr.bf16.mxu0 0
        %1734 = vmatpush1.bf16.msra.mxu0 0
        %1735 = vmatprep.subr.bf16.mxu0 0
        %1736 = vmatpush1.bf16.msra.mxu0 0
        %1737 = vmatprep.subr.bf16.mxu0 0
        %1738 = vmatpush1.bf16.msra.mxu0 0
        %1739 = vmatprep.subr.bf16.mxu0 0
        %1740 = vmatpush1.bf16.msra.mxu0 0
        %1741 = vmatprep.subr.bf16.mxu0 0
        %1742 = vmatpush1.bf16.msra.mxu0 0
        %1743 = vmatprep.subr.bf16.mxu0 0
        %1744 = vmatpush1.bf16.msra.mxu0 0
        %1745 = vmatprep.mubr.bf16.mxu0 0
        %1746 = vmatmul.mubr.bf16.gmra.mrb[0].mxu0 %v1708
        %v1747 = vpop.f32.mrb[0].mxu0
        %v1748 = vadd.f32 0.0, %v1747
        %v1749 = vpop.f32.mrb[0].mxu0
        %v1750 = vadd.f32 0.0, %v1749
        %v1751 = vpop.f32.mrb[0].mxu0
        %v1752 = vadd.f32 0.0, %v1751
        %v1753 = vpop.f32.mrb[0].mxu0
        %v1754 = vadd.f32 0.0, %v1753
        %1755 = vmatprep.mubr.bf16.mxu0 0
        %1756 = vmatmul.mubr.bf16.gmra.mrb[0].mxu0 %v1711
        %v1757 = vpop.f32.mrb[0].mxu0
        %v1758 = vadd.f32 0.0, %v1757
        %v1759 = vpop.f32.mrb[0].mxu0
        %v1760 = vadd.f32 0.0, %v1759
        %v1761 = vpop.f32.mrb[0].mxu0
        %v1762 = vadd.f32 0.0, %v1761
        %v1763 = vpop.f32.mrb[0].mxu0
        %v1764 = vadd.f32 0.0, %v1763
        %1765 = vdwg.mxu0
        %v1770 = vunpack.c.l.b16 %v1617
        %v1771 = vunpack.c.l.b16 %v1618
        %v1772 = vunpack.c.l.b16 %v1619
        %v1773 = vunpack.c.l.b16 %v1620
        %v1774 = vpack.c.b16 %v1771, %v1770
        %v1775 = vpack.c.b16 %v1773, %v1772
        %v1777 = vsel %vm1706, %v1774, 0
        %v1780 = vsel %vm1706, %v1775, 0
        %1782 = vmatprep.subr.bf16.mxu0 %v1614
        %1783 = vmatpush1.bf16.msra.mxu0 %v1613
        %1784 = vmatprep.subr.bf16.mxu0 %v1616
        %1785 = vmatpush1.bf16.msra.mxu0 %v1615
        %1786 = vmatprep.subr.bf16.mxu0 0
        %1787 = vmatpush1.bf16.msra.mxu0 0
        %1788 = vmatprep.subr.bf16.mxu0 0
        %1789 = vmatpush1.bf16.msra.mxu0 0
        %1790 = vmatprep.subr.bf16.mxu0 0
        %1791 = vmatpush1.bf16.msra.mxu0 0
        %1792 = vmatprep.subr.bf16.mxu0 0
        %1793 = vmatpush1.bf16.msra.mxu0 0
        %1794 = vmatprep.subr.bf16.mxu0 0
        %1795 = vmatpush1.bf16.msra.mxu0 0
        %1796 = vmatprep.subr.bf16.mxu0 0
        %1797 = vmatpush1.bf16.msra.mxu0 0
        %1798 = vmatprep.subr.bf16.mxu0 0
        %1799 = vmatpush1.bf16.msra.mxu0 0
        %1800 = vmatprep.subr.bf16.mxu0 0
        %1801 = vmatpush1.bf16.msra.mxu0 0
        %1802 = vmatprep.subr.bf16.mxu0 0
        %1803 = vmatpush1.bf16.msra.mxu0 0
        %1804 = vmatprep.subr.bf16.mxu0 0
        %1805 = vmatpush1.bf16.msra.mxu0 0
        %1806 = vmatprep.subr.bf16.mxu0 0
        %1807 = vmatpush1.bf16.msra.mxu0 0
        %1808 = vmatprep.subr.bf16.mxu0 0
        %1809 = vmatpush1.bf16.msra.mxu0 0
        %1810 = vmatprep.subr.bf16.mxu0 0
        %1811 = vmatpush1.bf16.msra.mxu0 0
        %1812 = vmatprep.subr.bf16.mxu0 0
        %1813 = vmatpush1.bf16.msra.mxu0 0
        %1814 = vmatprep.mubr.bf16.mxu0 0
        %1815 = vmatmul.mubr.bf16.gmra.mrb[0].mxu0 %v1777
        %v1816 = vpop.f32.mrb[0].mxu0
        %v1817 = vadd.f32 %v1748, %v1816
        %v1818 = vpop.f32.mrb[0].mxu0
        %v1819 = vadd.f32 %v1750, %v1818
        %v1820 = vpop.f32.mrb[0].mxu0
        %v1821 = vadd.f32 %v1752, %v1820
        %v1822 = vpop.f32.mrb[0].mxu0
        %v1823 = vadd.f32 %v1754, %v1822
        %1824 = vmatprep.mubr.bf16.mxu0 0
        %1825 = vmatmul.mubr.bf16.gmra.mrb[0].mxu0 %v1780
        %v1826 = vpop.f32.mrb[0].mxu0
        %v1827 = vadd.f32 %v1758, %v1826
        %v1828 = vpop.f32.mrb[0].mxu0
        %v1829 = vadd.f32 %v1760, %v1828
        %v1830 = vpop.f32.mrb[0].mxu0
        %v1831 = vadd.f32 %v1762, %v1830
        %v1832 = vpop.f32.mrb[0].mxu0
        %v1833 = vadd.f32 %v1764, %v1832
        %1834 = vdwg.mxu0
        %v1839 = vunpack.c.l.b16 %v1625
        %v1840 = vunpack.c.l.b16 %v1626
        %v1841 = vunpack.c.l.b16 %v1627
        %v1842 = vunpack.c.l.b16 %v1628
        %v1843 = vpack.c.b16 %v1840, %v1839
        %v1844 = vpack.c.b16 %v1842, %v1841
        %1845 = vrot.lane.b32.xlu0 %v1613, 126
        %v1846 = vpop.permute.xlu0 %1845
        %1847 = vrot.lane.b32.xlu0 %v1614, 126
        %v1848 = vpop.permute.xlu0 %1847
        %1849 = vrot.lane.b32.xlu0 %v1615, 126
        %v1850 = vpop.permute.xlu0 %1849
        %1851 = vrot.lane.b32.xlu0 %v1616, 126
        %v1852 = vpop.permute.xlu0 %1851
        %vm1853 = vcmask 1031168
        %v1854 = vsel %vm1853, %v1846, %v1848
        %v1855 = vsel %vm1853, %v1850, %v1852
        %v1861 = vsel %vm1706, %v1843, 0
        %v1864 = vsel %vm1706, %v1844, 0
        %1866 = vmatprep.subr.bf16.mxu0 %v1848
        %1867 = vmatpush1.bf16.msra.mxu0 %v1854
        %1868 = vmatprep.subr.bf16.mxu0 %v1852
        %1869 = vmatpush1.bf16.msra.mxu0 %v1855
        %1870 = vmatprep.subr.bf16.mxu0 0
        %1871 = vmatpush1.bf16.msra.mxu0 0
        %1872 = vmatprep.subr.bf16.mxu0 0
        %1873 = vmatpush1.bf16.msra.mxu0 0
        %1874 = vmatprep.subr.bf16.mxu0 0
        %1875 = vmatpush1.bf16.msra.mxu0 0
        %1876 = vmatprep.subr.bf16.mxu0 0
        %1877 = vmatpush1.bf16.msra.mxu0 0
        %1878 = vmatprep.subr.bf16.mxu0 0
        %1879 = vmatpush1.bf16.msra.mxu0 0
        %1880 = vmatprep.subr.bf16.mxu0 0
        %1881 = vmatpush1.bf16.msra.mxu0 0
        %1882 = vmatprep.subr.bf16.mxu0 0
        %1883 = vmatpush1.bf16.msra.mxu0 0
        %1884 = vmatprep.subr.bf16.mxu0 0
        %1885 = vmatpush1.bf16.msra.mxu0 0
        %1886 = vmatprep.subr.bf16.mxu0 0
        %1887 = vmatpush1.bf16.msra.mxu0 0
        %1888 = vmatprep.subr.bf16.mxu0 0
        %1889 = vmatpush1.bf16.msra.mxu0 0
        %1890 = vmatprep.subr.bf16.mxu0 0
        %1891 = vmatpush1.bf16.msra.mxu0 0
        %1892 = vmatprep.subr.bf16.mxu0 0
        %1893 = vmatpush1.bf16.msra.mxu0 0
        %1894 = vmatprep.subr.bf16.mxu0 0
        %1895 = vmatpush1.bf16.msra.mxu0 0
        %1896 = vmatprep.subr.bf16.mxu0 0
        %1897 = vmatpush1.bf16.msra.mxu0 0
        %1898 = vmatprep.mubr.bf16.mxu0 0
        %1899 = vmatmul.mubr.bf16.gmra.mrb[0].mxu0 %v1861
        %v1900 = vpop.f32.mrb[0].mxu0
        %v1901 = vadd.f32 0.0, %v1900
        %v1902 = vpop.f32.mrb[0].mxu0
        %v1903 = vadd.f32 0.0, %v1902
        %v1904 = vpop.f32.mrb[0].mxu0
        %v1905 = vadd.f32 0.0, %v1904
        %v1906 = vpop.f32.mrb[0].mxu0
        %v1907 = vadd.f32 0.0, %v1906
        %1908 = vmatprep.mubr.bf16.mxu0 0
        %1909 = vmatmul.mubr.bf16.gmra.mrb[0].mxu0 %v1864
        %v1910 = vpop.f32.mrb[0].mxu0
        %v1911 = vadd.f32 0.0, %v1910
        %v1912 = vpop.f32.mrb[0].mxu0
        %v1913 = vadd.f32 0.0, %v1912
        %v1914 = vpop.f32.mrb[0].mxu0
        %v1915 = vadd.f32 0.0, %v1914
        %v1916 = vpop.f32.mrb[0].mxu0
        %v1917 = vadd.f32 0.0, %v1916
        %1918 = vdwg.mxu0
        %v1919 = vadd.f32 %v1817, %v1901
        %v1920 = vadd.f32 %v1819, %v1903
        %v1921 = vadd.f32 %v1821, %v1905
        %v1922 = vadd.f32 %v1823, %v1907
        %v1923 = vadd.f32 %v1827, %v1911
        %v1924 = vadd.f32 %v1829, %v1913
        %v1925 = vadd.f32 %v1831, %v1915
        %v1926 = vadd.f32 %v1833, %v1917
        %v1931 = vunpack.c.l.b16 %v1629
        %v1932 = vunpack.c.l.b16 %v1630
        %v1933 = vunpack.c.l.b16 %v1631
        %v1934 = vunpack.c.l.b16 %v1632
        %v1935 = vpack.c.b16 %v1932, %v1931
        %v1936 = vpack.c.b16 %v1934, %v1933
        %1937 = vrot.lane.b32.xlu0 %v1613, 125
        %v1938 = vpop.permute.xlu0 %1937
        %1939 = vrot.lane.b32.xlu0 %v1614, 125
        %v1940 = vpop.permute.xlu0 %1939
        %1941 = vrot.lane.b32.xlu0 %v1615, 125
        %v1942 = vpop.permute.xlu0 %1941
        %1943 = vrot.lane.b32.xlu0 %v1616, 125
        %v1944 = vpop.permute.xlu0 %1943
        %vm1945 = vcmask 1022976
        %v1946 = vsel %vm1945, %v1938, %v1940
        %v1947 = vsel %vm1945, %v1942, %v1944
        %v1953 = vsel %vm1706, %v1935, 0
        %v1956 = vsel %vm1706, %v1936, 0
        %1958 = vmatprep.subr.bf16.mxu0 %v1940
        %1959 = vmatpush1.bf16.msra.mxu0 %v1946
        %1960 = vmatprep.subr.bf16.mxu0 %v1944
        %1961 = vmatpush1.bf16.msra.mxu0 %v1947
        %1962 = vmatprep.subr.bf16.mxu0 0
        %1963 = vmatpush1.bf16.msra.mxu0 0
        %1964 = vmatprep.subr.bf16.mxu0 0
        %1965 = vmatpush1.bf16.msra.mxu0 0
        %1966 = vmatprep.subr.bf16.mxu0 0
        %1967 = vmatpush1.bf16.msra.mxu0 0
        %1968 = vmatprep.subr.bf16.mxu0 0
        %1969 = vmatpush1.bf16.msra.mxu0 0
        %1970 = vmatprep.subr.bf16.mxu0 0
        %1971 = vmatpush1.bf16.msra.mxu0 0
        %1972 = vmatprep.subr.bf16.mxu0 0
        %1973 = vmatpush1.bf16.msra.mxu0 0
        %1974 = vmatprep.subr.bf16.mxu0 0
        %1975 = vmatpush1.bf16.msra.mxu0 0
        %1976 = vmatprep.subr.bf16.mxu0 0
        %1977 = vmatpush1.bf16.msra.mxu0 0
        %1978 = vmatprep.subr.bf16.mxu0 0
        %1979 = vmatpush1.bf16.msra.mxu0 0
        %1980 = vmatprep.subr.bf16.mxu0 0
        %1981 = vmatpush1.bf16.msra.mxu0 0
        %1982 = vmatprep.subr.bf16.mxu0 0
        %1983 = vmatpush1.bf16.msra.mxu0 0
        %1984 = vmatprep.subr.bf16.mxu0 0
        %1985 = vmatpush1.bf16.msra.mxu0 0
        %1986 = vmatprep.subr.bf16.mxu0 0
        %1987 = vmatpush1.bf16.msra.mxu0 0
        %1988 = vmatprep.subr.bf16.mxu0 0
        %1989 = vmatpush1.bf16.msra.mxu0 0
        %1990 = vmatprep.mubr.bf16.mxu0 0
        %1991 = vmatmul.mubr.bf16.gmra.mrb[0].mxu0 %v1953
        %v1992 = vpop.f32.mrb[0].mxu0
        %v1993 = vadd.f32 0.0, %v1992
        %v1994 = vpop.f32.mrb[0].mxu0
        %v1995 = vadd.f32 0.0, %v1994
        %v1996 = vpop.f32.mrb[0].mxu0
        %v1997 = vadd.f32 0.0, %v1996
        %v1998 = vpop.f32.mrb[0].mxu0
        %v1999 = vadd.f32 0.0, %v1998
        %2000 = vmatprep.mubr.bf16.mxu0 0
        %2001 = vmatmul.mubr.bf16.gmra.mrb[0].mxu0 %v1956
        %v2002 = vpop.f32.mrb[0].mxu0
        %v2003 = vadd.f32 0.0, %v2002
        %v2004 = vpop.f32.mrb[0].mxu0
        %v2005 = vadd.f32 0.0, %v2004
        %v2006 = vpop.f32.mrb[0].mxu0
        %v2007 = vadd.f32 0.0, %v2006
        %v2008 = vpop.f32.mrb[0].mxu0
        %v2009 = vadd.f32 0.0, %v2008
        %2010 = vdwg.mxu0
        %v2011 = vadd.f32 %v1919, %v1993
        %v2012 = vadd.f32 %v1920, %v1995
        %v2013 = vadd.f32 %v1921, %v1997
        %v2014 = vadd.f32 %v1922, %v1999
        %v2015 = vadd.f32 %v1923, %v2003
        %v2016 = vadd.f32 %v1924, %v2005
        %v2017 = vadd.f32 %v1925, %v2007
        %v2018 = vadd.f32 %v1926, %v2009
        %v2023 = vunpack.c.l.b16 %v1633
        %v2024 = vunpack.c.l.b16 %v1634
        %v2025 = vunpack.c.l.b16 %v1635
        %v2026 = vunpack.c.l.b16 %v1636
        %v2027 = vpack.c.b16 %v2024, %v2023
        %v2028 = vpack.c.b16 %v2026, %v2025
        %2029 = vrot.lane.b32.xlu0 %v1613, 124
        %v2030 = vpop.permute.xlu0 %2029
        %2031 = vrot.lane.b32.xlu0 %v1614, 124
        %v2032 = vpop.permute.xlu0 %2031
        %2033 = vrot.lane.b32.xlu0 %v1615, 124
        %v2034 = vpop.permute.xlu0 %2033
        %2035 = vrot.lane.b32.xlu0 %v1616, 124
        %v2036 = vpop.permute.xlu0 %2035
        %vm2037 = vcmask 1014784
        %v2038 = vsel %vm2037, %v2030, %v2032
        %v2039 = vsel %vm2037, %v2034, %v2036
        %v2045 = vsel %vm1706, %v2027, 0
        %v2048 = vsel %vm1706, %v2028, 0
        %2050 = vmatprep.subr.bf16.mxu0 %v2032
        %2051 = vmatpush1.bf16.msra.mxu0 %v2038
        %2052 = vmatprep.subr.bf16.mxu0 %v2036
        %2053 = vmatpush1.bf16.msra.mxu0 %v2039
        %2054 = vmatprep.subr.bf16.mxu0 0
        %2055 = vmatpush1.bf16.msra.mxu0 0
        %2056 = vmatprep.subr.bf16.mxu0 0
        %2057 = vmatpush1.bf16.msra.mxu0 0
        %2058 = vmatprep.subr.bf16.mxu0 0
        %2059 = vmatpush1.bf16.msra.mxu0 0
        %2060 = vmatprep.subr.bf16.mxu0 0
        %2061 = vmatpush1.bf16.msra.mxu0 0
        %2062 = vmatprep.subr.bf16.mxu0 0
        %2063 = vmatpush1.bf16.msra.mxu0 0
        %2064 = vmatprep.subr.bf16.mxu0 0
        %2065 = vmatpush1.bf16.msra.mxu0 0
        %2066 = vmatprep.subr.bf16.mxu0 0
        %2067 = vmatpush1.bf16.msra.mxu0 0
        %2068 = vmatprep.subr.bf16.mxu0 0
        %2069 = vmatpush1.bf16.msra.mxu0 0
        %2070 = vmatprep.subr.bf16.mxu0 0
        %2071 = vmatpush1.bf16.msra.mxu0 0
        %2072 = vmatprep.subr.bf16.mxu0 0
        %2073 = vmatpush1.bf16.msra.mxu0 0
        %2074 = vmatprep.subr.bf16.mxu0 0
        %2075 = vmatpush1.bf16.msra.mxu0 0
        %2076 = vmatprep.subr.bf16.mxu0 0
        %2077 = vmatpush1.bf16.msra.mxu0 0
        %2078 = vmatprep.subr.bf16.mxu0 0
        %2079 = vmatpush1.bf16.msra.mxu0 0
        %2080 = vmatprep.subr.bf16.mxu0 0
        %2081 = vmatpush1.bf16.msra.mxu0 0
        %2082 = vmatprep.mubr.bf16.mxu0 0
        %2083 = vmatmul.mubr.bf16.gmra.mrb[0].mxu0 %v2045
        %v2084 = vpop.f32.mrb[0].mxu0
        %v2085 = vadd.f32 0.0, %v2084
        %v2086 = vpop.f32.mrb[0].mxu0
        %v2087 = vadd.f32 0.0, %v2086
        %v2088 = vpop.f32.mrb[0].mxu0
        %v2089 = vadd.f32 0.0, %v2088
        %v2090 = vpop.f32.mrb[0].mxu0
        %v2091 = vadd.f32 0.0, %v2090
        %2092 = vmatprep.mubr.bf16.mxu0 0
        %2093 = vmatmul.mubr.bf16.gmra.mrb[0].mxu0 %v2048
        %v2094 = vpop.f32.mrb[0].mxu0
        %v2095 = vadd.f32 0.0, %v2094
        %v2096 = vpop.f32.mrb[0].mxu0
        %v2097 = vadd.f32 0.0, %v2096
        %v2098 = vpop.f32.mrb[0].mxu0
        %v2099 = vadd.f32 0.0, %v2098
        %v2100 = vpop.f32.mrb[0].mxu0
        %v2101 = vadd.f32 0.0, %v2100
        %2102 = vdwg.mxu0
        %v2103 = vadd.f32 %v2011, %v2085
        %v2104 = vadd.f32 %v2012, %v2087
        %v2105 = vadd.f32 %v2013, %v2089
        %v2106 = vadd.f32 %v2014, %v2091
        %v2107 = vadd.f32 %v2015, %v2095
        %v2108 = vadd.f32 %v2016, %v2097
        %v2109 = vadd.f32 %v2017, %v2099
        %v2110 = vadd.f32 %v2018, %v2101
        %v2115 = vunpack.c.l.b16 %v1637
        %v2116 = vunpack.c.l.b16 %v1638
        %v2117 = vunpack.c.l.b16 %v1639
        %v2118 = vunpack.c.l.b16 %v1640
        %v2119 = vpack.c.b16 %v2116, %v2115
        %v2120 = vpack.c.b16 %v2118, %v2117
        %2121 = vrot.lane.b32.xlu0 %v1613, 123
        %v2122 = vpop.permute.xlu0 %2121
        %2123 = vrot.lane.b32.xlu0 %v1614, 123
        %v2124 = vpop.permute.xlu0 %2123
        %2125 = vrot.lane.b32.xlu0 %v1615, 123
        %v2126 = vpop.permute.xlu0 %2125
        %2127 = vrot.lane.b32.xlu0 %v1616, 123
        %v2128 = vpop.permute.xlu0 %2127
        %vm2129 = vcmask 1006592
        %v2130 = vsel %vm2129, %v2122, %v2124
        %v2131 = vsel %vm2129, %v2126, %v2128
        %v2137 = vsel %vm1706, %v2119, 0
        %v2140 = vsel %vm1706, %v2120, 0
        %2142 = vmatprep.subr.bf16.mxu0 %v2124
        %2143 = vmatpush1.bf16.msra.mxu0 %v2130
        %2144 = vmatprep.subr.bf16.mxu0 %v2128
        %2145 = vmatpush1.bf16.msra.mxu0 %v2131
        %2146 = vmatprep.subr.bf16.mxu0 0
        %2147 = vmatpush1.bf16.msra.mxu0 0
        %2148 = vmatprep.subr.bf16.mxu0 0
        %2149 = vmatpush1.bf16.msra.mxu0 0
        %2150 = vmatprep.subr.bf16.mxu0 0
        %2151 = vmatpush1.bf16.msra.mxu0 0
        %2152 = vmatprep.subr.bf16.mxu0 0
        %2153 = vmatpush1.bf16.msra.mxu0 0
        %2154 = vmatprep.subr.bf16.mxu0 0
        %2155 = vmatpush1.bf16.msra.mxu0 0
        %2156 = vmatprep.subr.bf16.mxu0 0
        %2157 = vmatpush1.bf16.msra.mxu0 0
        %2158 = vmatprep.subr.bf16.mxu0 0
        %2159 = vmatpush1.bf16.msra.mxu0 0
        %2160 = vmatprep.subr.bf16.mxu0 0
        %2161 = vmatpush1.bf16.msra.mxu0 0
        %2162 = vmatprep.subr.bf16.mxu0 0
        %2163 = vmatpush1.bf16.msra.mxu0 0
        %2164 = vmatprep.subr.bf16.mxu0 0
        %2165 = vmatpush1.bf16.msra.mxu0 0
        %2166 = vmatprep.subr.bf16.mxu0 0
        %2167 = vmatpush1.bf16.msra.mxu0 0
        %2168 = vmatprep.subr.bf16.mxu0 0
        %2169 = vmatpush1.bf16.msra.mxu0 0
        %2170 = vmatprep.subr.bf16.mxu0 0
        %2171 = vmatpush1.bf16.msra.mxu0 0
        %2172 = vmatprep.subr.bf16.mxu0 0
        %2173 = vmatpush1.bf16.msra.mxu0 0
        %2174 = vmatprep.mubr.bf16.mxu0 0
        %2175 = vmatmul.mubr.bf16.gmra.mrb[0].mxu0 %v2137
        %v2176 = vpop.f32.mrb[0].mxu0
        %v2177 = vadd.f32 0.0, %v2176
        %v2178 = vpop.f32.mrb[0].mxu0
        %v2179 = vadd.f32 0.0, %v2178
        %v2180 = vpop.f32.mrb[0].mxu0
        %v2181 = vadd.f32 0.0, %v2180
        %v2182 = vpop.f32.mrb[0].mxu0
        %v2183 = vadd.f32 0.0, %v2182
        %2184 = vmatprep.mubr.bf16.mxu0 0
        %2185 = vmatmul.mubr.bf16.gmra.mrb[0].mxu0 %v2140
        %v2186 = vpop.f32.mrb[0].mxu0
        %v2187 = vadd.f32 0.0, %v2186
        %v2188 = vpop.f32.mrb[0].mxu0
        %v2189 = vadd.f32 0.0, %v2188
        %v2190 = vpop.f32.mrb[0].mxu0
        %v2191 = vadd.f32 0.0, %v2190
        %v2192 = vpop.f32.mrb[0].mxu0
        %v2193 = vadd.f32 0.0, %v2192
        %2194 = vdwg.mxu0
        %v2195 = vadd.f32 %v2103, %v2177
        %v2196 = vadd.f32 %v2104, %v2179
        %v2197 = vadd.f32 %v2105, %v2181
        %v2198 = vadd.f32 %v2106, %v2183
        %v2199 = vadd.f32 %v2107, %v2187
        %v2200 = vadd.f32 %v2108, %v2189
        %v2201 = vadd.f32 %v2109, %v2191
        %v2202 = vadd.f32 %v2110, %v2193
        %v2207 = vunpack.c.l.b16 %v1641
        %v2208 = vunpack.c.l.b16 %v1642
        %v2209 = vunpack.c.l.b16 %v1643
        %v2210 = vunpack.c.l.b16 %v1644
        %v2211 = vpack.c.b16 %v2208, %v2207
        %v2212 = vpack.c.b16 %v2210, %v2209
        %2213 = vrot.lane.b32.xlu0 %v1613, 122
        %v2214 = vpop.permute.xlu0 %2213
        %2215 = vrot.lane.b32.xlu0 %v1614, 122
        %v2216 = vpop.permute.xlu0 %2215
        %2217 = vrot.lane.b32.xlu0 %v1615, 122
        %v2218 = vpop.permute.xlu0 %2217
        %2219 = vrot.lane.b32.xlu0 %v1616, 122
        %v2220 = vpop.permute.xlu0 %2219
        %vm2221 = vcmask 998400
        %v2222 = vsel %vm2221, %v2214, %v2216
        %v2223 = vsel %vm2221, %v2218, %v2220
        %v2229 = vsel %vm1706, %v2211, 0
        %v2232 = vsel %vm1706, %v2212, 0
        %2234 = vmatprep.subr.bf16.mxu0 %v2216
        %2235 = vmatpush1.bf16.msra.mxu0 %v2222
        %2236 = vmatprep.subr.bf16.mxu0 %v2220
        %2237 = vmatpush1.bf16.msra.mxu0 %v2223
        %2238 = vmatprep.subr.bf16.mxu0 0
        %2239 = vmatpush1.bf16.msra.mxu0 0
        %2240 = vmatprep.subr.bf16.mxu0 0
        %2241 = vmatpush1.bf16.msra.mxu0 0
        %2242 = vmatprep.subr.bf16.mxu0 0
        %2243 = vmatpush1.bf16.msra.mxu0 0
        %2244 = vmatprep.subr.bf16.mxu0 0
        %2245 = vmatpush1.bf16.msra.mxu0 0
        %2246 = vmatprep.subr.bf16.mxu0 0
        %2247 = vmatpush1.bf16.msra.mxu0 0
        %2248 = vmatprep.subr.bf16.mxu0 0
        %2249 = vmatpush1.bf16.msra.mxu0 0
        %2250 = vmatprep.subr.bf16.mxu0 0
        %2251 = vmatpush1.bf16.msra.mxu0 0
        %2252 = vmatprep.subr.bf16.mxu0 0
        %2253 = vmatpush1.bf16.msra.mxu0 0
        %2254 = vmatprep.subr.bf16.mxu0 0
        %2255 = vmatpush1.bf16.msra.mxu0 0
        %2256 = vmatprep.subr.bf16.mxu0 0
        %2257 = vmatpush1.bf16.msra.mxu0 0
        %2258 = vmatprep.subr.bf16.mxu0 0
        %2259 = vmatpush1.bf16.msra.mxu0 0
        %2260 = vmatprep.subr.bf16.mxu0 0
        %2261 = vmatpush1.bf16.msra.mxu0 0
        %2262 = vmatprep.subr.bf16.mxu0 0
        %2263 = vmatpush1.bf16.msra.mxu0 0
        %2264 = vmatprep.subr.bf16.mxu0 0
        %2265 = vmatpush1.bf16.msra.mxu0 0
        %2266 = vmatprep.mubr.bf16.mxu0 0
        %2267 = vmatmul.mubr.bf16.gmra.mrb[0].mxu0 %v2229
        %v2268 = vpop.f32.mrb[0].mxu0
        %v2269 = vadd.f32 0.0, %v2268
        %v2270 = vpop.f32.mrb[0].mxu0
        %v2271 = vadd.f32 0.0, %v2270
        %v2272 = vpop.f32.mrb[0].mxu0
        %v2273 = vadd.f32 0.0, %v2272
        %v2274 = vpop.f32.mrb[0].mxu0
        %v2275 = vadd.f32 0.0, %v2274
        %2276 = vmatprep.mubr.bf16.mxu0 0
        %2277 = vmatmul.mubr.bf16.gmra.mrb[0].mxu0 %v2232
        %v2278 = vpop.f32.mrb[0].mxu0
        %v2279 = vadd.f32 0.0, %v2278
        %v2280 = vpop.f32.mrb[0].mxu0
        %v2281 = vadd.f32 0.0, %v2280
        %v2282 = vpop.f32.mrb[0].mxu0
        %v2283 = vadd.f32 0.0, %v2282
        %v2284 = vpop.f32.mrb[0].mxu0
        %v2285 = vadd.f32 0.0, %v2284
        %2286 = vdwg.mxu0
        %v2287 = vadd.f32 %v2195, %v2269
        %v2288 = vadd.f32 %v2196, %v2271
        %v2289 = vadd.f32 %v2197, %v2273
        %v2290 = vadd.f32 %v2198, %v2275
        %v2291 = vadd.f32 %v2199, %v2279
        %v2292 = vadd.f32 %v2200, %v2281
        %v2293 = vadd.f32 %v2201, %v2283
        %v2294 = vadd.f32 %v2202, %v2285
        %v2299 = vunpack.c.l.b16 %v1645
        %v2300 = vunpack.c.l.b16 %v1646
        %v2301 = vunpack.c.l.b16 %v1647
        %v2302 = vunpack.c.l.b16 %v1648
        %v2303 = vpack.c.b16 %v2300, %v2299
        %v2304 = vpack.c.b16 %v2302, %v2301
        %2305 = vrot.lane.b32.xlu0 %v1613, 121
        %v2306 = vpop.permute.xlu0 %2305
        %2307 = vrot.lane.b32.xlu0 %v1614, 121
        %v2308 = vpop.permute.xlu0 %2307
        %2309 = vrot.lane.b32.xlu0 %v1615, 121
        %v2310 = vpop.permute.xlu0 %2309
        %2311 = vrot.lane.b32.xlu0 %v1616, 121
        %v2312 = vpop.permute.xlu0 %2311
        %vm2313 = vcmask 990208
        %v2314 = vsel %vm2313, %v2306, %v2308
        %v2315 = vsel %vm2313, %v2310, %v2312
        %v2321 = vsel %vm1706, %v2303, 0
        %v2324 = vsel %vm1706, %v2304, 0
        %2326 = vmatprep.subr.bf16.mxu0 %v2308
        %2327 = vmatpush1.bf16.msra.mxu0 %v2314
        %2328 = vmatprep.subr.bf16.mxu0 %v2312
        %2329 = vmatpush1.bf16.msra.mxu0 %v2315
        %2330 = vmatprep.subr.bf16.mxu0 0
        %2331 = vmatpush1.bf16.msra.mxu0 0
        %2332 = vmatprep.subr.bf16.mxu0 0
        %2333 = vmatpush1.bf16.msra.mxu0 0
        %2334 = vmatprep.subr.bf16.mxu0 0
        %2335 = vmatpush1.bf16.msra.mxu0 0
        %2336 = vmatprep.subr.bf16.mxu0 0
        %2337 = vmatpush1.bf16.msra.mxu0 0
        %2338 = vmatprep.subr.bf16.mxu0 0
        %2339 = vmatpush1.bf16.msra.mxu0 0
        %2340 = vmatprep.subr.bf16.mxu0 0
        %2341 = vmatpush1.bf16.msra.mxu0 0
        %2342 = vmatprep.subr.bf16.mxu0 0
        %2343 = vmatpush1.bf16.msra.mxu0 0
        %2344 = vmatprep.subr.bf16.mxu0 0
        %2345 = vmatpush1.bf16.msra.mxu0 0
        %2346 = vmatprep.subr.bf16.mxu0 0
        %2347 = vmatpush1.bf16.msra.mxu0 0
        %2348 = vmatprep.subr.bf16.mxu0 0
        %2349 = vmatpush1.bf16.msra.mxu0 0
        %2350 = vmatprep.subr.bf16.mxu0 0
        %2351 = vmatpush1.bf16.msra.mxu0 0
        %2352 = vmatprep.subr.bf16.mxu0 0
        %2353 = vmatpush1.bf16.msra.mxu0 0
        %2354 = vmatprep.subr.bf16.mxu0 0
        %2355 = vmatpush1.bf16.msra.mxu0 0
        %2356 = vmatprep.subr.bf16.mxu0 0
        %2357 = vmatpush1.bf16.msra.mxu0 0
        %2358 = vmatprep.mubr.bf16.mxu0 0
        %2359 = vmatmul.mubr.bf16.gmra.mrb[0].mxu0 %v2321
        %v2360 = vpop.f32.mrb[0].mxu0
        %v2361 = vadd.f32 0.0, %v2360
        %v2362 = vpop.f32.mrb[0].mxu0
        %v2363 = vadd.f32 0.0, %v2362
        %v2364 = vpop.f32.mrb[0].mxu0
        %v2365 = vadd.f32 0.0, %v2364
        %v2366 = vpop.f32.mrb[0].mxu0
        %v2367 = vadd.f32 0.0, %v2366
        %2368 = vmatprep.mubr.bf16.mxu0 0
        %2369 = vmatmul.mubr.bf16.gmra.mrb[0].mxu0 %v2324
        %v2370 = vpop.f32.mrb[0].mxu0
        %v2371 = vadd.f32 0.0, %v2370
        %v2372 = vpop.f32.mrb[0].mxu0
        %v2373 = vadd.f32 0.0, %v2372
        %v2374 = vpop.f32.mrb[0].mxu0
        %v2375 = vadd.f32 0.0, %v2374
        %v2376 = vpop.f32.mrb[0].mxu0
        %v2377 = vadd.f32 0.0, %v2376
        %2378 = vdwg.mxu0
        %v2379 = vadd.f32 %v2287, %v2361
        %v2380 = vadd.f32 %v2288, %v2363
        %v2381 = vadd.f32 %v2289, %v2365
        %v2382 = vadd.f32 %v2290, %v2367
        %v2383 = vadd.f32 %v2291, %v2371
        %v2384 = vadd.f32 %v2292, %v2373
        %v2385 = vadd.f32 %v2293, %v2375
        %v2386 = vadd.f32 %v2294, %v2377
        %v2391 = vunpack.c.l.b16 %v1649
        %v2392 = vunpack.c.l.b16 %v1650
        %v2393 = vunpack.c.l.b16 %v1651
        %v2394 = vunpack.c.l.b16 %v1652
        %v2395 = vpack.c.b16 %v2392, %v2391
        %v2396 = vpack.c.b16 %v2394, %v2393
        %2397 = vrot.lane.b32.xlu0 %v1613, 120
        %v2398 = vpop.permute.xlu0 %2397
        %2399 = vrot.lane.b32.xlu0 %v1614, 120
        %v2400 = vpop.permute.xlu0 %2399
        %2401 = vrot.lane.b32.xlu0 %v1615, 120
        %v2402 = vpop.permute.xlu0 %2401
        %2403 = vrot.lane.b32.xlu0 %v1616, 120
        %v2404 = vpop.permute.xlu0 %2403
        %vm2405 = vcmask 982016
        %v2406 = vsel %vm2405, %v2398, %v2400
        %v2407 = vsel %vm2405, %v2402, %v2404
        %v2413 = vsel %vm1706, %v2395, 0
        %v2416 = vsel %vm1706, %v2396, 0
        %2418 = vmatprep.subr.bf16.mxu0 %v2400
        %2419 = vmatpush1.bf16.msra.mxu0 %v2406
        %2420 = vmatprep.subr.bf16.mxu0 %v2404
        %2421 = vmatpush1.bf16.msra.mxu0 %v2407
        %2422 = vmatprep.subr.bf16.mxu0 0
        %2423 = vmatpush1.bf16.msra.mxu0 0
        %2424 = vmatprep.subr.bf16.mxu0 0
        %2425 = vmatpush1.bf16.msra.mxu0 0
        %2426 = vmatprep.subr.bf16.mxu0 0
        %2427 = vmatpush1.bf16.msra.mxu0 0
        %2428 = vmatprep.subr.bf16.mxu0 0
        %2429 = vmatpush1.bf16.msra.mxu0 0
        %2430 = vmatprep.subr.bf16.mxu0 0
        %2431 = vmatpush1.bf16.msra.mxu0 0
        %2432 = vmatprep.subr.bf16.mxu0 0
        %2433 = vmatpush1.bf16.msra.mxu0 0
        %2434 = vmatprep.subr.bf16.mxu0 0
        %2435 = vmatpush1.bf16.msra.mxu0 0
        %2436 = vmatprep.subr.bf16.mxu0 0
        %2437 = vmatpush1.bf16.msra.mxu0 0
        %2438 = vmatprep.subr.bf16.mxu0 0
        %2439 = vmatpush1.bf16.msra.mxu0 0
        %2440 = vmatprep.subr.bf16.mxu0 0
        %2441 = vmatpush1.bf16.msra.mxu0 0
        %2442 = vmatprep.subr.bf16.mxu0 0
        %2443 = vmatpush1.bf16.msra.mxu0 0
        %2444 = vmatprep.subr.bf16.mxu0 0
        %2445 = vmatpush1.bf16.msra.mxu0 0
        %2446 = vmatprep.subr.bf16.mxu0 0
        %2447 = vmatpush1.bf16.msra.mxu0 0
        %2448 = vmatprep.subr.bf16.mxu0 0
        %2449 = vmatpush1.bf16.msra.mxu0 0
        %2450 = vmatprep.mubr.bf16.mxu0 0
        %2451 = vmatmul.mubr.bf16.gmra.mrb[0].mxu0 %v2413
        %v2452 = vpop.f32.mrb[0].mxu0
        %v2453 = vadd.f32 0.0, %v2452
        %v2454 = vpop.f32.mrb[0].mxu0
        %v2455 = vadd.f32 0.0, %v2454
        %v2456 = vpop.f32.mrb[0].mxu0
        %v2457 = vadd.f32 0.0, %v2456
        %v2458 = vpop.f32.mrb[0].mxu0
        %v2459 = vadd.f32 0.0, %v2458
        %2460 = vmatprep.mubr.bf16.mxu0 0
        %2461 = vmatmul.mubr.bf16.gmra.mrb[0].mxu0 %v2416
        %v2462 = vpop.f32.mrb[0].mxu0
        %v2463 = vadd.f32 0.0, %v2462
        %v2464 = vpop.f32.mrb[0].mxu0
        %v2465 = vadd.f32 0.0, %v2464
        %v2466 = vpop.f32.mrb[0].mxu0
        %v2467 = vadd.f32 0.0, %v2466
        %v2468 = vpop.f32.mrb[0].mxu0
        %v2469 = vadd.f32 0.0, %v2468
        %2470 = vdwg.mxu0
        %v2471 = vadd.f32 %v2379, %v2453
        %v2472 = vadd.f32 %v2380, %v2455
        %v2473 = vadd.f32 %v2381, %v2457
        %v2474 = vadd.f32 %v2382, %v2459
        %v2475 = vadd.f32 %v2383, %v2463
        %v2476 = vadd.f32 %v2384, %v2465
        %v2477 = vadd.f32 %v2385, %v2467
        %v2478 = vadd.f32 %v2386, %v2469
        %v2483 = vunpack.c.l.b16 %v1653
        %v2484 = vunpack.c.l.b16 %v1654
        %v2485 = vunpack.c.l.b16 %v1655
        %v2486 = vunpack.c.l.b16 %v1656
        %v2487 = vpack.c.b16 %v2484, %v2483
        %v2488 = vpack.c.b16 %v2486, %v2485
        %2489 = vrot.lane.b32.xlu0 %v1613, 119
        %v2490 = vpop.permute.xlu0 %2489
        %2491 = vrot.lane.b32.xlu0 %v1614, 119
        %v2492 = vpop.permute.xlu0 %2491
        %2493 = vrot.lane.b32.xlu0 %v1615, 119
        %v2494 = vpop.permute.xlu0 %2493
        %2495 = vrot.lane.b32.xlu0 %v1616, 119
        %v2496 = vpop.permute.xlu0 %2495
        %vm2497 = vcmask 973824
        %v2498 = vsel %vm2497, %v2490, %v2492
        %v2499 = vsel %vm2497, %v2494, %v2496
        %v2505 = vsel %vm1706, %v2487, 0
        %v2508 = vsel %vm1706, %v2488, 0
        %2510 = vmatprep.subr.bf16.mxu0 %v2492
        %2511 = vmatpush1.bf16.msra.mxu0 %v2498
        %2512 = vmatprep.subr.bf16.mxu0 %v2496
        %2513 = vmatpush1.bf16.msra.mxu0 %v2499
        %2514 = vmatprep.subr.bf16.mxu0 0
        %2515 = vmatpush1.bf16.msra.mxu0 0
        %2516 = vmatprep.subr.bf16.mxu0 0
        %2517 = vmatpush1.bf16.msra.mxu0 0
        %2518 = vmatprep.subr.bf16.mxu0 0
        %2519 = vmatpush1.bf16.msra.mxu0 0
        %2520 = vmatprep.subr.bf16.mxu0 0
        %2521 = vmatpush1.bf16.msra.mxu0 0
        %2522 = vmatprep.subr.bf16.mxu0 0
        %2523 = vmatpush1.bf16.msra.mxu0 0
        %2524 = vmatprep.subr.bf16.mxu0 0
        %2525 = vmatpush1.bf16.msra.mxu0 0
        %2526 = vmatprep.subr.bf16.mxu0 0
        %2527 = vmatpush1.bf16.msra.mxu0 0
        %2528 = vmatprep.subr.bf16.mxu0 0
        %2529 = vmatpush1.bf16.msra.mxu0 0
        %2530 = vmatprep.subr.bf16.mxu0 0
        %2531 = vmatpush1.bf16.msra.mxu0 0
        %2532 = vmatprep.subr.bf16.mxu0 0
        %2533 = vmatpush1.bf16.msra.mxu0 0
        %2534 = vmatprep.subr.bf16.mxu0 0
        %2535 = vmatpush1.bf16.msra.mxu0 0
        %2536 = vmatprep.subr.bf16.mxu0 0
        %2537 = vmatpush1.bf16.msra.mxu0 0
        %2538 = vmatprep.subr.bf16.mxu0 0
        %2539 = vmatpush1.bf16.msra.mxu0 0
        %2540 = vmatprep.subr.bf16.mxu0 0
        %2541 = vmatpush1.bf16.msra.mxu0 0
        %2542 = vmatprep.mubr.bf16.mxu0 0
        %2543 = vmatmul.mubr.bf16.gmra.mrb[0].mxu0 %v2505
        %v2544 = vpop.f32.mrb[0].mxu0
        %v2545 = vadd.f32 0.0, %v2544
        %v2546 = vpop.f32.mrb[0].mxu0
        %v2547 = vadd.f32 0.0, %v2546
        %v2548 = vpop.f32.mrb[0].mxu0
        %v2549 = vadd.f32 0.0, %v2548
        %v2550 = vpop.f32.mrb[0].mxu0
        %v2551 = vadd.f32 0.0, %v2550
        %2552 = vmatprep.mubr.bf16.mxu0 0
        %2553 = vmatmul.mubr.bf16.gmra.mrb[0].mxu0 %v2508
        %v2554 = vpop.f32.mrb[0].mxu0
        %v2555 = vadd.f32 0.0, %v2554
        %v2556 = vpop.f32.mrb[0].mxu0
        %v2557 = vadd.f32 0.0, %v2556
        %v2558 = vpop.f32.mrb[0].mxu0
        %v2559 = vadd.f32 0.0, %v2558
        %v2560 = vpop.f32.mrb[0].mxu0
        %v2561 = vadd.f32 0.0, %v2560
        %2562 = vdwg.mxu0
        %v2563 = vadd.f32 %v2471, %v2545
        %v2564 = vadd.f32 %v2472, %v2547
        %v2565 = vadd.f32 %v2473, %v2549
        %v2566 = vadd.f32 %v2474, %v2551
        %v2567 = vadd.f32 %v2475, %v2555
        %v2568 = vadd.f32 %v2476, %v2557
        %v2569 = vadd.f32 %v2477, %v2559
        %v2570 = vadd.f32 %v2478, %v2561
        %v2575 = vunpack.c.l.b16 %v1657
        %v2576 = vunpack.c.l.b16 %v1658
        %v2577 = vunpack.c.l.b16 %v1659
        %v2578 = vunpack.c.l.b16 %v1660
        %v2579 = vpack.c.b16 %v2576, %v2575
        %v2580 = vpack.c.b16 %v2578, %v2577
        %2581 = vrot.lane.b32.xlu0 %v1613, 118
        %v2582 = vpop.permute.xlu0 %2581
        %2583 = vrot.lane.b32.xlu0 %v1614, 118
        %v2584 = vpop.permute.xlu0 %2583
        %2585 = vrot.lane.b32.xlu0 %v1615, 118
        %v2586 = vpop.permute.xlu0 %2585
        %2587 = vrot.lane.b32.xlu0 %v1616, 118
        %v2588 = vpop.permute.xlu0 %2587
        %vm2589 = vcmask 965632
        %v2590 = vsel %vm2589, %v2582, %v2584
        %v2591 = vsel %vm2589, %v2586, %v2588
        %v2597 = vsel %vm1706, %v2579, 0
        %v2600 = vsel %vm1706, %v2580, 0
        %2602 = vmatprep.subr.bf16.mxu0 %v2584
        %2603 = vmatpush1.bf16.msra.mxu0 %v2590
        %2604 = vmatprep.subr.bf16.mxu0 %v2588
        %2605 = vmatpush1.bf16.msra.mxu0 %v2591
        %2606 = vmatprep.subr.bf16.mxu0 0
        %2607 = vmatpush1.bf16.msra.mxu0 0
        %2608 = vmatprep.subr.bf16.mxu0 0
        %2609 = vmatpush1.bf16.msra.mxu0 0
        %2610 = vmatprep.subr.bf16.mxu0 0
        %2611 = vmatpush1.bf16.msra.mxu0 0
        %2612 = vmatprep.subr.bf16.mxu0 0
        %2613 = vmatpush1.bf16.msra.mxu0 0
        %2614 = vmatprep.subr.bf16.mxu0 0
        %2615 = vmatpush1.bf16.msra.mxu0 0
        %2616 = vmatprep.subr.bf16.mxu0 0
        %2617 = vmatpush1.bf16.msra.mxu0 0
        %2618 = vmatprep.subr.bf16.mxu0 0
        %2619 = vmatpush1.bf16.msra.mxu0 0
        %2620 = vmatprep.subr.bf16.mxu0 0
        %2621 = vmatpush1.bf16.msra.mxu0 0
        %2622 = vmatprep.subr.bf16.mxu0 0
        %2623 = vmatpush1.bf16.msra.mxu0 0
        %2624 = vmatprep.subr.bf16.mxu0 0
        %2625 = vmatpush1.bf16.msra.mxu0 0
        %2626 = vmatprep.subr.bf16.mxu0 0
        %2627 = vmatpush1.bf16.msra.mxu0 0
        %2628 = vmatprep.subr.bf16.mxu0 0
        %2629 = vmatpush1.bf16.msra.mxu0 0
        %2630 = vmatprep.subr.bf16.mxu0 0
        %2631 = vmatpush1.bf16.msra.mxu0 0
        %2632 = vmatprep.subr.bf16.mxu0 0
        %2633 = vmatpush1.bf16.msra.mxu0 0
        %2634 = vmatprep.mubr.bf16.mxu0 0
        %2635 = vmatmul.mubr.bf16.gmra.mrb[0].mxu0 %v2597
        %v2636 = vpop.f32.mrb[0].mxu0
        %v2637 = vadd.f32 0.0, %v2636
        %v2638 = vpop.f32.mrb[0].mxu0
        %v2639 = vadd.f32 0.0, %v2638
        %v2640 = vpop.f32.mrb[0].mxu0
        %v2641 = vadd.f32 0.0, %v2640
        %v2642 = vpop.f32.mrb[0].mxu0
        %v2643 = vadd.f32 0.0, %v2642
        %2644 = vmatprep.mubr.bf16.mxu0 0
        %2645 = vmatmul.mubr.bf16.gmra.mrb[0].mxu0 %v2600
        %v2646 = vpop.f32.mrb[0].mxu0
        %v2647 = vadd.f32 0.0, %v2646
        %v2648 = vpop.f32.mrb[0].mxu0
        %v2649 = vadd.f32 0.0, %v2648
        %v2650 = vpop.f32.mrb[0].mxu0
        %v2651 = vadd.f32 0.0, %v2650
        %v2652 = vpop.f32.mrb[0].mxu0
        %v2653 = vadd.f32 0.0, %v2652
        %2654 = vdwg.mxu0
        %v2655 = vadd.f32 %v2563, %v2637
        %v2656 = vadd.f32 %v2564, %v2639
        %v2657 = vadd.f32 %v2565, %v2641
        %v2658 = vadd.f32 %v2566, %v2643
        %v2659 = vadd.f32 %v2567, %v2647
        %v2660 = vadd.f32 %v2568, %v2649
        %v2661 = vadd.f32 %v2569, %v2651
        %v2662 = vadd.f32 %v2570, %v2653
        %v2667 = vunpack.c.l.b16 %v1661
        %v2668 = vunpack.c.l.b16 %v1662
        %v2669 = vunpack.c.l.b16 %v1663
        %v2670 = vunpack.c.l.b16 %v1664
        %v2671 = vpack.c.b16 %v2668, %v2667
        %v2672 = vpack.c.b16 %v2670, %v2669
        %2673 = vrot.lane.b32.xlu0 %v1613, 117
        %v2674 = vpop.permute.xlu0 %2673
        %2675 = vrot.lane.b32.xlu0 %v1614, 117
        %v2676 = vpop.permute.xlu0 %2675
        %2677 = vrot.lane.b32.xlu0 %v1615, 117
        %v2678 = vpop.permute.xlu0 %2677
        %2679 = vrot.lane.b32.xlu0 %v1616, 117
        %v2680 = vpop.permute.xlu0 %2679
        %vm2681 = vcmask 957440
        %v2682 = vsel %vm2681, %v2674, %v2676
        %v2683 = vsel %vm2681, %v2678, %v2680
        %v2689 = vsel %vm1706, %v2671, 0
        %v2692 = vsel %vm1706, %v2672, 0
        %2694 = vmatprep.subr.bf16.mxu0 %v2676
        %2695 = vmatpush1.bf16.msra.mxu0 %v2682
        %2696 = vmatprep.subr.bf16.mxu0 %v2680
        %2697 = vmatpush1.bf16.msra.mxu0 %v2683
        %2698 = vmatprep.subr.bf16.mxu0 0
        %2699 = vmatpush1.bf16.msra.mxu0 0
        %2700 = vmatprep.subr.bf16.mxu0 0
        %2701 = vmatpush1.bf16.msra.mxu0 0
        %2702 = vmatprep.subr.bf16.mxu0 0
        %2703 = vmatpush1.bf16.msra.mxu0 0
        %2704 = vmatprep.subr.bf16.mxu0 0
        %2705 = vmatpush1.bf16.msra.mxu0 0
        %2706 = vmatprep.subr.bf16.mxu0 0
        %2707 = vmatpush1.bf16.msra.mxu0 0
        %2708 = vmatprep.subr.bf16.mxu0 0
        %2709 = vmatpush1.bf16.msra.mxu0 0
        %2710 = vmatprep.subr.bf16.mxu0 0
        %2711 = vmatpush1.bf16.msra.mxu0 0
        %2712 = vmatprep.subr.bf16.mxu0 0
        %2713 = vmatpush1.bf16.msra.mxu0 0
        %2714 = vmatprep.subr.bf16.mxu0 0
        %2715 = vmatpush1.bf16.msra.mxu0 0
        %2716 = vmatprep.subr.bf16.mxu0 0
        %2717 = vmatpush1.bf16.msra.mxu0 0
        %2718 = vmatprep.subr.bf16.mxu0 0
        %2719 = vmatpush1.bf16.msra.mxu0 0
        %2720 = vmatprep.subr.bf16.mxu0 0
        %2721 = vmatpush1.bf16.msra.mxu0 0
        %2722 = vmatprep.subr.bf16.mxu0 0
        %2723 = vmatpush1.bf16.msra.mxu0 0
        %2724 = vmatprep.subr.bf16.mxu0 0
        %2725 = vmatpush1.bf16.msra.mxu0 0
        %2726 = vmatprep.mubr.bf16.mxu0 0
        %2727 = vmatmul.mubr.bf16.gmra.mrb[0].mxu0 %v2689
        %v2728 = vpop.f32.mrb[0].mxu0
        %v2729 = vadd.f32 0.0, %v2728
        %v2730 = vpop.f32.mrb[0].mxu0
        %v2731 = vadd.f32 0.0, %v2730
        %v2732 = vpop.f32.mrb[0].mxu0
        %v2733 = vadd.f32 0.0, %v2732
        %v2734 = vpop.f32.mrb[0].mxu0
        %v2735 = vadd.f32 0.0, %v2734
        %2736 = vmatprep.mubr.bf16.mxu0 0
        %2737 = vmatmul.mubr.bf16.gmra.mrb[0].mxu0 %v2692
        %v2738 = vpop.f32.mrb[0].mxu0
        %v2739 = vadd.f32 0.0, %v2738
        %v2740 = vpop.f32.mrb[0].mxu0
        %v2741 = vadd.f32 0.0, %v2740
        %v2742 = vpop.f32.mrb[0].mxu0
        %v2743 = vadd.f32 0.0, %v2742
        %v2744 = vpop.f32.mrb[0].mxu0
        %v2745 = vadd.f32 0.0, %v2744
        %2746 = vdwg.mxu0
        %v2747 = vadd.f32 %v2655, %v2729
        %v2748 = vadd.f32 %v2656, %v2731
        %v2749 = vadd.f32 %v2657, %v2733
        %v2750 = vadd.f32 %v2658, %v2735
        %v2751 = vadd.f32 %v2659, %v2739
        %v2752 = vadd.f32 %v2660, %v2741
        %v2753 = vadd.f32 %v2661, %v2743
        %v2754 = vadd.f32 %v2662, %v2745
        %v2759 = vunpack.c.l.b16 %v1665
        %v2760 = vunpack.c.l.b16 %v1666
        %v2761 = vunpack.c.l.b16 %v1667
        %v2762 = vunpack.c.l.b16 %v1668
        %v2763 = vpack.c.b16 %v2760, %v2759
        %v2764 = vpack.c.b16 %v2762, %v2761
        %2765 = vrot.lane.b32.xlu0 %v1613, 116
        %v2766 = vpop.permute.xlu0 %2765
        %2767 = vrot.lane.b32.xlu0 %v1614, 116
        %v2768 = vpop.permute.xlu0 %2767
        %2769 = vrot.lane.b32.xlu0 %v1615, 116
        %v2770 = vpop.permute.xlu0 %2769
        %2771 = vrot.lane.b32.xlu0 %v1616, 116
        %v2772 = vpop.permute.xlu0 %2771
        %vm2773 = vcmask 949248
        %v2774 = vsel %vm2773, %v2766, %v2768
        %v2775 = vsel %vm2773, %v2770, %v2772
        %v2781 = vsel %vm1706, %v2763, 0
        %v2784 = vsel %vm1706, %v2764, 0
        %2786 = vmatprep.subr.bf16.mxu0 %v2768
        %2787 = vmatpush1.bf16.msra.mxu0 %v2774
        %2788 = vmatprep.subr.bf16.mxu0 %v2772
        %2789 = vmatpush1.bf16.msra.mxu0 %v2775
        %2790 = vmatprep.subr.bf16.mxu0 0
        %2791 = vmatpush1.bf16.msra.mxu0 0
        %2792 = vmatprep.subr.bf16.mxu0 0
        %2793 = vmatpush1.bf16.msra.mxu0 0
        %2794 = vmatprep.subr.bf16.mxu0 0
        %2795 = vmatpush1.bf16.msra.mxu0 0
        %2796 = vmatprep.subr.bf16.mxu0 0
        %2797 = vmatpush1.bf16.msra.mxu0 0
        %2798 = vmatprep.subr.bf16.mxu0 0
        %2799 = vmatpush1.bf16.msra.mxu0 0
        %2800 = vmatprep.subr.bf16.mxu0 0
        %2801 = vmatpush1.bf16.msra.mxu0 0
        %2802 = vmatprep.subr.bf16.mxu0 0
        %2803 = vmatpush1.bf16.msra.mxu0 0
        %2804 = vmatprep.subr.bf16.mxu0 0
        %2805 = vmatpush1.bf16.msra.mxu0 0
        %2806 = vmatprep.subr.bf16.mxu0 0
        %2807 = vmatpush1.bf16.msra.mxu0 0
        %2808 = vmatprep.subr.bf16.mxu0 0
        %2809 = vmatpush1.bf16.msra.mxu0 0
        %2810 = vmatprep.subr.bf16.mxu0 0
        %2811 = vmatpush1.bf16.msra.mxu0 0
        %2812 = vmatprep.subr.bf16.mxu0 0
        %2813 = vmatpush1.bf16.msra.mxu0 0
        %2814 = vmatprep.subr.bf16.mxu0 0
        %2815 = vmatpush1.bf16.msra.mxu0 0
        %2816 = vmatprep.subr.bf16.mxu0 0
        %2817 = vmatpush1.bf16.msra.mxu0 0
        %2818 = vmatprep.mubr.bf16.mxu0 0
        %2819 = vmatmul.mubr.bf16.gmra.mrb[0].mxu0 %v2781
        %v2820 = vpop.f32.mrb[0].mxu0
        %v2821 = vadd.f32 0.0, %v2820
        %v2822 = vpop.f32.mrb[0].mxu0
        %v2823 = vadd.f32 0.0, %v2822
        %v2824 = vpop.f32.mrb[0].mxu0
        %v2825 = vadd.f32 0.0, %v2824
        %v2826 = vpop.f32.mrb[0].mxu0
        %v2827 = vadd.f32 0.0, %v2826
        %2828 = vmatprep.mubr.bf16.mxu0 0
        %2829 = vmatmul.mubr.bf16.gmra.mrb[0].mxu0 %v2784
        %v2830 = vpop.f32.mrb[0].mxu0
        %v2831 = vadd.f32 0.0, %v2830
        %v2832 = vpop.f32.mrb[0].mxu0
        %v2833 = vadd.f32 0.0, %v2832
        %v2834 = vpop.f32.mrb[0].mxu0
        %v2835 = vadd.f32 0.0, %v2834
        %v2836 = vpop.f32.mrb[0].mxu0
        %v2837 = vadd.f32 0.0, %v2836
        %2838 = vdwg.mxu0
        %v2839 = vadd.f32 %v2747, %v2821
        %v2840 = vadd.f32 %v2748, %v2823
        %v2841 = vadd.f32 %v2749, %v2825
        %v2842 = vadd.f32 %v2750, %v2827
        %v2843 = vadd.f32 %v2751, %v2831
        %v2844 = vadd.f32 %v2752, %v2833
        %v2845 = vadd.f32 %v2753, %v2835
        %v2846 = vadd.f32 %v2754, %v2837
        %v2851 = vunpack.c.l.b16 %v1669
        %v2852 = vunpack.c.l.b16 %v1670
        %v2853 = vunpack.c.l.b16 %v1671
        %v2854 = vunpack.c.l.b16 %v1672
        %v2855 = vpack.c.b16 %v2852, %v2851
        %v2856 = vpack.c.b16 %v2854, %v2853
        %2857 = vrot.lane.b32.xlu0 %v1613, 115
        %v2858 = vpop.permute.xlu0 %2857
        %2859 = vrot.lane.b32.xlu0 %v1614, 115
        %v2860 = vpop.permute.xlu0 %2859
        %2861 = vrot.lane.b32.xlu0 %v1615, 115
        %v2862 = vpop.permute.xlu0 %2861
        %2863 = vrot.lane.b32.xlu0 %v1616, 115
        %v2864 = vpop.permute.xlu0 %2863
        %vm2865 = vcmask 941056
        %v2866 = vsel %vm2865, %v2858, %v2860
        %v2867 = vsel %vm2865, %v2862, %v2864
        %v2873 = vsel %vm1706, %v2855, 0
        %v2876 = vsel %vm1706, %v2856, 0
        %2878 = vmatprep.subr.bf16.mxu0 %v2860
        %2879 = vmatpush1.bf16.msra.mxu0 %v2866
        %2880 = vmatprep.subr.bf16.mxu0 %v2864
        %2881 = vmatpush1.bf16.msra.mxu0 %v2867
        %2882 = vmatprep.subr.bf16.mxu0 0
        %2883 = vmatpush1.bf16.msra.mxu0 0
        %2884 = vmatprep.subr.bf16.mxu0 0
        %2885 = vmatpush1.bf16.msra.mxu0 0
        %2886 = vmatprep.subr.bf16.mxu0 0
        %2887 = vmatpush1.bf16.msra.mxu0 0
        %2888 = vmatprep.subr.bf16.mxu0 0
        %2889 = vmatpush1.bf16.msra.mxu0 0
        %2890 = vmatprep.subr.bf16.mxu0 0
        %2891 = vmatpush1.bf16.msra.mxu0 0
        %2892 = vmatprep.subr.bf16.mxu0 0
        %2893 = vmatpush1.bf16.msra.mxu0 0
        %2894 = vmatprep.subr.bf16.mxu0 0
        %2895 = vmatpush1.bf16.msra.mxu0 0
        %2896 = vmatprep.subr.bf16.mxu0 0
        %2897 = vmatpush1.bf16.msra.mxu0 0
        %2898 = vmatprep.subr.bf16.mxu0 0
        %2899 = vmatpush1.bf16.msra.mxu0 0
        %2900 = vmatprep.subr.bf16.mxu0 0
        %2901 = vmatpush1.bf16.msra.mxu0 0
        %2902 = vmatprep.subr.bf16.mxu0 0
        %2903 = vmatpush1.bf16.msra.mxu0 0
        %2904 = vmatprep.subr.bf16.mxu0 0
        %2905 = vmatpush1.bf16.msra.mxu0 0
        %2906 = vmatprep.subr.bf16.mxu0 0
        %2907 = vmatpush1.bf16.msra.mxu0 0
        %2908 = vmatprep.subr.bf16.mxu0 0
        %2909 = vmatpush1.bf16.msra.mxu0 0
        %2910 = vmatprep.mubr.bf16.mxu0 0
        %2911 = vmatmul.mubr.bf16.gmra.mrb[0].mxu0 %v2873
        %v2912 = vpop.f32.mrb[0].mxu0
        %v2913 = vadd.f32 0.0, %v2912
        %v2914 = vpop.f32.mrb[0].mxu0
        %v2915 = vadd.f32 0.0, %v2914
        %v2916 = vpop.f32.mrb[0].mxu0
        %v2917 = vadd.f32 0.0, %v2916
        %v2918 = vpop.f32.mrb[0].mxu0
        %v2919 = vadd.f32 0.0, %v2918
        %2920 = vmatprep.mubr.bf16.mxu0 0
        %2921 = vmatmul.mubr.bf16.gmra.mrb[0].mxu0 %v2876
        %v2922 = vpop.f32.mrb[0].mxu0
        %v2923 = vadd.f32 0.0, %v2922
        %v2924 = vpop.f32.mrb[0].mxu0
        %v2925 = vadd.f32 0.0, %v2924
        %v2926 = vpop.f32.mrb[0].mxu0
        %v2927 = vadd.f32 0.0, %v2926
        %v2928 = vpop.f32.mrb[0].mxu0
        %v2929 = vadd.f32 0.0, %v2928
        %2930 = vdwg.mxu0
        %v2931 = vadd.f32 %v2839, %v2913
        %v2932 = vadd.f32 %v2840, %v2915
        %v2933 = vadd.f32 %v2841, %v2917
        %v2934 = vadd.f32 %v2842, %v2919
        %v2935 = vadd.f32 %v2843, %v2923
        %v2936 = vadd.f32 %v2844, %v2925
        %v2937 = vadd.f32 %v2845, %v2927
        %v2938 = vadd.f32 %v2846, %v2929
        %v2943 = vunpack.c.l.b16 %v1673
        %v2944 = vunpack.c.l.b16 %v1674
        %v2945 = vunpack.c.l.b16 %v1675
        %v2946 = vunpack.c.l.b16 %v1676
        %v2947 = vpack.c.b16 %v2944, %v2943
        %v2948 = vpack.c.b16 %v2946, %v2945
        %2949 = vrot.lane.b32.xlu0 %v1613, 114
        %v2950 = vpop.permute.xlu0 %2949
        %2951 = vrot.lane.b32.xlu0 %v1614, 114
        %v2952 = vpop.permute.xlu0 %2951
        %2953 = vrot.lane.b32.xlu0 %v1615, 114
        %v2954 = vpop.permute.xlu0 %2953
        %2955 = vrot.lane.b32.xlu0 %v1616, 114
        %v2956 = vpop.permute.xlu0 %2955
        %vm2957 = vcmask 932864
        %v2958 = vsel %vm2957, %v2950, %v2952
        %v2959 = vsel %vm2957, %v2954, %v2956
        %v2965 = vsel %vm1706, %v2947, 0
        %v2968 = vsel %vm1706, %v2948, 0
        %2970 = vmatprep.subr.bf16.mxu0 %v2952
        %2971 = vmatpush1.bf16.msra.mxu0 %v2958
        %2972 = vmatprep.subr.bf16.mxu0 %v2956
        %2973 = vmatpush1.bf16.msra.mxu0 %v2959
        %2974 = vmatprep.subr.bf16.mxu0 0
        %2975 = vmatpush1.bf16.msra.mxu0 0
        %2976 = vmatprep.subr.bf16.mxu0 0
        %2977 = vmatpush1.bf16.msra.mxu0 0
        %2978 = vmatprep.subr.bf16.mxu0 0
        %2979 = vmatpush1.bf16.msra.mxu0 0
        %2980 = vmatprep.subr.bf16.mxu0 0
        %2981 = vmatpush1.bf16.msra.mxu0 0
        %2982 = vmatprep.subr.bf16.mxu0 0
        %2983 = vmatpush1.bf16.msra.mxu0 0
        %2984 = vmatprep.subr.bf16.mxu0 0
        %2985 = vmatpush1.bf16.msra.mxu0 0
        %2986 = vmatprep.subr.bf16.mxu0 0
        %2987 = vmatpush1.bf16.msra.mxu0 0
        %2988 = vmatprep.subr.bf16.mxu0 0
        %2989 = vmatpush1.bf16.msra.mxu0 0
        %2990 = vmatprep.subr.bf16.mxu0 0
        %2991 = vmatpush1.bf16.msra.mxu0 0
        %2992 = vmatprep.subr.bf16.mxu0 0
        %2993 = vmatpush1.bf16.msra.mxu0 0
        %2994 = vmatprep.subr.bf16.mxu0 0
        %2995 = vmatpush1.bf16.msra.mxu0 0
        %2996 = vmatprep.subr.bf16.mxu0 0
        %2997 = vmatpush1.bf16.msra.mxu0 0
        %2998 = vmatprep.subr.bf16.mxu0 0
        %2999 = vmatpush1.bf16.msra.mxu0 0
        %3000 = vmatprep.subr.bf16.mxu0 0
        %3001 = vmatpush1.bf16.msra.mxu0 0
        %3002 = vmatprep.mubr.bf16.mxu0 0
        %3003 = vmatmul.mubr.bf16.gmra.mrb[0].mxu0 %v2965
        %v3004 = vpop.f32.mrb[0].mxu0
        %v3005 = vadd.f32 0.0, %v3004
        %v3006 = vpop.f32.mrb[0].mxu0
        %v3007 = vadd.f32 0.0, %v3006
        %v3008 = vpop.f32.mrb[0].mxu0
        %v3009 = vadd.f32 0.0, %v3008
        %v3010 = vpop.f32.mrb[0].mxu0
        %v3011 = vadd.f32 0.0, %v3010
        %3012 = vmatprep.mubr.bf16.mxu0 0
        %3013 = vmatmul.mubr.bf16.gmra.mrb[0].mxu0 %v2968
        %v3014 = vpop.f32.mrb[0].mxu0
        %v3015 = vadd.f32 0.0, %v3014
        %v3016 = vpop.f32.mrb[0].mxu0
        %v3017 = vadd.f32 0.0, %v3016
        %v3018 = vpop.f32.mrb[0].mxu0
        %v3019 = vadd.f32 0.0, %v3018
        %v3020 = vpop.f32.mrb[0].mxu0
        %v3021 = vadd.f32 0.0, %v3020
        %3022 = vdwg.mxu0
        %v3023 = vadd.f32 %v2931, %v3005
        %v3024 = vadd.f32 %v2932, %v3007
        %v3025 = vadd.f32 %v2933, %v3009
        %v3026 = vadd.f32 %v2934, %v3011
        %v3027 = vadd.f32 %v2935, %v3015
        %v3028 = vadd.f32 %v2936, %v3017
        %v3029 = vadd.f32 %v2937, %v3019
        %v3030 = vadd.f32 %v2938, %v3021
        %v3031 = vld [vmem:[%s5] sm:$0xff]
        %v3032 = vld [vmem:[%s5 + $0x8] sm:$0xff]
        %v3033 = vld [vmem:[%s5 + $0x10] sm:$0xff]
        %v3034 = vld [vmem:[%s5 + $0x18] sm:$0xff]
        %3036 = vset.pattern.permute.xlu0 0
        %3037 = vperm.xlu0 %3036, %v3031
        %v3038 = vpop.permute.xlu0 %3037
        %3041 = vset.pattern.permute.xlu0 0
        %3042 = vperm.xlu0 %3041, %v3032
        %v3043 = vpop.permute.xlu0 %3042
        %3046 = vset.pattern.permute.xlu0 0
        %3047 = vperm.xlu0 %3046, %v3033
        %v3048 = vpop.permute.xlu0 %3047
        %3051 = vset.pattern.permute.xlu0 0
        %3052 = vperm.xlu0 %3051, %v3034
        %v3053 = vpop.permute.xlu0 %3052
        %v3055 = vadd.f32 %v3023, %v3038
        %v3056 = vadd.f32 %v3024, %v3038
        %v3057 = vadd.f32 %v3025, %v3043
        %v3058 = vadd.f32 %v3026, %v3043
        %v3059 = vadd.f32 %v3027, %v3048
        %v3060 = vadd.f32 %v3028, %v3048
        %v3061 = vadd.f32 %v3029, %v3053
        %v3062 = vadd.f32 %v3030, %v3053
        %v3063 = vmax.f32 %v3055, 0.0
        %v3064 = vmax.f32 %v3056, 0.0
        %v3065 = vmax.f32 %v3057, 0.0
        %v3066 = vmax.f32 %v3058, 0.0
        %v3067 = vmax.f32 %v3059, 0.0
        %v3068 = vmax.f32 %v3060, 0.0
        %v3069 = vmax.f32 %v3061, 0.0
        %v3070 = vmax.f32 %v3062, 0.0
        %v3071 = vld [vmem:[%s6] sm:$0xff]
        %v3072 = vld [vmem:[%s6 + $0x8] sm:$0xff]
        %v3073 = vld [vmem:[%s6 + $0x10] sm:$0xff]
        %v3074 = vld [vmem:[%s6 + $0x18] sm:$0xff]
        %v3075 = vunpack.c.l.bf16 %v3071
        %v3076 = vunpack.c.h.bf16 %v3071
        %v3077 = vunpack.c.l.bf16 %v3072
        %v3078 = vunpack.c.h.bf16 %v3072
        %v3079 = vunpack.c.l.bf16 %v3073
        %v3080 = vunpack.c.h.bf16 %v3073
        %v3081 = vunpack.c.l.bf16 %v3074
        %v3082 = vunpack.c.h.bf16 %v3074
        %v3083 = vmul.f32 %v3063, %v3075
        %v3084 = vmul.f32 %v3064, %v3076
        %v3085 = vmul.f32 %v3065, %v3077
        %v3086 = vmul.f32 %v3066, %v3078
        %v3087 = vmul.f32 %v3067, %v3079
        %v3088 = vmul.f32 %v3068, %v3080
        %v3089 = vmul.f32 %v3069, %v3081
        %v3090 = vmul.f32 %v3070, %v3082
        %vm3091 = vcmask 523264
        %v3092 = vsel %vm3091, %v3084, 0.0
        %v3093 = vadd.f32 %v3083, %v3092
        %3094 = vadd.xlane.f32.xlu0 %v3093
        %v3095 = vpop.xlane.xlu0 %3094
        %v3096 = vsel %vm3091, %v3086, 0.0
        %v3097 = vadd.f32 %v3085, %v3096
        %3098 = vadd.xlane.f32.xlu0 %v3097
        %v3099 = vpop.xlane.xlu0 %3098
        %v3100 = vsel %vm3091, %v3088, 0.0
        %v3101 = vadd.f32 %v3087, %v3100
        %3102 = vadd.xlane.f32.xlu0 %v3101
        %v3103 = vpop.xlane.xlu0 %3102
        %v3104 = vsel %vm3091, %v3090, 0.0
        %v3105 = vadd.f32 %v3089, %v3104
        %3106 = vadd.xlane.f32.xlu0 %v3105
        %v3107 = vpop.xlane.xlu0 %3106
        %s3108 = scalar_lea.vmem %s6, 32
        %v3109 = vld [vmem:[%s3108] sm:$0xff]
        %v3110 = vld [vmem:[%s3108 + $0x8] sm:$0xff]
        %v3111 = vld [vmem:[%s3108 + $0x10] sm:$0xff]
        %v3112 = vld [vmem:[%s3108 + $0x18] sm:$0xff]
        %v3113 = vunpack.c.l.bf16 %v3109
        %v3114 = vunpack.c.h.bf16 %v3109
        %v3115 = vunpack.c.l.bf16 %v3110
        %v3116 = vunpack.c.h.bf16 %v3110
        %v3117 = vunpack.c.l.bf16 %v3111
        %v3118 = vunpack.c.h.bf16 %v3111
        %v3119 = vunpack.c.l.bf16 %v3112
        %v3120 = vunpack.c.h.bf16 %v3112
        %v3121 = vmul.f32 %v3063, %v3113
        %v3122 = vmul.f32 %v3064, %v3114
        %v3123 = vmul.f32 %v3065, %v3115
        %v3124 = vmul.f32 %v3066, %v3116
        %v3125 = vmul.f32 %v3067, %v3117
        %v3126 = vmul.f32 %v3068, %v3118
        %v3127 = vmul.f32 %v3069, %v3119
        %v3128 = vmul.f32 %v3070, %v3120
        %v3129 = vsel %vm3091, %v3122, 0.0
        %v3130 = vadd.f32 %v3121, %v3129
        %3131 = vadd.xlane.f32.xlu0 %v3130
        %v3132 = vpop.xlane.xlu0 %3131
        %v3133 = vsel %vm3091, %v3124, 0.0
        %v3134 = vadd.f32 %v3123, %v3133
        %3135 = vadd.xlane.f32.xlu0 %v3134
        %v3136 = vpop.xlane.xlu0 %3135
        %v3137 = vsel %vm3091, %v3126, 0.0
        %v3138 = vadd.f32 %v3125, %v3137
        %3139 = vadd.xlane.f32.xlu0 %v3138
        %v3140 = vpop.xlane.xlu0 %3139
        %v3141 = vsel %vm3091, %v3128, 0.0
        %v3142 = vadd.f32 %v3127, %v3141
        %3143 = vadd.xlane.f32.xlu0 %v3142
        %v3144 = vpop.xlane.xlu0 %3143
        %vm3145 = vcmask 7168
        %v3146 = vsel %vm3145, %v3095, %v3132
        %v3147 = vsel %vm3145, %v3099, %v3136
        %v3148 = vsel %vm3145, %v3103, %v3140
        %v3149 = vsel %vm3145, %v3107, %v3144
        %vm3150 = vcmask 15360
        %v3151 = vsel %vm3150, %v3146, 0.0
        %v3152 = vsel %vm3150, %v3147, 0.0
        %v3153 = vadd.f32 %v3151, %v3152
        %v3154 = vsel %vm3150, %v3148, 0.0
        %v3155 = vadd.f32 %v3153, %v3154
        %v3156 = vsel %vm3150, %v3149, 0.0
        %v3157 = vadd.f32 %v3155, %v3156
        %v3158 = vrot.slane %v3157, 4
        %v3159 = vadd.f32 %v3157, %v3158
        %v3160 = vrot.slane %v3159, 2
        %v3161 = vadd.f32 %v3159, %v3160
        %v3162 = vrot.slane %v3161, 1
        %v3163 = vadd.f32 %v3161, %v3162
        %v3164 = vld [vmem:[%s7] sm:$0x1]
        %v3165 = vadd.f32 %v3163, %v3164
        %vm3166 = vcmask 8192
        %3167 = vst.msk [vmem:[%s352] sm:$0x1] %vm3166, %v3165
        %s3168 = sand.u32 %s207, 1
        %s3169 = scalar_lea.sflag [#allocation4], %s3168
        %s3170 = sand.u32 %s207, 1
        %s3171 = scalar_lea.vmem [#allocation8], %s3170
        // Predicated region
        $region65: #{tpu_custom_call.1} parent=51 // pred_check
          %p3172 = pneg %p217
        $region66: #{tpu_custom_call.1} parent=51 // pred_check_branch
          %3174 = sbr.rel (%p3172) target = $region68
        $region67: #{tpu_custom_call.1} parent=51 // pred_region
          %s3176 = ssub.s32 16, 16
          %3177 = vsyncadd %s3169, %s3176
          %s3178 = smul.addr %s26, 16
          %s3179 = scalar_lea.hbm %s8, %s3178
          %s3181 = sshll.u32 %s3171, 4
          %s3182 = int_to_ptr.vmem [resolvable:$true] %s3181
          %3184 = dma.vmem_to_hbm [thread:$0]  %s3182, 16, %s3179, %s3169
        $region68: #{tpu_custom_call.1} parent=51 // pred_fallthru
          _
      $region52: #{tpu_custom_call.1} parent=5 // pred_fallthru
        _
      %p3185 = scmp.le.s32.totalorder 2, %s21
      // Predicated region
      $region69: #{tpu_custom_call.1} parent=5 // pred_check
        %p3186 = pneg %p3185
      $region70: #{tpu_custom_call.1} parent=5 // pred_check_branch
        %3188 = sbr.rel (%p3186) target = $region72
      $region71: #{tpu_custom_call.1} parent=5 // pred_region
        %s3189 = ssub.s32 %s21, 2
        // Predicated region
        $region73: #{tpu_custom_call.1} parent=71 // pred_check
          %p3190 = pneg %p223
        $region74: #{tpu_custom_call.1} parent=71 // pred_check_branch
          %3192 = sbr.rel (%p3190) target = $region76
        $region75: #{tpu_custom_call.1} parent=71 // pred_region
          %s3193 = sand.u32 %s208, 1
          %s3194 = scalar_lea.sflag [#allocation4], %s3193
          %s3195 = sand.u32 %s208, 1
          %s3196 = scalar_lea.vmem [#allocation8], %s3195
          %3197 = dma.done %s3194, 16
        $region76: #{tpu_custom_call.1} parent=71 // pred_fallthru
          _
      $region72: #{tpu_custom_call.1} parent=5 // pred_fallthru
        _
    $region6: #{tpu_custom_call.1} parent=1 // loop_footer
      %s25 = sadd.s32 1, %s21
    $region7: #{tpu_custom_call.1} parent=1 // loop_footer_branch
      %20 = sbr.rel target = $region3
    $region8: #{tpu_custom_call.1} parent=1 // loop_exit
      _
    %3198 = vsyncpa [#allocation3], 1
    %s3199 = scalar_lea.sflag [#allocation3], 1
    %3200 = vsyncpa %s3199, 1
    %3201 = vsyncpa [#allocation6], 1
    %3202 = vsyncpa [#allocation4], 1
    %s3203 = scalar_lea.sflag [#allocation4], 1
    %3204 = vsyncpa %s3203, 1

</llo_original>
